<compile_context>
chip_gen: v7x
topology: tpu7x:2x2x1
jax: 0.10.0
libtpu: 0.0.40
codegen_flags: <defaults>
</compile_context>

<pallas_src>
import math

import jax
import jax.numpy as jnp
from jax import lax
from jax.experimental import pallas as pl
from jax.experimental.pallas import tpu as pltpu

# ----------------------------------------------------------------------------
# Hyper-parameters (small, consistent with the module's forward)
# ----------------------------------------------------------------------------
HIDDEN = 32                    # hidden_size (even: complex pairs of K)
K = HIDDEN // 2                # 16
NUM_HEADS = 2
D = HIDDEN * NUM_HEADS         # 64
IN_SIZE = {"g": 16, "m": 12, "d": 8}
NUM_NODES = {"g": 6, "m": 5, "d": 4}
TYPES = ("g", "m", "d")
META_PATHS = (("g", "m", "d"), ("d", "m", "g"))
ETYPES = [[0, 2], [5, None]]   # per-metapath edge-type ids into the doubled r_vec
P = 3                          # metapath length
FUSE_HIDDEN = 128
LEAKY_ALPHA = 0.01             # HCMGNN_Layer passes alpha=0.01
NEG_INF = -1e30
INST_LENS = (12, 10)           # synthetic metapath-instance counts (static)
BATCH = 8

# Node rows are padded per type to 8-sublane blocks so every in-kernel slice is
# aligned: g -> rows [0,6), m -> [8,13), d -> [16,20); rows 6,7,13..15,20..23 pad.
NTOT = 24
OFFSETS = (0, 8, 16)

POS_LIST = tuple(tuple(mp.index(t) for t in TYPES) for mp in META_PATHS)

# permutation mapping "de-interleaved within head" feature order -> torch order
PERM64 = tuple(h * HIDDEN + 2 * k + b
               for h in range(NUM_HEADS) for b in range(2) for k in range(K))

VMEM_SPEC = pl.BlockSpec(memory_space=pltpu.MemorySpace.VMEM)


# ----------------------------------------------------------------------------
# Packed weight-slab layout (one f32 (rows,128) DMA for every constant/param)
# ----------------------------------------------------------------------------
def _build_layout():
    layout = {}
    row = [0]

    def alloc(name, nrows, ncols):
        layout[name] = (row[0], nrows, ncols)
        row[0] += ((nrows + 7) // 8) * 8   # keep every piece 8-sublane aligned

    alloc("fc_g", IN_SIZE["g"], 2 * HIDDEN)        # [Wre|Wim|Wim|Wre]
    alloc("fc_m", IN_SIZE["m"], 2 * HIDDEN)
    alloc("fc_d", IN_SIZE["d"], 2 * HIDDEN)
    alloc("fcb", 3, 2 * HIDDEN)                    # per-type bias rows, same layout
    alloc("w1", 2 * HIDDEN, 3 * NUM_HEADS)         # attn1, all (type,head) columns
    alloc("a2", 3 * NUM_HEADS, HIDDEN)             # attn2, packed [re|im]
    for mp in range(len(META_PATHS)):
        alloc(f"rot{mp}", P * INST_LENS[mp], 2 * HIDDEN)   # [rr|rr|-ri|ri] per step
        alloc(f"oh{mp}", P * INST_LENS[mp], NTOT)          # stacked one-hot gather
        alloc(f"mavg{mp}", INST_LENS[mp], P * INST_LENS[mp])  # mean over P
    alloc("tavg", NTOT, NTOT)                      # within-type averaging (fusion)
    alloc("fw1", D, FUSE_HIDDEN)
    alloc("fb1", 1, FUSE_HIDDEN)
    alloc("fw2", 1, FUSE_HIDDEN)                   # stored as a row -> lane reduce
    alloc("pw1g", D, D)
    alloc("pw1m", D, D)
    alloc("pw1d", D, D)
    alloc("pb1", 1, D)
    alloc("pw2", D, D // 4)
    alloc("pb2", 1, D // 4)
    alloc("pw3", D // 4, HIDDEN)
    alloc("pb3", 1, HIDDEN)
    alloc("pw4", 1, HIDDEN)                        # stored as a row -> lane reduce
    alloc("pb4", 1, 1)
    return layout, ((row[0] + 7) // 8) * 8


_LAYOUT, SLAB_ROWS = _build_layout()


def _piece(ref, name):
    r0, nr, nc = _LAYOUT[name]
    return ref[r0:r0 + nr, 0:nc]


def _set(slab, name, value):
    r0, nr, nc = _LAYOUT[name]
    value = jnp.asarray(value, jnp.float32)
    assert value.shape == (nr, nc), (name, value.shape, (nr, nc))
    return slab.at[r0:r0 + nr, 0:nc].set(value)


# ----------------------------------------------------------------------------
# The single fused Pallas kernel
# ----------------------------------------------------------------------------
def _hcmgnn_kernel(wslab_ref, irows_ref, xg_ref, xm_ref, xd_ref, data_ref,
                   o_ref, h2_ref):
    f32 = jnp.float32
    n_types = len(TYPES)
    n_groups = n_types * NUM_HEADS                         # 6 (type,head) groups

    # ---- fc projections, lane-packed as [hr|hi|hi|hr] (swap folded in weights) ----
    hg = jnp.dot(xg_ref[...], _piece(wslab_ref, "fc_g"),
                 preferred_element_type=f32)
    hm = jnp.dot(xm_ref[...], _piece(wslab_ref, "fc_m"),
                 preferred_element_type=f32)
    hd = jnp.dot(xd_ref[...], _piece(wslab_ref, "fc_d"),
                 preferred_element_type=f32)
    fcb = _piece(wslab_ref, "fcb")                          # (3, 64)
    h2_ref[...] = jnp.zeros((NTOT, 2 * HIDDEN), f32)        # keep pad rows finite
    h2_ref[0:NUM_NODES["g"], :] = hg + fcb[0:1, :]
    h2_ref[OFFSETS[1]:OFFSETS[1] + NUM_NODES["m"], :] = hm + fcb[1:2, :]
    h2_ref[OFFSETS[2]:OFFSETS[2] + NUM_NODES["d"], :] = hd + fcb[2:3, :]
    h2 = h2_ref[...]                                        # (24, 64)

    # per-node attention-1 scores for every (type, head): (24, 6)
    a1_big = jnp.dot(h2, _piece(wslab_ref, "w1"), preferred_element_type=f32)

    a2p = _piece(wslab_ref, "a2")                           # (6, 32)
    irows = irows_ref[...]                                  # (8, 16) int32
    dn_bt = (((1,), (1,)), ((), ()))                        # A @ B^T (contract lanes)

    sem = []                                                # per-metapath (24, 64)
    for mp in range(len(META_PATHS)):
        L = INST_LENS[mp]

        # -- SemanticEncoder: batched gather + complex rotation + mean over P --
        gg = jnp.dot(_piece(wslab_ref, f"oh{mp}"), h2,
                     preferred_element_type=f32)            # (3L, 64) = [gr|gi|gi|gr]
        prod = gg * _piece(wslab_ref, f"rot{mp}")           # * [rr|rr|-ri|ri]
        rotated = prod[:, 0:HIDDEN] + prod[:, HIDDEN:2 * HIDDEN]   # (3L, 32) [re|im]
        mrmi = jnp.dot(_piece(wslab_ref, f"mavg{mp}"), rotated,
                       preferred_element_type=f32)          # (L, 32)

        # instance-side attention-2 scores for every (type, head): (6, L)
        a2t = lax.dot_general(a2p, mrmi, dn_bt, preferred_element_type=f32)

        # -- MessageAggregator: one masked softmax + one matmul for all groups --
        riota = lax.broadcasted_iota(jnp.int32, (NTOT, L), 0)
        s_blocks = []
        for t in range(n_types):
            p_t = POS_LIST[mp][t]
            inst_row = irows[4 * mp + p_t:4 * mp + p_t + 1, 0:L]      # (1, L)
            amask = jnp.where(riota == inst_row, 0.0, NEG_INF)        # (24, L)
            for hh in range(NUM_HEADS):
                c = NUM_HEADS * t + hh
                s = a1_big[:, c:c + 1] + a2t[c:c + 1, :]              # (24, L)
                s = jnp.where(s > 0, s, LEAKY_ALPHA * s)              # LeakyReLU
                s_blocks.append(s + amask)
        big_s = jnp.concatenate(s_blocks, axis=0)                     # (144, L)
        mx = jnp.maximum(jnp.max(big_s, axis=-1, keepdims=True), 0.0)
        e = jnp.exp(big_s - mx)                                       # non-members -> 0
        den = jnp.sum(e, axis=-1, keepdims=True)
        attn = e * pl.reciprocal(jnp.where(den > 0, den, 1.0), approx=True)
        out = jnp.dot(attn, mrmi, preferred_element_type=f32)         # (144, 32)

        heads_out = []
        for hh in range(NUM_HEADS):
            tot = None
            for t in range(n_types):
                c = NUM_HEADS * t + hh
                blk = out[c * NTOT:(c + 1) * NTOT, :]
                tot = blk if tot is None else tot + blk               # rows disjoint
            # ELU after the type-sum (non-member rows are exactly zero, ELU(0)=0)
            tot = jnp.where(tot > 0, tot, jnp.exp(jnp.minimum(tot, 0.0)) - 1.0)
            heads_out.append(tot)
        sem.append(jnp.concatenate(heads_out, axis=1))                # (24, 64)

    # ---- Subgraph fusion (shared projection, per-type softmax over metapaths) ----
    sem_cat = jnp.concatenate(sem, axis=0)                            # (48, 64)
    hp = jnp.tanh(jnp.dot(sem_cat, _piece(wslab_ref, "fw1"),
                          preferred_element_type=f32) + _piece(wslab_ref, "fb1"))
    wproj = jnp.sum(hp * _piece(wslab_ref, "fw2"), axis=-1, keepdims=True)  # (48, 1)
    tavg = _piece(wslab_ref, "tavg")
    m0 = jnp.dot(tavg, wproj[0:NTOT, :], preferred_element_type=f32)  # type means
    m1 = jnp.dot(tavg, wproj[NTOT:2 * NTOT, :], preferred_element_type=f32)
    bmax = jnp.maximum(m0, m1)
    e0 = jnp.exp(m0 - bmax)
    e1 = jnp.exp(m1 - bmax)
    rden = pl.reciprocal(e0 + e1, approx=True)
    fused = (e0 * rden) * sem[0] + (e1 * rden) * sem[1]               # (24, 64)

    # ---- prediction head on (g, m, d) triplets ----
    fproj = jnp.concatenate(
        [jnp.dot(fused, _piece(wslab_ref, name), preferred_element_type=f32)
         for name in ("pw1g", "pw1m", "pw1d")], axis=0)               # (72, 64)
    data_i = data_ref[...]                                            # (B, 3) int32
    batch = data_i.shape[0]
    biota = lax.broadcasted_iota(jnp.int32, (batch, n_types * NTOT), 1)
    onehot = jnp.zeros((batch, n_types * NTOT), f32)
    for t in range(n_types):
        idx = data_i[:, t:t + 1] + (t * NTOT + OFFSETS[t])
        onehot = onehot + (biota == idx).astype(f32)
    # TODO(synk): get_embed_map's out-of-range fallback (hstack raw features x8)
    # is not implemented; all synthetic indices are in range.
    x1 = jnp.maximum(jnp.dot(onehot, fproj, preferred_element_type=f32)
                     + _piece(wslab_ref, "pb1"), 0.0)
    x2 = jnp.maximum(jnp.dot(x1, _piece(wslab_ref, "pw2"),
                             preferred_element_type=f32)
                     + _piece(wslab_ref, "pb2"), 0.0)
    x3 = jnp.maximum(jnp.dot(x2, _piece(wslab_ref, "pw3"),
                             preferred_element_type=f32)
                     + _piece(wslab_ref, "pb3"), 0.0)
    logit = (jnp.sum(x3 * _piece(wslab_ref, "pw4"), axis=-1, keepdims=True)
             + _piece(wslab_ref, "pb4"))                              # (B, 1)
    # overflow-free sigmoid (stays in [0, 1] exactly)
    z = jnp.exp(-jnp.abs(logit))
    score = jnp.where(logit >= 0, 1.0 / (1.0 + z), z / (1.0 + z))
    # TODO(synk): dropout (attn_drop + predict-head Dropout) treated as identity (eval mode).
    o_ref[...] = jnp.broadcast_to(score, o_ref.shape)                 # lane-dense store


# ----------------------------------------------------------------------------
# Host-side glue: SemanticEncoder relation composition & parameter packing
# ----------------------------------------------------------------------------
def compute_final_r_vec(r_vec_param, etypes, p_len, hidden):
    """Tiny sequential relation composition (matches the torch loop)."""
    k = hidden // 2
    norm = jnp.sqrt(jnp.sum(r_vec_param ** 2, axis=2, keepdims=True))
    rv = r_vec_param / jnp.maximum(norm, 1e-12)            # F.normalize(p=2, dim=2)
    rv2 = jnp.stack([rv, rv], axis=1)
    rv2 = rv2.at[:, 1, :, 1].multiply(-1.0)                # conjugate for odd index
    rv2 = rv2.reshape(r_vec_param.shape[0] * 2, k, 2)
    fr = jnp.zeros((p_len, k, 2), jnp.float32)
    fr = fr.at[p_len - 1, :, 0].set(1.0)
    for i in range(p_len - 2, -1, -1):
        if etypes[i] is not None:
            a, b = fr[i + 1, :, 0], fr[i + 1, :, 1]
            c, d = rv2[etypes[i], :, 0], rv2[etypes[i], :, 1]
            fr = fr.at[i, :, 0].set(a * c - b * d)
            fr = fr.at[i, :, 1].set(a * d + b * c)
        else:
            fr = fr.at[i].set(fr[i + 1])
    return fr[:, :, 0], fr[:, :, 1]                        # (P, K) each


def pack_operands(params, instances):
    """One-time packing of parameters / graph indices into the kernel slabs."""
    f32 = jnp.float32
    slab = jnp.zeros((SLAB_ROWS, 128), f32)

    # fc weights with the complex-swap folded in: [Wre | Wim | Wim | Wre]
    fcb_rows = []
    for t in TYPES:
        wt = params[f"fc_{t}_w_t"].astype(f32)                       # (in_t, H)
        wre, wim = wt[:, 0::2], wt[:, 1::2]
        slab = _set(slab, f"fc_{t}", jnp.concatenate([wre, wim, wim, wre], axis=1))
        bt = params[f"fc_{t}_b"].astype(f32)
        bre, bim = bt[0::2], bt[1::2]
        fcb_rows.append(jnp.concatenate([bre, bim, bim, bre]))
    slab = _set(slab, "fcb", jnp.stack(fcb_rows, axis=0))

    w1 = jnp.zeros((2 * HIDDEN, 3 * NUM_HEADS), f32)
    a2 = jnp.zeros((3 * NUM_HEADS, HIDDEN), f32)
    for ti, t in enumerate(TYPES):
        a1t = params[f"attn1_{t}_t"].astype(f32)                     # (H, heads)
        w1 = w1.at[0:K, NUM_HEADS * ti:NUM_HEADS * (ti + 1)].set(a1t[0::2, :])
        w1 = w1.at[K:2 * K, NUM_HEADS * ti:NUM_HEADS * (ti + 1)].set(a1t[1::2, :])
        a2t = params[f"attn2_{t}"].astype(f32)                       # (heads, H)
        a2 = a2.at[NUM_HEADS * ti:NUM_HEADS * (ti + 1), 0:K].set(a2t[:, 0::2])
        a2 = a2.at[NUM_HEADS * ti:NUM_HEADS * (ti + 1), K:2 * K].set(a2t[:, 1::2])
    slab = _set(slab, "w1", w1)
    slab = _set(slab, "a2", a2)

    irows = jnp.full((8, 16), -1, jnp.int32)
    for mp_idx, mp in enumerate(META_PATHS):
        L = INST_LENS[mp_idx]
        rr, ri = compute_final_r_vec(params["r_vec"], ETYPES[mp_idx], P, HIDDEN)
        rot_rows = []
        ids = []
        for p, tname in enumerate(mp):
            main = jnp.concatenate([rr[p], rr[p]])
            cross = jnp.concatenate([-ri[p], ri[p]])
            rot_rows.append(jnp.broadcast_to(
                jnp.concatenate([main, cross])[None, :], (L, 2 * HIDDEN)))
            gid = instances[mp_idx][tname].astype(jnp.int32) + OFFSETS[TYPES.index(tname)]
            assert int(jnp.min(gid)) >= 0 and int(jnp.max(gid)) < NTOT
            ids.append(gid)
            irows = irows.at[4 * mp_idx + p, 0:L].set(gid)
        slab = _set(slab, f"rot{mp_idx}", jnp.concatenate(rot_rows, axis=0))
        ids_flat = jnp.concatenate(ids)                              # (3L,)
        onehot = (ids_flat[:, None] ==
                  jnp.arange(NTOT, dtype=jnp.int32)[None, :]).astype(f32)
        slab = _set(slab, f"oh{mp_idx}", onehot)
        mavg = jnp.concatenate([jnp.eye(L, dtype=f32)] * P, axis=1) / float(P)
        slab = _set(slab, f"mavg{mp_idx}", mavg)

    tavg = jnp.zeros((NTOT, NTOT), f32)
    for ti, t in enumerate(TYPES):
        off, n = OFFSETS[ti], NUM_NODES[t]
        tavg = tavg.at[off:off + n, off:off + n].set(jnp.full((n, n), 1.0 / n, f32))
    slab = _set(slab, "tavg", tavg)

    perm64 = jnp.asarray(PERM64, jnp.int32)
    slab = _set(slab, "fw1", params["fuse_w1_t"].astype(f32)[perm64, :])
    slab = _set(slab, "fb1", params["fuse_b1"].astype(f32).reshape(1, FUSE_HIDDEN))
    slab = _set(slab, "fw2", params["fuse_w2_t"].astype(f32).reshape(1, FUSE_HIDDEN))
    pw1 = params["pred_w1_t"].astype(f32)                            # (3*D, D)
    for ti, t in enumerate(TYPES):
        slab = _set(slab, f"pw1{t}", pw1[ti * D:(ti + 1) * D, :][perm64, :])
    slab = _set(slab, "pb1", params["pred_b1"].astype(f32).reshape(1, D))
    slab = _set(slab, "pw2", params["pred_w2_t"].astype(f32))
    slab = _set(slab, "pb2", params["pred_b2"].astype(f32).reshape(1, D // 4))
    slab = _set(slab, "pw3", params["pred_w3_t"].astype(f32))
    slab = _set(slab, "pb3", params["pred_b3"].astype(f32).reshape(1, HIDDEN))
    slab = _set(slab, "pw4", params["pred_w4_t"].astype(f32).reshape(1, HIDDEN))
    slab = _set(slab, "pb4", params["pred_b4"].astype(f32).reshape(1, 1))

    return {"wslab": slab, "irows": irows}


def hcmgnn_forward(ops, inputs, data):
    """Whole HCMGNN forward in a single, gridless pallas_call."""
    batch = data.shape[0]
    # NOTE(v7x): at this size a single TensorCore is right; if batch/instance
    # counts grow, add a leading "parallel" grid axis over batch tiles.
    out = pl.pallas_call(
        _hcmgnn_kernel,
        out_shape=jax.ShapeDtypeStruct((batch, 128), jnp.float32),
        in_specs=[VMEM_SPEC] * 6,
        out_specs=VMEM_SPEC,
        scratch_shapes=[pltpu.VMEM((NTOT, 2 * HIDDEN), jnp.float32)],
    )(ops["wslab"], ops["irows"], inputs["g"], inputs["m"], inputs["d"], data)
    return out[:, :1]


# ----------------------------------------------------------------------------
# Deterministic parameter / input construction
# ----------------------------------------------------------------------------
def xavier_normal(key, out_dim, in_dim, gain=1.414):
    std = gain * math.sqrt(2.0 / (in_dim + out_dim))
    return std * jax.random.normal(key, (out_dim, in_dim), dtype=jnp.float32)


def build_params(key):
    heads = NUM_HEADS
    ks = iter(jax.random.split(key, 40))
    p = {}
    for t in TYPES:
        p[f"fc_{t}_w_t"] = xavier_normal(next(ks), HIDDEN, IN_SIZE[t]).T     # (in, H)
        p[f"fc_{t}_b"] = 0.01 * jax.random.normal(next(ks), (HIDDEN,), jnp.float32)
        p[f"attn1_{t}_t"] = xavier_normal(next(ks), heads, HIDDEN).T         # (H, heads)
        p[f"attn2_{t}"] = xavier_normal(next(ks), heads, HIDDEN)             # (heads, H)
    p["r_vec"] = jax.random.normal(next(ks), (3, K, 2), jnp.float32)
    p["fuse_w1_t"] = xavier_normal(next(ks), FUSE_HIDDEN, D).T               # (D, 128)
    p["fuse_b1"] = 0.01 * jax.random.normal(next(ks), (FUSE_HIDDEN,), jnp.float32)
    p["fuse_w2_t"] = xavier_normal(next(ks), 1, FUSE_HIDDEN).T               # (128, 1)
    dims = [(3 * D, D), (D, D // 4), (D // 4, HIDDEN), (HIDDEN, 1)]
    for li, (din, dout) in enumerate(dims, start=1):
        p[f"pred_w{li}_t"] = xavier_normal(next(ks), dout, din).T            # (din, dout)
        p[f"pred_b{li}"] = 0.01 * jax.random.normal(next(ks), (dout,), jnp.float32)
    return p


def build_graph_and_inputs(key):
    ks = iter(jax.random.split(key, 16))
    inputs = {t: jax.random.normal(next(ks), (NUM_NODES[t], IN_SIZE[t]), jnp.float32)
              for t in TYPES}
    # synthetic metapath instances (stand-in for the DGL/pandas enumeration)
    instances = []
    for length in INST_LENS:
        instances.append({t: jax.random.randint(next(ks), (length,), 0,
                                                NUM_NODES[t], jnp.int32)
                          for t in TYPES})
    data = jnp.stack([jax.random.randint(next(ks), (BATCH,), 0,
                                         NUM_NODES[t], jnp.int32)
                      for t in TYPES], axis=1)                               # (B, 3)
    return inputs, data, instances


if __name__ == "__main__":
    root = jax.random.PRNGKey(0)
    k_params, k_data = jax.random.split(root)
    params = build_params(k_params)
    inputs, data, instances = build_graph_and_inputs(k_data)

    ops = pack_operands(params, instances)
    fwd = jax.jit(hcmgnn_forward)
    scores = jax.block_until_ready(fwd(ops, inputs, data))

    assert scores.shape == (data.shape[0], 1)
    assert bool(jnp.all(jnp.isfinite(scores)))
    assert bool(jnp.all((scores >= 0.0) & (scores <= 1.0)))
    print("KERNEL_OK")
</pallas_src>

<mosaic_0001>
module attributes {stable_mosaic.version = 11 : i64} {
  func.func @_hcmgnn_kernel(%arg0: memref<712x128xf32, #tpu.memory_space<vmem>>, %arg1: memref<8x16xi32, #tpu.memory_space<vmem>>, %arg2: memref<6x16xf32, #tpu.memory_space<vmem>>, %arg3: memref<5x12xf32, #tpu.memory_space<vmem>>, %arg4: memref<4x8xf32, #tpu.memory_space<vmem>>, %arg5: memref<8x3xi32, #tpu.memory_space<vmem>>, %arg6: memref<8x128xf32, #tpu.memory_space<vmem>>, %arg7: memref<24x64xf32, #tpu.memory_space<vmem>>) attributes {dimension_semantics = [], scalar_prefetch = 0 : i64, scratch_operands = 1 : i64, tpu.core_type = #tpu.core_type<tc>} {
    %c0 = arith.constant 0 : index
    %c0_0 = arith.constant 0 : index
    %0 = vector.load %arg2[%c0, %c0_0] : memref<6x16xf32, #tpu.memory_space<vmem>>, vector<6x16xf32>
    %c0_1 = arith.constant 0 : index
    %c0_2 = arith.constant 0 : index
    %1 = vector.load %arg0[%c0_1, %c0_2] : memref<712x128xf32, #tpu.memory_space<vmem>>, vector<16x64xf32>
    %cst = arith.constant dense<0.000000e+00> : vector<6x64xf32>
    %2 = tpu.matmul %0, %1, %cst {dimension_numbers = #tpu.dot_dimension_numbers<[1], [0], [0], [1], [0, 0, 1, 1], [], []>} : vector<6x16xf32>, vector<16x64xf32>, vector<6x64xf32> -> vector<6x64xf32>
    %c0_3 = arith.constant 0 : index
    %c0_4 = arith.constant 0 : index
    %3 = vector.load %arg3[%c0_3, %c0_4] : memref<5x12xf32, #tpu.memory_space<vmem>>, vector<5x12xf32>
    %c16 = arith.constant 16 : index
    %c0_5 = arith.constant 0 : index
    %4 = vector.load %arg0[%c16, %c0_5] : memref<712x128xf32, #tpu.memory_space<vmem>>, vector<12x64xf32>
    %cst_6 = arith.constant dense<0.000000e+00> : vector<5x64xf32>
    %5 = tpu.matmul %3, %4, %cst_6 {dimension_numbers = #tpu.dot_dimension_numbers<[1], [0], [0], [1], [0, 0, 1, 1], [], []>} : vector<5x12xf32>, vector<12x64xf32>, vector<5x64xf32> -> vector<5x64xf32>
    %c0_7 = arith.constant 0 : index
    %c0_8 = arith.constant 0 : index
    %6 = vector.load %arg4[%c0_7, %c0_8] : memref<4x8xf32, #tpu.memory_space<vmem>>, vector<4x8xf32>
    %c32 = arith.constant 32 : index
    %c0_9 = arith.constant 0 : index
    %7 = vector.load %arg0[%c32, %c0_9] : memref<712x128xf32, #tpu.memory_space<vmem>>, vector<8x64xf32>
    %cst_10 = arith.constant dense<0.000000e+00> : vector<4x64xf32>
    %8 = tpu.matmul %6, %7, %cst_10 {dimension_numbers = #tpu.dot_dimension_numbers<[1], [0], [0], [1], [0, 0, 1, 1], [], []>} : vector<4x8xf32>, vector<8x64xf32>, vector<4x64xf32> -> vector<4x64xf32>
    %c40 = arith.constant 40 : index
    %c0_11 = arith.constant 0 : index
    %9 = vector.load %arg0[%c40, %c0_11] : memref<712x128xf32, #tpu.memory_space<vmem>>, vector<3x64xf32>
    %cst_12 = arith.constant 0.000000e+00 : f32
    %10 = vector.broadcast %cst_12 : f32 to vector<24x64xf32>
    %c0_13 = arith.constant 0 : index
    %c0_14 = arith.constant 0 : index
    %11 = vector.load %arg7[%c0_13, %c0_14] : memref<24x64xf32, #tpu.memory_space<vmem>>, vector<24x64xf32>
    tpu.vector_store %arg7[%c0_13, %c0_14], %10 {strides = array<i32>} : memref<24x64xf32, #tpu.memory_space<vmem>>, vector<24x64xf32>,
    %12 = vector.extract_strided_slice %9 {offsets = [0, 0], sizes = [1, 64], strides = [1, 1]} : vector<3x64xf32> to vector<1x64xf32>
    %13 = vector.broadcast %12 : vector<1x64xf32> to vector<6x64xf32>
    %14 = arith.addf %2, %13 : vector<6x64xf32>
    %c0_15 = arith.constant 0 : index
    %c0_16 = arith.constant 0 : index
    %15 = vector.load %arg7[%c0_15, %c0_16] : memref<24x64xf32, #tpu.memory_space<vmem>>, vector<6x64xf32>
    tpu.vector_store %arg7[%c0_15, %c0_16], %14 {strides = array<i32>} : memref<24x64xf32, #tpu.memory_space<vmem>>, vector<6x64xf32>,
    %16 = vector.extract_strided_slice %9 {offsets = [1, 0], sizes = [1, 64], strides = [1, 1]} : vector<3x64xf32> to vector<1x64xf32>
    %17 = vector.broadcast %16 : vector<1x64xf32> to vector<5x64xf32>
    %18 = arith.addf %5, %17 : vector<5x64xf32>
    %c8 = arith.constant 8 : index
    %c0_17 = arith.constant 0 : index
    %19 = vector.load %arg7[%c8, %c0_17] : memref<24x64xf32, #tpu.memory_space<vmem>>, vector<5x64xf32>
    tpu.vector_store %arg7[%c8, %c0_17], %18 {strides = array<i32>} : memref<24x64xf32, #tpu.memory_space<vmem>>, vector<5x64xf32>,
    %20 = vector.extract_strided_slice %9 {offsets = [2, 0], sizes = [1, 64], strides = [1, 1]} : vector<3x64xf32> to vector<1x64xf32>
    %21 = vector.broadcast %20 : vector<1x64xf32> to vector<4x64xf32>
    %22 = arith.addf %8, %21 : vector<4x64xf32>
    %c16_18 = arith.constant 16 : index
    %c0_19 = arith.constant 0 : index
    %23 = vector.load %arg7[%c16_18, %c0_19] : memref<24x64xf32, #tpu.memory_space<vmem>>, vector<4x64xf32>
    tpu.vector_store %arg7[%c16_18, %c0_19], %22 {strides = array<i32>} : memref<24x64xf32, #tpu.memory_space<vmem>>, vector<4x64xf32>,
    %c0_20 = arith.constant 0 : index
    %c0_21 = arith.constant 0 : index
    %24 = vector.load %arg7[%c0_20, %c0_21] : memref<24x64xf32, #tpu.memory_space<vmem>>, vector<24x64xf32>
    %c48 = arith.constant 48 : index
    %c0_22 = arith.constant 0 : index
    %25 = vector.load %arg0[%c48, %c0_22] : memref<712x128xf32, #tpu.memory_space<vmem>>, vector<64x6xf32>
    %cst_23 = arith.constant dense<0.000000e+00> : vector<24x6xf32>
    %26 = tpu.matmul %24, %25, %cst_23 {dimension_numbers = #tpu.dot_dimension_numbers<[1], [0], [0], [1], [0, 0, 1, 1], [], []>} : vector<24x64xf32>, vector<64x6xf32>, vector<24x6xf32> -> vector<24x6xf32>
    %c112 = arith.constant 112 : index
    %c0_24 = arith.constant 0 : index
    %27 = vector.load %arg0[%c112, %c0_24] : memref<712x128xf32, #tpu.memory_space<vmem>>, vector<6x32xf32>
    %c0_25 = arith.constant 0 : index
    %c0_26 = arith.constant 0 : index
    %28 = vector.load %arg1[%c0_25, %c0_26] : memref<8x16xi32, #tpu.memory_space<vmem>>, vector<8x16xi32>
    %c160 = arith.constant 160 : index
    %c0_27 = arith.constant 0 : index
    %29 = vector.load %arg0[%c160, %c0_27] : memref<712x128xf32, #tpu.memory_space<vmem>>, vector<36x24xf32>
    %cst_28 = arith.constant dense<0.000000e+00> : vector<36x64xf32>
    %30 = tpu.matmul %29, %24, %cst_28 {dimension_numbers = #tpu.dot_dimension_numbers<[1], [0], [0], [1], [0, 0, 1, 1], [], []>} : vector<36x24xf32>, vector<24x64xf32>, vector<36x64xf32> -> vector<36x64xf32>
    %c120 = arith.constant 120 : index
    %c0_29 = arith.constant 0 : index
    %31 = vector.load %arg0[%c120, %c0_29] : memref<712x128xf32, #tpu.memory_space<vmem>>, vector<36x64xf32>
    %32 = arith.mulf %30, %31 : vector<36x64xf32>
    %33 = vector.extract_strided_slice %32 {offsets = [0, 0], sizes = [36, 32], strides = [1, 1]} : vector<36x64xf32> to vector<36x32xf32>
    %34 = vector.extract_strided_slice %32 {offsets = [0, 32], sizes = [36, 32], strides = [1, 1]} : vector<36x64xf32> to vector<36x32xf32>
    %35 = arith.addf %33, %34 : vector<36x32xf32>
    %c200 = arith.constant 200 : index
    %c0_30 = arith.constant 0 : index
    %36 = vector.load %arg0[%c200, %c0_30] : memref<712x128xf32, #tpu.memory_space<vmem>>, vector<12x36xf32>
    %cst_31 = arith.constant dense<0.000000e+00> : vector<12x32xf32>
    %37 = tpu.matmul %36, %35, %cst_31 {dimension_numbers = #tpu.dot_dimension_numbers<[1], [0], [0], [1], [0, 0, 1, 1], [], []>} : vector<12x36xf32>, vector<36x32xf32>, vector<12x32xf32> -> vector<12x32xf32>
    %cst_32 = arith.constant dense<0.000000e+00> : vector<6x12xf32>
    %38 = tpu.matmul %27, %37, %cst_32 {dimension_numbers = #tpu.dot_dimension_numbers<[1], [1], [0], [0], [0, 0, 1, 0], [], []>} : vector<6x32xf32>, vector<12x32xf32>, vector<6x12xf32> -> vector<6x12xf32>
    %39 = tpu.iota {dimensions = array<i32: 0>} : vector<24x12xi32>
    %40 = vector.extract_strided_slice %28 {offsets = [0, 0], sizes = [1, 12], strides = [1, 1]} : vector<8x16xi32> to vector<1x12xi32>
    %41 = vector.broadcast %40 : vector<1x12xi32> to vector<24x12xi32>
    %42 = arith.cmpi eq, %39, %41 : vector<24x12xi32>
    %cst_33 = arith.constant 0.000000e+00 : f32
    %cst_34 = arith.constant -1.000000e+30 : f32
    %43 = vector.broadcast %cst_33 : f32 to vector<24x12xf32>
    %44 = vector.broadcast %cst_34 : f32 to vector<24x12xf32>
    %45 = arith.select %42, %43, %44 : vector<24x12xi1>, vector<24x12xf32>
    %46 = vector.extract_strided_slice %26 {offsets = [0, 0], sizes = [24, 1], strides = [1, 1]} : vector<24x6xf32> to vector<24x1xf32>
    %47 = vector.extract_strided_slice %38 {offsets = [0, 0], sizes = [1, 12], strides = [1, 1]} : vector<6x12xf32> to vector<1x12xf32>
    %48 = vector.broadcast %46 : vector<24x1xf32> to vector<24x12xf32>
    %49 = vector.broadcast %47 : vector<1x12xf32> to vector<24x12xf32>
    %50 = arith.addf %48, %49 : vector<24x12xf32>
    %cst_35 = arith.constant 0.000000e+00 : f32
    %51 = vector.broadcast %cst_35 : f32 to vector<24x12xf32>
    %52 = arith.cmpf ogt, %50, %51 : vector<24x12xf32>
    %cst_36 = arith.constant 0.00999999977 : f32
    %53 = vector.broadcast %cst_36 : f32 to vector<24x12xf32>
    %54 = arith.mulf %53, %50 : vector<24x12xf32>
    %55 = arith.select %52, %50, %54 : vector<24x12xi1>, vector<24x12xf32>
    %56 = arith.addf %55, %45 : vector<24x12xf32>
    %57 = vector.extract_strided_slice %26 {offsets = [0, 1], sizes = [24, 1], strides = [1, 1]} : vector<24x6xf32> to vector<24x1xf32>
    %58 = vector.extract_strided_slice %38 {offsets = [1, 0], sizes = [1, 12], strides = [1, 1]} : vector<6x12xf32> to vector<1x12xf32>
    %59 = vector.broadcast %57 : vector<24x1xf32> to vector<24x12xf32>
    %60 = vector.broadcast %58 : vector<1x12xf32> to vector<24x12xf32>
    %61 = arith.addf %59, %60 : vector<24x12xf32>
    %cst_37 = arith.constant 0.000000e+00 : f32
    %62 = vector.broadcast %cst_37 : f32 to vector<24x12xf32>
    %63 = arith.cmpf ogt, %61, %62 : vector<24x12xf32>
    %cst_38 = arith.constant 0.00999999977 : f32
    %64 = vector.broadcast %cst_38 : f32 to vector<24x12xf32>
    %65 = arith.mulf %64, %61 : vector<24x12xf32>
    %66 = arith.select %63, %61, %65 : vector<24x12xi1>, vector<24x12xf32>
    %67 = arith.addf %66, %45 : vector<24x12xf32>
    %68 = vector.extract_strided_slice %28 {offsets = [1, 0], sizes = [1, 12], strides = [1, 1]} : vector<8x16xi32> to vector<1x12xi32>
    %69 = vector.broadcast %68 : vector<1x12xi32> to vector<24x12xi32>
    %70 = arith.cmpi eq, %39, %69 : vector<24x12xi32>
    %cst_39 = arith.constant 0.000000e+00 : f32
    %cst_40 = arith.constant -1.000000e+30 : f32
    %71 = vector.broadcast %cst_39 : f32 to vector<24x12xf32>
    %72 = vector.broadcast %cst_40 : f32 to vector<24x12xf32>
    %73 = arith.select %70, %71, %72 : vector<24x12xi1>, vector<24x12xf32>
    %74 = vector.extract_strided_slice %26 {offsets = [0, 2], sizes = [24, 1], strides = [1, 1]} : vector<24x6xf32> to vector<24x1xf32>
    %75 = vector.extract_strided_slice %38 {offsets = [2, 0], sizes = [1, 12], strides = [1, 1]} : vector<6x12xf32> to vector<1x12xf32>
    %76 = vector.broadcast %74 : vector<24x1xf32> to vector<24x12xf32>
    %77 = vector.broadcast %75 : vector<1x12xf32> to vector<24x12xf32>
    %78 = arith.addf %76, %77 : vector<24x12xf32>
    %cst_41 = arith.constant 0.000000e+00 : f32
    %79 = vector.broadcast %cst_41 : f32 to vector<24x12xf32>
    %80 = arith.cmpf ogt, %78, %79 : vector<24x12xf32>
    %cst_42 = arith.constant 0.00999999977 : f32
    %81 = vector.broadcast %cst_42 : f32 to vector<24x12xf32>
    %82 = arith.mulf %81, %78 : vector<24x12xf32>
    %83 = arith.select %80, %78, %82 : vector<24x12xi1>, vector<24x12xf32>
    %84 = arith.addf %83, %73 : vector<24x12xf32>
    %85 = vector.extract_strided_slice %26 {offsets = [0, 3], sizes = [24, 1], strides = [1, 1]} : vector<24x6xf32> to vector<24x1xf32>
    %86 = vector.extract_strided_slice %38 {offsets = [3, 0], sizes = [1, 12], strides = [1, 1]} : vector<6x12xf32> to vector<1x12xf32>
    %87 = vector.broadcast %85 : vector<24x1xf32> to vector<24x12xf32>
    %88 = vector.broadcast %86 : vector<1x12xf32> to vector<24x12xf32>
    %89 = arith.addf %87, %88 : vector<24x12xf32>
    %cst_43 = arith.constant 0.000000e+00 : f32
    %90 = vector.broadcast %cst_43 : f32 to vector<24x12xf32>
    %91 = arith.cmpf ogt, %89, %90 : vector<24x12xf32>
    %cst_44 = arith.constant 0.00999999977 : f32
    %92 = vector.broadcast %cst_44 : f32 to vector<24x12xf32>
    %93 = arith.mulf %92, %89 : vector<24x12xf32>
    %94 = arith.select %91, %89, %93 : vector<24x12xi1>, vector<24x12xf32>
    %95 = arith.addf %94, %73 : vector<24x12xf32>
    %96 = vector.extract_strided_slice %28 {offsets = [2, 0], sizes = [1, 12], strides = [1, 1]} : vector<8x16xi32> to vector<1x12xi32>
    %97 = vector.broadcast %96 : vector<1x12xi32> to vector<24x12xi32>
    %98 = arith.cmpi eq, %39, %97 : vector<24x12xi32>
    %cst_45 = arith.constant 0.000000e+00 : f32
    %cst_46 = arith.constant -1.000000e+30 : f32
    %99 = vector.broadcast %cst_45 : f32 to vector<24x12xf32>
    %100 = vector.broadcast %cst_46 : f32 to vector<24x12xf32>
    %101 = arith.select %98, %99, %100 : vector<24x12xi1>, vector<24x12xf32>
    %102 = vector.extract_strided_slice %26 {offsets = [0, 4], sizes = [24, 1], strides = [1, 1]} : vector<24x6xf32> to vector<24x1xf32>
    %103 = vector.extract_strided_slice %38 {offsets = [4, 0], sizes = [1, 12], strides = [1, 1]} : vector<6x12xf32> to vector<1x12xf32>
    %104 = vector.broadcast %102 : vector<24x1xf32> to vector<24x12xf32>
    %105 = vector.broadcast %103 : vector<1x12xf32> to vector<24x12xf32>
    %106 = arith.addf %104, %105 : vector<24x12xf32>
    %cst_47 = arith.constant 0.000000e+00 : f32
    %107 = vector.broadcast %cst_47 : f32 to vector<24x12xf32>
    %108 = arith.cmpf ogt, %106, %107 : vector<24x12xf32>
    %cst_48 = arith.constant 0.00999999977 : f32
    %109 = vector.broadcast %cst_48 : f32 to vector<24x12xf32>
    %110 = arith.mulf %109, %106 : vector<24x12xf32>
    %111 = arith.select %108, %106, %110 : vector<24x12xi1>, vector<24x12xf32>
    %112 = arith.addf %111, %101 : vector<24x12xf32>
    %113 = vector.extract_strided_slice %26 {offsets = [0, 5], sizes = [24, 1], strides = [1, 1]} : vector<24x6xf32> to vector<24x1xf32>
    %114 = vector.extract_strided_slice %38 {offsets = [5, 0], sizes = [1, 12], strides = [1, 1]} : vector<6x12xf32> to vector<1x12xf32>
    %115 = vector.broadcast %113 : vector<24x1xf32> to vector<24x12xf32>
    %116 = vector.broadcast %114 : vector<1x12xf32> to vector<24x12xf32>
    %117 = arith.addf %115, %116 : vector<24x12xf32>
    %cst_49 = arith.constant 0.000000e+00 : f32
    %118 = vector.broadcast %cst_49 : f32 to vector<24x12xf32>
    %119 = arith.cmpf ogt, %117, %118 : vector<24x12xf32>
    %cst_50 = arith.constant 0.00999999977 : f32
    %120 = vector.broadcast %cst_50 : f32 to vector<24x12xf32>
    %121 = arith.mulf %120, %117 : vector<24x12xf32>
    %122 = arith.select %119, %117, %121 : vector<24x12xi1>, vector<24x12xf32>
    %123 = arith.addf %122, %101 : vector<24x12xf32>
    %124 = tpu.concatenate %56, %67, %84, %95, %112, %123 in 0 : vector<24x12xf32>, vector<24x12xf32>, vector<24x12xf32>, vector<24x12xf32>, vector<24x12xf32>, vector<24x12xf32> -> vector<144x12xf32>
    %cst_51 = arith.constant dense<0xFF800000> : vector<144xf32>
    %125 = vector.multi_reduction <maximumf>, %124, %cst_51 [1] : vector<144x12xf32> to vector<144xf32>
    %126 = vector.shape_cast %125 : vector<144xf32> to vector<144x1xf32>
    %cst_52 = arith.constant 0.000000e+00 : f32
    %127 = vector.broadcast %cst_52 : f32 to vector<144x1xf32>
    %128 = arith.maximumf %126, %127 : vector<144x1xf32>
    %129 = vector.broadcast %128 : vector<144x1xf32> to vector<144x12xf32>
    %130 = arith.subf %124, %129 : vector<144x12xf32>
    %131 = math.exp %130 : vector<144x12xf32>
    %cst_53 = arith.constant dense<0.000000e+00> : vector<144xf32>
    %132 = vector.multi_reduction <add>, %131, %cst_53 [1] : vector<144x12xf32> to vector<144xf32>
    %133 = vector.shape_cast %132 : vector<144xf32> to vector<144x1xf32>
    %cst_54 = arith.constant 0.000000e+00 : f32
    %134 = vector.broadcast %cst_54 : f32 to vector<144x1xf32>
    %135 = arith.cmpf ogt, %133, %134 : vector<144x1xf32>
    %cst_55 = arith.constant 1.000000e+00 : f32
    %136 = vector.broadcast %cst_55 : f32 to vector<144x1xf32>
    %137 = arith.select %135, %133, %136 : vector<144x1xi1>, vector<144x1xf32>
    %138 = tpu.reciprocal %137 {approx = true} : vector<144x1xf32> -> vector<144x1xf32>
    %139 = vector.broadcast %138 : vector<144x1xf32> to vector<144x12xf32>
    %140 = arith.mulf %131, %139 : vector<144x12xf32>
    %cst_56 = arith.constant dense<0.000000e+00> : vector<144x32xf32>
    %141 = tpu.matmul %140, %37, %cst_56 {dimension_numbers = #tpu.dot_dimension_numbers<[1], [0], [0], [1], [0, 0, 1, 1], [], []>} : vector<144x12xf32>, vector<12x32xf32>, vector<144x32xf32> -> vector<144x32xf32>
    %142 = vector.extract_strided_slice %141 {offsets = [0, 0], sizes = [24, 32], strides = [1, 1]} : vector<144x32xf32> to vector<24x32xf32>
    %143 = vector.extract_strided_slice %141 {offsets = [48, 0], sizes = [24, 32], strides = [1, 1]} : vector<144x32xf32> to vector<24x32xf32>
    %144 = arith.addf %142, %143 : vector<24x32xf32>
    %145 = vector.extract_strided_slice %141 {offsets = [96, 0], sizes = [24, 32], strides = [1, 1]} : vector<144x32xf32> to vector<24x32xf32>
    %146 = arith.addf %144, %145 : vector<24x32xf32>
    %cst_57 = arith.constant 0.000000e+00 : f32
    %147 = vector.broadcast %cst_57 : f32 to vector<24x32xf32>
    %148 = arith.cmpf ogt, %146, %147 : vector<24x32xf32>
    %cst_58 = arith.constant 0.000000e+00 : f32
    %149 = vector.broadcast %cst_58 : f32 to vector<24x32xf32>
    %150 = arith.minimumf %146, %149 : vector<24x32xf32>
    %151 = math.exp %150 : vector<24x32xf32>
    %cst_59 = arith.constant 1.000000e+00 : f32
    %152 = vector.broadcast %cst_59 : f32 to vector<24x32xf32>
    %153 = arith.subf %151, %152 : vector<24x32xf32>
    %154 = arith.select %148, %146, %153 : vector<24x32xi1>, vector<24x32xf32>
    %155 = vector.extract_strided_slice %141 {offsets = [24, 0], sizes = [24, 32], strides = [1, 1]} : vector<144x32xf32> to vector<24x32xf32>
    %156 = vector.extract_strided_slice %141 {offsets = [72, 0], sizes = [24, 32], strides = [1, 1]} : vector<144x32xf32> to vector<24x32xf32>
    %157 = arith.addf %155, %156 : vector<24x32xf32>
    %158 = vector.extract_strided_slice %141 {offsets = [120, 0], sizes = [24, 32], strides = [1, 1]} : vector<144x32xf32> to vector<24x32xf32>
    %159 = arith.addf %157, %158 : vector<24x32xf32>
    %cst_60 = arith.constant 0.000000e+00 : f32
    %160 = vector.broadcast %cst_60 : f32 to vector<24x32xf32>
    %161 = arith.cmpf ogt, %159, %160 : vector<24x32xf32>
    %cst_61 = arith.constant 0.000000e+00 : f32
    %162 = vector.broadcast %cst_61 : f32 to vector<24x32xf32>
    %163 = arith.minimumf %159, %162 : vector<24x32xf32>
    %164 = math.exp %163 : vector<24x32xf32>
    %cst_62 = arith.constant 1.000000e+00 : f32
    %165 = vector.broadcast %cst_62 : f32 to vector<24x32xf32>
    %166 = arith.subf %164, %165 : vector<24x32xf32>
    %167 = arith.select %161, %159, %166 : vector<24x32xi1>, vector<24x32xf32>
    %168 = tpu.concatenate %154, %167 in 1 : vector<24x32xf32>, vector<24x32xf32> -> vector<24x64xf32>
    %c248 = arith.constant 248 : index
    %c0_63 = arith.constant 0 : index
    %169 = vector.load %arg0[%c248, %c0_63] : memref<712x128xf32, #tpu.memory_space<vmem>>, vector<30x24xf32>
    %cst_64 = arith.constant dense<0.000000e+00> : vector<30x64xf32>
    %170 = tpu.matmul %169, %24, %cst_64 {dimension_numbers = #tpu.dot_dimension_numbers<[1], [0], [0], [1], [0, 0, 1, 1], [], []>} : vector<30x24xf32>, vector<24x64xf32>, vector<30x64xf32> -> vector<30x64xf32>
    %c216 = arith.constant 216 : index
    %c0_65 = arith.constant 0 : index
    %171 = vector.load %arg0[%c216, %c0_65] : memref<712x128xf32, #tpu.memory_space<vmem>>, vector<30x64xf32>
    %172 = arith.mulf %170, %171 : vector<30x64xf32>
    %173 = vector.extract_strided_slice %172 {offsets = [0, 0], sizes = [30, 32], strides = [1, 1]} : vector<30x64xf32> to vector<30x32xf32>
    %174 = vector.extract_strided_slice %172 {offsets = [0, 32], sizes = [30, 32], strides = [1, 1]} : vector<30x64xf32> to vector<30x32xf32>
    %175 = arith.addf %173, %174 : vector<30x32xf32>
    %c280 = arith.constant 280 : index
    %c0_66 = arith.constant 0 : index
    %176 = vector.load %arg0[%c280, %c0_66] : memref<712x128xf32, #tpu.memory_space<vmem>>, vector<10x30xf32>
    %cst_67 = arith.constant dense<0.000000e+00> : vector<10x32xf32>
    %177 = tpu.matmul %176, %175, %cst_67 {dimension_numbers = #tpu.dot_dimension_numbers<[1], [0], [0], [1], [0, 0, 1, 1], [], []>} : vector<10x30xf32>, vector<30x32xf32>, vector<10x32xf32> -> vector<10x32xf32>
    %cst_68 = arith.constant dense<0.000000e+00> : vector<6x10xf32>
    %178 = tpu.matmul %27, %177, %cst_68 {dimension_numbers = #tpu.dot_dimension_numbers<[1], [1], [0], [0], [0, 0, 1, 0], [], []>} : vector<6x32xf32>, vector<10x32xf32>, vector<6x10xf32> -> vector<6x10xf32>
    %179 = tpu.iota {dimensions = array<i32: 0>} : vector<24x10xi32>
    %180 = vector.extract_strided_slice %28 {offsets = [6, 0], sizes = [1, 10], strides = [1, 1]} : vector<8x16xi32> to vector<1x10xi32>
    %181 = vector.broadcast %180 : vector<1x10xi32> to vector<24x10xi32>
    %182 = arith.cmpi eq, %179, %181 : vector<24x10xi32>
    %cst_69 = arith.constant 0.000000e+00 : f32
    %cst_70 = arith.constant -1.000000e+30 : f32
    %183 = vector.broadcast %cst_69 : f32 to vector<24x10xf32>
    %184 = vector.broadcast %cst_70 : f32 to vector<24x10xf32>
    %185 = arith.select %182, %183, %184 : vector<24x10xi1>, vector<24x10xf32>
    %186 = vector.extract_strided_slice %26 {offsets = [0, 0], sizes = [24, 1], strides = [1, 1]} : vector<24x6xf32> to vector<24x1xf32>
    %187 = vector.extract_strided_slice %178 {offsets = [0, 0], sizes = [1, 10], strides = [1, 1]} : vector<6x10xf32> to vector<1x10xf32>
    %188 = vector.broadcast %186 : vector<24x1xf32> to vector<24x10xf32>
    %189 = vector.broadcast %187 : vector<1x10xf32> to vector<24x10xf32>
    %190 = arith.addf %188, %189 : vector<24x10xf32>
    %cst_71 = arith.constant 0.000000e+00 : f32
    %191 = vector.broadcast %cst_71 : f32 to vector<24x10xf32>
    %192 = arith.cmpf ogt, %190, %191 : vector<24x10xf32>
    %cst_72 = arith.constant 0.00999999977 : f32
    %193 = vector.broadcast %cst_72 : f32 to vector<24x10xf32>
    %194 = arith.mulf %193, %190 : vector<24x10xf32>
    %195 = arith.select %192, %190, %194 : vector<24x10xi1>, vector<24x10xf32>
    %196 = arith.addf %195, %185 : vector<24x10xf32>
    %197 = vector.extract_strided_slice %26 {offsets = [0, 1], sizes = [24, 1], strides = [1, 1]} : vector<24x6xf32> to vector<24x1xf32>
    %198 = vector.extract_strided_slice %178 {offsets = [1, 0], sizes = [1, 10], strides = [1, 1]} : vector<6x10xf32> to vector<1x10xf32>
    %199 = vector.broadcast %197 : vector<24x1xf32> to vector<24x10xf32>
    %200 = vector.broadcast %198 : vector<1x10xf32> to vector<24x10xf32>
    %201 = arith.addf %199, %200 : vector<24x10xf32>
    %cst_73 = arith.constant 0.000000e+00 : f32
    %202 = vector.broadcast %cst_73 : f32 to vector<24x10xf32>
    %203 = arith.cmpf ogt, %201, %202 : vector<24x10xf32>
    %cst_74 = arith.constant 0.00999999977 : f32
    %204 = vector.broadcast %cst_74 : f32 to vector<24x10xf32>
    %205 = arith.mulf %204, %201 : vector<24x10xf32>
    %206 = arith.select %203, %201, %205 : vector<24x10xi1>, vector<24x10xf32>
    %207 = arith.addf %206, %185 : vector<24x10xf32>
    %208 = vector.extract_strided_slice %28 {offsets = [5, 0], sizes = [1, 10], strides = [1, 1]} : vector<8x16xi32> to vector<1x10xi32>
    %209 = vector.broadcast %208 : vector<1x10xi32> to vector<24x10xi32>
    %210 = arith.cmpi eq, %179, %209 : vector<24x10xi32>
    %cst_75 = arith.constant 0.000000e+00 : f32
    %cst_76 = arith.constant -1.000000e+30 : f32
    %211 = vector.broadcast %cst_75 : f32 to vector<24x10xf32>
    %212 = vector.broadcast %cst_76 : f32 to vector<24x10xf32>
    %213 = arith.select %210, %211, %212 : vector<24x10xi1>, vector<24x10xf32>
    %214 = vector.extract_strided_slice %26 {offsets = [0, 2], sizes = [24, 1], strides = [1, 1]} : vector<24x6xf32> to vector<24x1xf32>
    %215 = vector.extract_strided_slice %178 {offsets = [2, 0], sizes = [1, 10], strides = [1, 1]} : vector<6x10xf32> to vector<1x10xf32>
    %216 = vector.broadcast %214 : vector<24x1xf32> to vector<24x10xf32>
    %217 = vector.broadcast %215 : vector<1x10xf32> to vector<24x10xf32>
    %218 = arith.addf %216, %217 : vector<24x10xf32>
    %cst_77 = arith.constant 0.000000e+00 : f32
    %219 = vector.broadcast %cst_77 : f32 to vector<24x10xf32>
    %220 = arith.cmpf ogt, %218, %219 : vector<24x10xf32>
    %cst_78 = arith.constant 0.00999999977 : f32
    %221 = vector.broadcast %cst_78 : f32 to vector<24x10xf32>
    %222 = arith.mulf %221, %218 : vector<24x10xf32>
    %223 = arith.select %220, %218, %222 : vector<24x10xi1>, vector<24x10xf32>
    %224 = arith.addf %223, %213 : vector<24x10xf32>
    %225 = vector.extract_strided_slice %26 {offsets = [0, 3], sizes = [24, 1], strides = [1, 1]} : vector<24x6xf32> to vector<24x1xf32>
    %226 = vector.extract_strided_slice %178 {offsets = [3, 0], sizes = [1, 10], strides = [1, 1]} : vector<6x10xf32> to vector<1x10xf32>
    %227 = vector.broadcast %225 : vector<24x1xf32> to vector<24x10xf32>
    %228 = vector.broadcast %226 : vector<1x10xf32> to vector<24x10xf32>
    %229 = arith.addf %227, %228 : vector<24x10xf32>
    %cst_79 = arith.constant 0.000000e+00 : f32
    %230 = vector.broadcast %cst_79 : f32 to vector<24x10xf32>
    %231 = arith.cmpf ogt, %229, %230 : vector<24x10xf32>
    %cst_80 = arith.constant 0.00999999977 : f32
    %232 = vector.broadcast %cst_80 : f32 to vector<24x10xf32>
    %233 = arith.mulf %232, %229 : vector<24x10xf32>
    %234 = arith.select %231, %229, %233 : vector<24x10xi1>, vector<24x10xf32>
    %235 = arith.addf %234, %213 : vector<24x10xf32>
    %236 = vector.extract_strided_slice %28 {offsets = [4, 0], sizes = [1, 10], strides = [1, 1]} : vector<8x16xi32> to vector<1x10xi32>
    %237 = vector.broadcast %236 : vector<1x10xi32> to vector<24x10xi32>
    %238 = arith.cmpi eq, %179, %237 : vector<24x10xi32>
    %cst_81 = arith.constant 0.000000e+00 : f32
    %cst_82 = arith.constant -1.000000e+30 : f32
    %239 = vector.broadcast %cst_81 : f32 to vector<24x10xf32>
    %240 = vector.broadcast %cst_82 : f32 to vector<24x10xf32>
    %241 = arith.select %238, %239, %240 : vector<24x10xi1>, vector<24x10xf32>
    %242 = vector.extract_strided_slice %26 {offsets = [0, 4], sizes = [24, 1], strides = [1, 1]} : vector<24x6xf32> to vector<24x1xf32>
    %243 = vector.extract_strided_slice %178 {offsets = [4, 0], sizes = [1, 10], strides = [1, 1]} : vector<6x10xf32> to vector<1x10xf32>
    %244 = vector.broadcast %242 : vector<24x1xf32> to vector<24x10xf32>
    %245 = vector.broadcast %243 : vector<1x10xf32> to vector<24x10xf32>
    %246 = arith.addf %244, %245 : vector<24x10xf32>
    %cst_83 = arith.constant 0.000000e+00 : f32
    %247 = vector.broadcast %cst_83 : f32 to vector<24x10xf32>
    %248 = arith.cmpf ogt, %246, %247 : vector<24x10xf32>
    %cst_84 = arith.constant 0.00999999977 : f32
    %249 = vector.broadcast %cst_84 : f32 to vector<24x10xf32>
    %250 = arith.mulf %249, %246 : vector<24x10xf32>
    %251 = arith.select %248, %246, %250 : vector<24x10xi1>, vector<24x10xf32>
    %252 = arith.addf %251, %241 : vector<24x10xf32>
    %253 = vector.extract_strided_slice %26 {offsets = [0, 5], sizes = [24, 1], strides = [1, 1]} : vector<24x6xf32> to vector<24x1xf32>
    %254 = vector.extract_strided_slice %178 {offsets = [5, 0], sizes = [1, 10], strides = [1, 1]} : vector<6x10xf32> to vector<1x10xf32>
    %255 = vector.broadcast %253 : vector<24x1xf32> to vector<24x10xf32>
    %256 = vector.broadcast %254 : vector<1x10xf32> to vector<24x10xf32>
    %257 = arith.addf %255, %256 : vector<24x10xf32>
    %cst_85 = arith.constant 0.000000e+00 : f32
    %258 = vector.broadcast %cst_85 : f32 to vector<24x10xf32>
    %259 = arith.cmpf ogt, %257, %258 : vector<24x10xf32>
    %cst_86 = arith.constant 0.00999999977 : f32
    %260 = vector.broadcast %cst_86 : f32 to vector<24x10xf32>
    %261 = arith.mulf %260, %257 : vector<24x10xf32>
    %262 = arith.select %259, %257, %261 : vector<24x10xi1>, vector<24x10xf32>
    %263 = arith.addf %262, %241 : vector<24x10xf32>
    %264 = tpu.concatenate %196, %207, %224, %235, %252, %263 in 0 : vector<24x10xf32>, vector<24x10xf32>, vector<24x10xf32>, vector<24x10xf32>, vector<24x10xf32>, vector<24x10xf32> -> vector<144x10xf32>
    %cst_87 = arith.constant dense<0xFF800000> : vector<144xf32>
    %265 = vector.multi_reduction <maximumf>, %264, %cst_87 [1] : vector<144x10xf32> to vector<144xf32>
    %266 = vector.shape_cast %265 : vector<144xf32> to vector<144x1xf32>
    %cst_88 = arith.constant 0.000000e+00 : f32
    %267 = vector.broadcast %cst_88 : f32 to vector<144x1xf32>
    %268 = arith.maximumf %266, %267 : vector<144x1xf32>
    %269 = vector.broadcast %268 : vector<144x1xf32> to vector<144x10xf32>
    %270 = arith.subf %264, %269 : vector<144x10xf32>
    %271 = math.exp %270 : vector<144x10xf32>
    %cst_89 = arith.constant dense<0.000000e+00> : vector<144xf32>
    %272 = vector.multi_reduction <add>, %271, %cst_89 [1] : vector<144x10xf32> to vector<144xf32>
    %273 = vector.shape_cast %272 : vector<144xf32> to vector<144x1xf32>
    %cst_90 = arith.constant 0.000000e+00 : f32
    %274 = vector.broadcast %cst_90 : f32 to vector<144x1xf32>
    %275 = arith.cmpf ogt, %273, %274 : vector<144x1xf32>
    %cst_91 = arith.constant 1.000000e+00 : f32
    %276 = vector.broadcast %cst_91 : f32 to vector<144x1xf32>
    %277 = arith.select %275, %273, %276 : vector<144x1xi1>, vector<144x1xf32>
    %278 = tpu.reciprocal %277 {approx = true} : vector<144x1xf32> -> vector<144x1xf32>
    %279 = vector.broadcast %278 : vector<144x1xf32> to vector<144x10xf32>
    %280 = arith.mulf %271, %279 : vector<144x10xf32>
    %cst_92 = arith.constant dense<0.000000e+00> : vector<144x32xf32>
    %281 = tpu.matmul %280, %177, %cst_92 {dimension_numbers = #tpu.dot_dimension_numbers<[1], [0], [0], [1], [0, 0, 1, 1], [], []>} : vector<144x10xf32>, vector<10x32xf32>, vector<144x32xf32> -> vector<144x32xf32>
    %282 = vector.extract_strided_slice %281 {offsets = [0, 0], sizes = [24, 32], strides = [1, 1]} : vector<144x32xf32> to vector<24x32xf32>
    %283 = vector.extract_strided_slice %281 {offsets = [48, 0], sizes = [24, 32], strides = [1, 1]} : vector<144x32xf32> to vector<24x32xf32>
    %284 = arith.addf %282, %283 : vector<24x32xf32>
    %285 = vector.extract_strided_slice %281 {offsets = [96, 0], sizes = [24, 32], strides = [1, 1]} : vector<144x32xf32> to vector<24x32xf32>
    %286 = arith.addf %284, %285 : vector<24x32xf32>
    %cst_93 = arith.constant 0.000000e+00 : f32
    %287 = vector.broadcast %cst_93 : f32 to vector<24x32xf32>
    %288 = arith.cmpf ogt, %286, %287 : vector<24x32xf32>
    %cst_94 = arith.constant 0.000000e+00 : f32
    %289 = vector.broadcast %cst_94 : f32 to vector<24x32xf32>
    %290 = arith.minimumf %286, %289 : vector<24x32xf32>
    %291 = math.exp %290 : vector<24x32xf32>
    %cst_95 = arith.constant 1.000000e+00 : f32
    %292 = vector.broadcast %cst_95 : f32 to vector<24x32xf32>
    %293 = arith.subf %291, %292 : vector<24x32xf32>
    %294 = arith.select %288, %286, %293 : vector<24x32xi1>, vector<24x32xf32>
    %295 = vector.extract_strided_slice %281 {offsets = [24, 0], sizes = [24, 32], strides = [1, 1]} : vector<144x32xf32> to vector<24x32xf32>
    %296 = vector.extract_strided_slice %281 {offsets = [72, 0], sizes = [24, 32], strides = [1, 1]} : vector<144x32xf32> to vector<24x32xf32>
    %297 = arith.addf %295, %296 : vector<24x32xf32>
    %298 = vector.extract_strided_slice %281 {offsets = [120, 0], sizes = [24, 32], strides = [1, 1]} : vector<144x32xf32> to vector<24x32xf32>
    %299 = arith.addf %297, %298 : vector<24x32xf32>
    %cst_96 = arith.constant 0.000000e+00 : f32
    %300 = vector.broadcast %cst_96 : f32 to vector<24x32xf32>
    %301 = arith.cmpf ogt, %299, %300 : vector<24x32xf32>
    %cst_97 = arith.constant 0.000000e+00 : f32
    %302 = vector.broadcast %cst_97 : f32 to vector<24x32xf32>
    %303 = arith.minimumf %299, %302 : vector<24x32xf32>
    %304 = math.exp %303 : vector<24x32xf32>
    %cst_98 = arith.constant 1.000000e+00 : f32
    %305 = vector.broadcast %cst_98 : f32 to vector<24x32xf32>
    %306 = arith.subf %304, %305 : vector<24x32xf32>
    %307 = arith.select %301, %299, %306 : vector<24x32xi1>, vector<24x32xf32>
    %308 = tpu.concatenate %294, %307 in 1 : vector<24x32xf32>, vector<24x32xf32> -> vector<24x64xf32>
    %309 = tpu.concatenate %168, %308 in 0 : vector<24x64xf32>, vector<24x64xf32> -> vector<48x64xf32>
    %c320 = arith.constant 320 : index
    %c0_99 = arith.constant 0 : index
    %310 = vector.load %arg0[%c320, %c0_99] : memref<712x128xf32, #tpu.memory_space<vmem>>, vector<64x128xf32>
    %cst_100 = arith.constant dense<0.000000e+00> : vector<48x128xf32>
    %311 = tpu.matmul %309, %310, %cst_100 {dimension_numbers = #tpu.dot_dimension_numbers<[1], [0], [0], [1], [0, 0, 1, 1], [], []>} : vector<48x64xf32>, vector<64x128xf32>, vector<48x128xf32> -> vector<48x128xf32>
    %c384 = arith.constant 384 : index
    %c0_101 = arith.constant 0 : index
    %312 = vector.load %arg0[%c384, %c0_101] : memref<712x128xf32, #tpu.memory_space<vmem>>, vector<1x128xf32>
    %313 = vector.broadcast %312 : vector<1x128xf32> to vector<48x128xf32>
    %314 = arith.addf %311, %313 : vector<48x128xf32>
    %315 = math.tanh %314 : vector<48x128xf32>
    %c392 = arith.constant 392 : index
    %c0_102 = arith.constant 0 : index
    %316 = vector.load %arg0[%c392, %c0_102] : memref<712x128xf32, #tpu.memory_space<vmem>>, vector<1x128xf32>
    %317 = vector.broadcast %316 : vector<1x128xf32> to vector<48x128xf32>
    %318 = arith.mulf %315, %317 : vector<48x128xf32>
    %cst_103 = arith.constant dense<0.000000e+00> : vector<48xf32>
    %319 = vector.multi_reduction <add>, %318, %cst_103 [1] : vector<48x128xf32> to vector<48xf32>
    %320 = vector.shape_cast %319 : vector<48xf32> to vector<48x1xf32>
    %c296 = arith.constant 296 : index
    %c0_104 = arith.constant 0 : index
    %321 = vector.load %arg0[%c296, %c0_104] : memref<712x128xf32, #tpu.memory_space<vmem>>, vector<24x24xf32>
    %322 = vector.extract_strided_slice %320 {offsets = [0, 0], sizes = [24, 1], strides = [1, 1]} : vector<48x1xf32> to vector<24x1xf32>
    %cst_105 = arith.constant dense<0.000000e+00> : vector<24x1xf32>
    %323 = tpu.matmul %321, %322, %cst_105 {dimension_numbers = #tpu.dot_dimension_numbers<[1], [0], [0], [1], [0, 0, 1, 1], [], []>} : vector<24x24xf32>, vector<24x1xf32>, vector<24x1xf32> -> vector<24x1xf32>
    %324 = vector.extract_strided_slice %320 {offsets = [24, 0], sizes = [24, 1], strides = [1, 1]} : vector<48x1xf32> to vector<24x1xf32>
    %cst_106 = arith.constant dense<0.000000e+00> : vector<24x1xf32>
    %325 = tpu.matmul %321, %324, %cst_106 {dimension_numbers = #tpu.dot_dimension_numbers<[1], [0], [0], [1], [0, 0, 1, 1], [], []>} : vector<24x24xf32>, vector<24x1xf32>, vector<24x1xf32> -> vector<24x1xf32>
    %326 = arith.maximumf %323, %325 : vector<24x1xf32>
    %327 = arith.subf %323, %326 : vector<24x1xf32>
    %328 = math.exp %327 : vector<24x1xf32>
    %329 = arith.subf %325, %326 : vector<24x1xf32>
    %330 = math.exp %329 : vector<24x1xf32>
    %331 = arith.addf %328, %330 : vector<24x1xf32>
    %332 = tpu.reciprocal %331 {approx = true} : vector<24x1xf32> -> vector<24x1xf32>
    %333 = arith.mulf %328, %332 : vector<24x1xf32>
    %334 = vector.broadcast %333 : vector<24x1xf32> to vector<24x64xf32>
    %335 = arith.mulf %334, %168 : vector<24x64xf32>
    %336 = arith.mulf %330, %332 : vector<24x1xf32>
    %337 = vector.broadcast %336 : vector<24x1xf32> to vector<24x64xf32>
    %338 = arith.mulf %337, %308 : vector<24x64xf32>
    %339 = arith.addf %335, %338 : vector<24x64xf32>
    %c400 = arith.constant 400 : index
    %c0_107 = arith.constant 0 : index
    %340 = vector.load %arg0[%c400, %c0_107] : memref<712x128xf32, #tpu.memory_space<vmem>>, vector<64x64xf32>
    %cst_108 = arith.constant dense<0.000000e+00> : vector<24x64xf32>
    %341 = tpu.matmul %339, %340, %cst_108 {dimension_numbers = #tpu.dot_dimension_numbers<[1], [0], [0], [1], [0, 0, 1, 1], [], []>} : vector<24x64xf32>, vector<64x64xf32>, vector<24x64xf32> -> vector<24x64xf32>
    %c464 = arith.constant 464 : index
    %c0_109 = arith.constant 0 : index
    %342 = vector.load %arg0[%c464, %c0_109] : memref<712x128xf32, #tpu.memory_space<vmem>>, vector<64x64xf32>
    %cst_110 = arith.constant dense<0.000000e+00> : vector<24x64xf32>
    %343 = tpu.matmul %339, %342, %cst_110 {dimension_numbers = #tpu.dot_dimension_numbers<[1], [0], [0], [1], [0, 0, 1, 1], [], []>} : vector<24x64xf32>, vector<64x64xf32>, vector<24x64xf32> -> vector<24x64xf32>
    %c528 = arith.constant 528 : index
    %c0_111 = arith.constant 0 : index
    %344 = vector.load %arg0[%c528, %c0_111] : memref<712x128xf32, #tpu.memory_space<vmem>>, vector<64x64xf32>
    %cst_112 = arith.constant dense<0.000000e+00> : vector<24x64xf32>
    %345 = tpu.matmul %339, %344, %cst_112 {dimension_numbers = #tpu.dot_dimension_numbers<[1], [0], [0], [1], [0, 0, 1, 1], [], []>} : vector<24x64xf32>, vector<64x64xf32>, vector<24x64xf32> -> vector<24x64xf32>
    %346 = tpu.concatenate %341, %343, %345 in 0 : vector<24x64xf32>, vector<24x64xf32>, vector<24x64xf32> -> vector<72x64xf32>
    %c0_113 = arith.constant 0 : index
    %c0_114 = arith.constant 0 : index
    %347 = vector.load %arg5[%c0_113, %c0_114] : memref<8x3xi32, #tpu.memory_space<vmem>>, vector<8x3xi32>
    %348 = tpu.iota {dimensions = array<i32: 1>} : vector<8x72xi32>
    %cst_115 = arith.constant 0.000000e+00 : f32
    %349 = vector.broadcast %cst_115 : f32 to vector<8x72xf32>
    %350 = vector.extract_strided_slice %347 {offsets = [0, 0], sizes = [8, 1], strides = [1, 1]} : vector<8x3xi32> to vector<8x1xi32>
    %c0_i32 = arith.constant 0 : i32
    %351 = vector.broadcast %c0_i32 : i32 to vector<8x1xi32>
    %352 = arith.addi %350, %351 : vector<8x1xi32>
    %353 = vector.broadcast %352 : vector<8x1xi32> to vector<8x72xi32>
    %354 = arith.cmpi eq, %348, %353 : vector<8x72xi32>
    %355 = arith.extui %354 : vector<8x72xi1> to vector<8x72xi32>
    %356 = arith.sitofp %355 : vector<8x72xi32> to vector<8x72xf32>
    %357 = arith.addf %349, %356 : vector<8x72xf32>
    %358 = vector.extract_strided_slice %347 {offsets = [0, 1], sizes = [8, 1], strides = [1, 1]} : vector<8x3xi32> to vector<8x1xi32>
    %c32_i32 = arith.constant 32 : i32
    %359 = vector.broadcast %c32_i32 : i32 to vector<8x1xi32>
    %360 = arith.addi %358, %359 : vector<8x1xi32>
    %361 = vector.broadcast %360 : vector<8x1xi32> to vector<8x72xi32>
    %362 = arith.cmpi eq, %348, %361 : vector<8x72xi32>
    %363 = arith.extui %362 : vector<8x72xi1> to vector<8x72xi32>
    %364 = arith.sitofp %363 : vector<8x72xi32> to vector<8x72xf32>
    %365 = arith.addf %357, %364 : vector<8x72xf32>
    %366 = vector.extract_strided_slice %347 {offsets = [0, 2], sizes = [8, 1], strides = [1, 1]} : vector<8x3xi32> to vector<8x1xi32>
    %c64_i32 = arith.constant 64 : i32
    %367 = vector.broadcast %c64_i32 : i32 to vector<8x1xi32>
    %368 = arith.addi %366, %367 : vector<8x1xi32>
    %369 = vector.broadcast %368 : vector<8x1xi32> to vector<8x72xi32>
    %370 = arith.cmpi eq, %348, %369 : vector<8x72xi32>
    %371 = arith.extui %370 : vector<8x72xi1> to vector<8x72xi32>
    %372 = arith.sitofp %371 : vector<8x72xi32> to vector<8x72xf32>
    %373 = arith.addf %365, %372 : vector<8x72xf32>
    %cst_116 = arith.constant dense<0.000000e+00> : vector<8x64xf32>
    %374 = tpu.matmul %373, %346, %cst_116 {dimension_numbers = #tpu.dot_dimension_numbers<[1], [0], [0], [1], [0, 0, 1, 1], [], []>} : vector<8x72xf32>, vector<72x64xf32>, vector<8x64xf32> -> vector<8x64xf32>
    %c592 = arith.constant 592 : index
    %c0_117 = arith.constant 0 : index
    %375 = vector.load %arg0[%c592, %c0_117] : memref<712x128xf32, #tpu.memory_space<vmem>>, vector<1x64xf32>
    %376 = vector.broadcast %375 : vector<1x64xf32> to vector<8x64xf32>
    %377 = arith.addf %374, %376 : vector<8x64xf32>
    %cst_118 = arith.constant 0.000000e+00 : f32
    %378 = vector.broadcast %cst_118 : f32 to vector<8x64xf32>
    %379 = arith.maximumf %377, %378 : vector<8x64xf32>
    %c600 = arith.constant 600 : index
    %c0_119 = arith.constant 0 : index
    %380 = vector.load %arg0[%c600, %c0_119] : memref<712x128xf32, #tpu.memory_space<vmem>>, vector<64x16xf32>
    %cst_120 = arith.constant dense<0.000000e+00> : vector<8x16xf32>
    %381 = tpu.matmul %379, %380, %cst_120 {dimension_numbers = #tpu.dot_dimension_numbers<[1], [0], [0], [1], [0, 0, 1, 1], [], []>} : vector<8x64xf32>, vector<64x16xf32>, vector<8x16xf32> -> vector<8x16xf32>
    %c664 = arith.constant 664 : index
    %c0_121 = arith.constant 0 : index
    %382 = vector.load %arg0[%c664, %c0_121] : memref<712x128xf32, #tpu.memory_space<vmem>>, vector<1x16xf32>
    %383 = vector.broadcast %382 : vector<1x16xf32> to vector<8x16xf32>
    %384 = arith.addf %381, %383 : vector<8x16xf32>
    %cst_122 = arith.constant 0.000000e+00 : f32
    %385 = vector.broadcast %cst_122 : f32 to vector<8x16xf32>
    %386 = arith.maximumf %384, %385 : vector<8x16xf32>
    %c672 = arith.constant 672 : index
    %c0_123 = arith.constant 0 : index
    %387 = vector.load %arg0[%c672, %c0_123] : memref<712x128xf32, #tpu.memory_space<vmem>>, vector<16x32xf32>
    %cst_124 = arith.constant dense<0.000000e+00> : vector<8x32xf32>
    %388 = tpu.matmul %386, %387, %cst_124 {dimension_numbers = #tpu.dot_dimension_numbers<[1], [0], [0], [1], [0, 0, 1, 1], [], []>} : vector<8x16xf32>, vector<16x32xf32>, vector<8x32xf32> -> vector<8x32xf32>
    %c688 = arith.constant 688 : index
    %c0_125 = arith.constant 0 : index
    %389 = vector.load %arg0[%c688, %c0_125] : memref<712x128xf32, #tpu.memory_space<vmem>>, vector<1x32xf32>
    %390 = vector.broadcast %389 : vector<1x32xf32> to vector<8x32xf32>
    %391 = arith.addf %388, %390 : vector<8x32xf32>
    %cst_126 = arith.constant 0.000000e+00 : f32
    %392 = vector.broadcast %cst_126 : f32 to vector<8x32xf32>
    %393 = arith.maximumf %391, %392 : vector<8x32xf32>
    %c696 = arith.constant 696 : index
    %c0_127 = arith.constant 0 : index
    %394 = vector.load %arg0[%c696, %c0_127] : memref<712x128xf32, #tpu.memory_space<vmem>>, vector<1x32xf32>
    %395 = vector.broadcast %394 : vector<1x32xf32> to vector<8x32xf32>
    %396 = arith.mulf %393, %395 : vector<8x32xf32>
    %cst_128 = arith.constant dense<0.000000e+00> : vector<8xf32>
    %397 = vector.multi_reduction <add>, %396, %cst_128 [1] : vector<8x32xf32> to vector<8xf32>
    %398 = vector.shape_cast %397 : vector<8xf32> to vector<8x1xf32>
    %c704 = arith.constant 704 : index
    %c0_129 = arith.constant 0 : index
    %399 = vector.load %arg0[%c704, %c0_129] : memref<712x128xf32, #tpu.memory_space<vmem>>, vector<1x1xf32>
    %400 = vector.broadcast %399 : vector<1x1xf32> to vector<8x1xf32>
    %401 = arith.addf %398, %400 : vector<8x1xf32>
    %402 = math.absf %401 : vector<8x1xf32>
    %cst_130 = arith.constant 0.000000e+00 : f32
    %403 = vector.broadcast %cst_130 : f32 to vector<8x1xf32>
    %404 = arith.subf %403, %402 : vector<8x1xf32>
    %405 = math.exp %404 : vector<8x1xf32>
    %cst_131 = arith.constant 0.000000e+00 : f32
    %406 = vector.broadcast %cst_131 : f32 to vector<8x1xf32>
    %407 = arith.cmpf oge, %401, %406 : vector<8x1xf32>
    %cst_132 = arith.constant 1.000000e+00 : f32
    %408 = vector.broadcast %cst_132 : f32 to vector<8x1xf32>
    %409 = arith.addf %408, %405 : vector<8x1xf32>
    %cst_133 = arith.constant 1.000000e+00 : f32
    %410 = vector.broadcast %cst_133 : f32 to vector<8x1xf32>
    %411 = arith.divf %410, %409 : vector<8x1xf32>
    %cst_134 = arith.constant 1.000000e+00 : f32
    %412 = vector.broadcast %cst_134 : f32 to vector<8x1xf32>
    %413 = arith.addf %412, %405 : vector<8x1xf32>
    %414 = arith.divf %405, %413 : vector<8x1xf32>
    %415 = arith.select %407, %411, %414 : vector<8x1xi1>, vector<8x1xf32>
    %416 = vector.shape_cast %415 : vector<8x1xf32> to vector<8x1xf32>
    %417 = vector.broadcast %416 : vector<8x1xf32> to vector<8x128xf32>
    %c0_135 = arith.constant 0 : index
    %c0_136 = arith.constant 0 : index
    %418 = vector.load %arg6[%c0_135, %c0_136] : memref<8x128xf32, #tpu.memory_space<vmem>>, vector<8x128xf32>
    tpu.vector_store %arg6[%c0_135, %c0_136], %417 {strides = array<i32>} : memref<8x128xf32, #tpu.memory_space<vmem>>, vector<8x128xf32>,
    return
  }
}

</mosaic_0001>

<llo_original>
// kernel: hcmgnn_forward.1
$region0: #{hcmgnn_forward.1}
  #allocation0 [shape = 'u32[]', space=smem, size = 0x4, offset = 0x4, fixed_abs, tag = 'smem constant byte address 0x4 - core index']
  #allocation1 [shape = 'u32[144,128]{1,0:T(1,128)}', space=vmem, size = 0x12000, scoped, tag = 'internal scratch']
  #allocation2 [shape = 'f32[24,64]{1,0:T(8,128)}', space=vmem, size = 0x3000, scoped, tag = 'scratch operand']
  %s0 = inlined_call_operand.hbm [shape: f32[712,128], index: 0, kind: input, shape index: {}]
  %s1 = inlined_call_operand.vmem [shape: s32[8,16], index: 1, kind: input, shape index: {}]
  %s2 = inlined_call_operand.vmem [shape: f32[6,16], index: 2, kind: input, shape index: {}]
  %s3 = inlined_call_operand.vmem [shape: f32[5,12], index: 3, kind: input, shape index: {}]
  %s4 = inlined_call_operand.hbm [shape: f32[4,8], index: 4, kind: input, shape index: {}]
  %s5 = inlined_call_operand.vmem [shape: s32[8,3], index: 5, kind: input, shape index: {}]
  %s6 = inlined_call_operand.vmem [shape: f32[8,128], index: 6, kind: output, shape index: {}]
  %s7 = sld [smem:[#allocation0]]
  $region42: #{hcmgnn_forward.1} parent=0
    _
  %s9 = ssub.s32 1, %s7
  %s10 = scalar_select 0, %s9, %s7
  $region1: #{hcmgnn_forward.1} parent=0
    #allocation3 [shape = 'u8[364544]{0}', space=vmem, size = 0x59000, scoped, tag = 'input window, operand 0, single buffered']
    #allocation4 [shape = 's32[1]{0}', space=sflag, size = 0x4, scoped, tag = 'scoped memory for hcmgnn_forward.1']
    #allocation5 [shape = 'u8[2048]{0}', space=vmem, size = 0x800, scoped, tag = 'input window, operand 4, single buffered']
    #allocation6 [shape = 's32[1]{0}', space=sflag, size = 0x4, scoped, tag = 'scoped memory for hcmgnn_forward.1']
    %11 = vsyncpa [#allocation4], 0
    %12 = vsyncpa [#allocation6], 0
    // Predicated region
    $region2: #{hcmgnn_forward.1} parent=1 // pred_check
      _
    $region3: #{hcmgnn_forward.1} parent=1 // pred_check_branch
      %14 = sbr.rel (0) target = $region5
    $region4: #{hcmgnn_forward.1} parent=1 // pred_region
      %s16 = ssub.s32 11392, 11392
      %17 = vsyncadd [#allocation4], %s16
      %s18 = sshll.u32 [#allocation3], 4
      %s19 = int_to_ptr.vmem [resolvable:$true] %s18
      %24 = dma.hbm_to_vmem [thread:$0]  %s0, 11392, %s19, [#allocation4], 128, 128, 8
    $region5: #{hcmgnn_forward.1} parent=1 // pred_fallthru
      _
    // Predicated region
    $region6: #{hcmgnn_forward.1} parent=1 // pred_check
      _
    $region7: #{hcmgnn_forward.1} parent=1 // pred_check_branch
      %26 = sbr.rel (0) target = $region9
    $region8: #{hcmgnn_forward.1} parent=1 // pred_region
      _
    $region9: #{hcmgnn_forward.1} parent=1 // pred_fallthru
      _
    // Predicated region
    $region10: #{hcmgnn_forward.1} parent=1 // pred_check
      _
    $region11: #{hcmgnn_forward.1} parent=1 // pred_check_branch
      %28 = sbr.rel (0) target = $region13
    $region12: #{hcmgnn_forward.1} parent=1 // pred_region
      _
    $region13: #{hcmgnn_forward.1} parent=1 // pred_fallthru
      _
    // Predicated region
    $region14: #{hcmgnn_forward.1} parent=1 // pred_check
      _
    $region15: #{hcmgnn_forward.1} parent=1 // pred_check_branch
      %30 = sbr.rel (0) target = $region17
    $region16: #{hcmgnn_forward.1} parent=1 // pred_region
      _
    $region17: #{hcmgnn_forward.1} parent=1 // pred_fallthru
      _
    // Predicated region
    $region18: #{hcmgnn_forward.1} parent=1 // pred_check
      _
    $region19: #{hcmgnn_forward.1} parent=1 // pred_check_branch
      %32 = sbr.rel (0) target = $region21
    $region20: #{hcmgnn_forward.1} parent=1 // pred_region
      %s34 = ssub.s32 64, 64
      %35 = vsyncadd [#allocation6], %s34
      %s37 = sshll.u32 [#allocation5], 4
      %s38 = int_to_ptr.vmem [resolvable:$true] %s37
      %40 = dma.hbm_to_vmem [thread:$0]  %s4, 64, %s38, [#allocation6]
    $region21: #{hcmgnn_forward.1} parent=1 // pred_fallthru
      _
    // Predicated region
    $region22: #{hcmgnn_forward.1} parent=1 // pred_check
      _
    $region23: #{hcmgnn_forward.1} parent=1 // pred_check_branch
      %42 = sbr.rel (0) target = $region25
    $region24: #{hcmgnn_forward.1} parent=1 // pred_region
      _
    $region25: #{hcmgnn_forward.1} parent=1 // pred_fallthru
      _
    // Predicated region
    $region26: #{hcmgnn_forward.1} parent=1 // pred_check
      _
    $region27: #{hcmgnn_forward.1} parent=1 // pred_check_branch
      %44 = sbr.rel (0) target = $region29
    $region28: #{hcmgnn_forward.1} parent=1 // pred_region
      %45 = dma.done [#allocation4], 11392
    $region29: #{hcmgnn_forward.1} parent=1 // pred_fallthru
      _
    // Predicated region
    $region30: #{hcmgnn_forward.1} parent=1 // pred_check
      _
    $region31: #{hcmgnn_forward.1} parent=1 // pred_check_branch
      %47 = sbr.rel (0) target = $region33
    $region32: #{hcmgnn_forward.1} parent=1 // pred_region
      %48 = dma.done [#allocation6], 64
    $region33: #{hcmgnn_forward.1} parent=1 // pred_fallthru
      _
    %v49 = vld [vmem:[%s2] sm:$0x3f]
    %v50 = vld [vmem:[#allocation3] sm:$0xff]
    %v51 = vld [vmem:[#allocation3 + $0x8] sm:$0xff]
    %v52 = vld [vmem:[%s3] sm:$0x1f]
    %v53 = vld [vmem:[#allocation3 + $0x10] sm:$0xff]
    %v54 = vld [vmem:[#allocation3 + $0x18] sm:$0xf]
    %v55 = vld [vmem:[#allocation5] sm:$0xf]
    %v56 = vld [vmem:[#allocation3 + $0x20] sm:$0xff]
    %v57 = vld [vmem:[#allocation3 + $0x28] sm:$0x7]
    %vm58 = vcmask 523264
    %59 = vst.msk [vmem:[#allocation2] sm:$0xff] %vm58, 0.0
    %60 = vst.msk [vmem:[#allocation2 + $0x8] sm:$0xff] %vm58, 0.0
    %61 = vst.msk [vmem:[#allocation2 + $0x10] sm:$0xff] %vm58, 0.0
    %v62 = vlaneseq
    %v63 = vshrl.u32 %v62, 7
    %v64 = vsub.s32 0, %v63
    %v65 = vrot.slane %v57, %v64
    %vm66 = vcmask 130048
    %v68 = vsel %vm66, %v49, 0
    %70 = vmatprep.subr.mxu0 0.0
    %71 = vmatpush1.msra.mxu0 %v50
    %72 = vmatprep.subr.mxu0 0.0
    %73 = vmatpush1.msra.mxu0 %v51
    %74 = vmatprep.subr.mxu0 0.0
    %75 = vmatpush1.msra.mxu0 0.0
    %76 = vmatprep.subr.mxu0 0.0
    %77 = vmatpush1.msra.mxu0 0.0
    %78 = vmatprep.subr.mxu0 0.0
    %79 = vmatpush1.msra.mxu0 0.0
    %80 = vmatprep.subr.mxu0 0.0
    %81 = vmatpush1.msra.mxu0 0.0
    %82 = vmatprep.subr.mxu0 0.0
    %83 = vmatpush1.msra.mxu0 0.0
    %84 = vmatprep.subr.mxu0 0.0
    %85 = vmatpush1.msra.mxu0 0.0
    %86 = vmatprep.subr.mxu0 0.0
    %87 = vmatpush1.msra.mxu0 0.0
    %88 = vmatprep.subr.mxu0 0.0
    %89 = vmatpush1.msra.mxu0 0.0
    %90 = vmatprep.subr.mxu0 0.0
    %91 = vmatpush1.msra.mxu0 0.0
    %92 = vmatprep.subr.mxu0 0.0
    %93 = vmatpush1.msra.mxu0 0.0
    %94 = vmatprep.subr.mxu0 0.0
    %95 = vmatpush1.msra.mxu0 0.0
    %96 = vmatprep.subr.mxu0 0.0
    %97 = vmatpush1.msra.mxu0 0.0
    %98 = vmatprep.subr.mxu0 0.0
    %99 = vmatpush1.msra.mxu0 0.0
    %100 = vmatprep.subr.mxu0 0.0
    %101 = vmatpush1.msra.mxu0 0.0
    %102 = vmatprep.subr.mxu0 0.0
    %103 = vmatpush1.msra.mxu0 0.0
    %104 = vmatprep.subr.mxu0 0.0
    %105 = vmatpush1.msra.mxu0 0.0
    %106 = vmatprep.subr.mxu0 0.0
    %107 = vmatpush1.msra.mxu0 0.0
    %108 = vmatprep.subr.mxu0 0.0
    %109 = vmatpush1.msra.mxu0 0.0
    %110 = vmatprep.subr.mxu0 0.0
    %111 = vmatpush1.msra.mxu0 0.0
    %112 = vmatprep.subr.mxu0 0.0
    %113 = vmatpush1.msra.mxu0 0.0
    %114 = vmatprep.subr.mxu0 0.0
    %115 = vmatpush1.msra.mxu0 0.0
    %116 = vmatprep.subr.mxu0 0.0
    %117 = vmatpush1.msra.mxu0 0.0
    %118 = vmatprep.subr.mxu0 0.0
    %119 = vmatpush1.msra.mxu0 0.0
    %120 = vmatprep.subr.mxu0 0.0
    %121 = vmatpush1.msra.mxu0 0.0
    %122 = vmatprep.subr.mxu0 0.0
    %123 = vmatpush1.msra.mxu0 0.0
    %124 = vmatprep.subr.mxu0 0.0
    %125 = vmatpush1.msra.mxu0 0.0
    %126 = vmatprep.subr.mxu0 0.0
    %127 = vmatpush1.msra.mxu0 0.0
    %128 = vmatprep.subr.mxu0 0.0
    %129 = vmatpush1.msra.mxu0 0.0
    %130 = vmatprep.subr.mxu0 0.0
    %131 = vmatpush1.msra.mxu0 0.0
    %132 = vmatprep.subr.mxu0 0.0
    %133 = vmatpush1.msra.mxu0 0.0
    %134 = vmatprep.mubr.f32.mxu0 0.0
    %135 = vmatmul.mubr.f32.gmra.mrb[0].mxu0 %v68
    %v136 = vpop.f32.mrb[0].mxu0
    %v137 = vadd.f32 %v65, %v136
    %v138 = vpop.f32.mrb[0].mxu0
    %139 = vdwg.mxu0
    %vm140 = vcmask 521216
    %141 = vst.msk [vmem:[#allocation2] sm:$0x3f] %vm140, %v137
    %v142 = vlaneseq
    %v143 = vshrl.u32 %v142, 7
    %v144 = vsub.s32 1, %v143
    %v145 = vrot.slane %v57, %v144
    %vm146 = vcmask 97280
    %v148 = vsel %vm146, %v52, 0
    %vm150 = vcmask 1043456
    %v152 = vsel %vm150, %v54, 0
    %154 = vmatprep.subr.mxu0 0.0
    %155 = vmatpush1.msra.mxu0 %v53
    %156 = vmatprep.subr.mxu0 0.0
    %157 = vmatpush1.msra.mxu0 %v152
    %158 = vmatprep.subr.mxu0 0.0
    %159 = vmatpush1.msra.mxu0 0.0
    %160 = vmatprep.subr.mxu0 0.0
    %161 = vmatpush1.msra.mxu0 0.0
    %162 = vmatprep.subr.mxu0 0.0
    %163 = vmatpush1.msra.mxu0 0.0
    %164 = vmatprep.subr.mxu0 0.0
    %165 = vmatpush1.msra.mxu0 0.0
    %166 = vmatprep.subr.mxu0 0.0
    %167 = vmatpush1.msra.mxu0 0.0
    %168 = vmatprep.subr.mxu0 0.0
    %169 = vmatpush1.msra.mxu0 0.0
    %170 = vmatprep.subr.mxu0 0.0
    %171 = vmatpush1.msra.mxu0 0.0
    %172 = vmatprep.subr.mxu0 0.0
    %173 = vmatpush1.msra.mxu0 0.0
    %174 = vmatprep.subr.mxu0 0.0
    %175 = vmatpush1.msra.mxu0 0.0
    %176 = vmatprep.subr.mxu0 0.0
    %177 = vmatpush1.msra.mxu0 0.0
    %178 = vmatprep.subr.mxu0 0.0
    %179 = vmatpush1.msra.mxu0 0.0
    %180 = vmatprep.subr.mxu0 0.0
    %181 = vmatpush1.msra.mxu0 0.0
    %182 = vmatprep.subr.mxu0 0.0
    %183 = vmatpush1.msra.mxu0 0.0
    %184 = vmatprep.subr.mxu0 0.0
    %185 = vmatpush1.msra.mxu0 0.0
    %186 = vmatprep.subr.mxu0 0.0
    %187 = vmatpush1.msra.mxu0 0.0
    %188 = vmatprep.subr.mxu0 0.0
    %189 = vmatpush1.msra.mxu0 0.0
    %190 = vmatprep.subr.mxu0 0.0
    %191 = vmatpush1.msra.mxu0 0.0
    %192 = vmatprep.subr.mxu0 0.0
    %193 = vmatpush1.msra.mxu0 0.0
    %194 = vmatprep.subr.mxu0 0.0
    %195 = vmatpush1.msra.mxu0 0.0
    %196 = vmatprep.subr.mxu0 0.0
    %197 = vmatpush1.msra.mxu0 0.0
    %198 = vmatprep.subr.mxu0 0.0
    %199 = vmatpush1.msra.mxu0 0.0
    %200 = vmatprep.subr.mxu0 0.0
    %201 = vmatpush1.msra.mxu0 0.0
    %202 = vmatprep.subr.mxu0 0.0
    %203 = vmatpush1.msra.mxu0 0.0
    %204 = vmatprep.subr.mxu0 0.0
    %205 = vmatpush1.msra.mxu0 0.0
    %206 = vmatprep.subr.mxu0 0.0
    %207 = vmatpush1.msra.mxu0 0.0
    %208 = vmatprep.subr.mxu0 0.0
    %209 = vmatpush1.msra.mxu0 0.0
    %210 = vmatprep.subr.mxu0 0.0
    %211 = vmatpush1.msra.mxu0 0.0
    %212 = vmatprep.subr.mxu0 0.0
    %213 = vmatpush1.msra.mxu0 0.0
    %214 = vmatprep.subr.mxu0 0.0
    %215 = vmatpush1.msra.mxu0 0.0
    %216 = vmatprep.subr.mxu0 0.0
    %217 = vmatpush1.msra.mxu0 0.0
    %218 = vmatprep.mubr.f32.mxu0 0.0
    %219 = vmatmul.mubr.f32.gmra.mrb[0].mxu0 %v148
    %v220 = vpop.f32.mrb[0].mxu0
    %v221 = vadd.f32 %v145, %v220
    %v222 = vpop.f32.mrb[0].mxu0
    %223 = vdwg.mxu0
    %vm224 = vcmask 520192
    %225 = vst.msk [vmem:[#allocation2 + $0x8] sm:$0x1f] %vm224, %v221
    %v226 = vlaneseq
    %v227 = vshrl.u32 %v226, 7
    %v228 = vsub.s32 2, %v227
    %v229 = vrot.slane %v57, %v228
    %vm230 = vcmask 64512
    %v232 = vsel %vm230, %v55, 0
    %234 = vmatprep.subr.mxu0 0.0
    %235 = vmatpush1.msra.mxu0 %v56
    %236 = vmatprep.subr.mxu0 0.0
    %237 = vmatpush1.msra.mxu0 0.0
    %238 = vmatprep.subr.mxu0 0.0
    %239 = vmatpush1.msra.mxu0 0.0
    %240 = vmatprep.subr.mxu0 0.0
    %241 = vmatpush1.msra.mxu0 0.0
    %242 = vmatprep.subr.mxu0 0.0
    %243 = vmatpush1.msra.mxu0 0.0
    %244 = vmatprep.subr.mxu0 0.0
    %245 = vmatpush1.msra.mxu0 0.0
    %246 = vmatprep.subr.mxu0 0.0
    %247 = vmatpush1.msra.mxu0 0.0
    %248 = vmatprep.subr.mxu0 0.0
    %249 = vmatpush1.msra.mxu0 0.0
    %250 = vmatprep.subr.mxu0 0.0
    %251 = vmatpush1.msra.mxu0 0.0
    %252 = vmatprep.subr.mxu0 0.0
    %253 = vmatpush1.msra.mxu0 0.0
    %254 = vmatprep.subr.mxu0 0.0
    %255 = vmatpush1.msra.mxu0 0.0
    %256 = vmatprep.subr.mxu0 0.0
    %257 = vmatpush1.msra.mxu0 0.0
    %258 = vmatprep.subr.mxu0 0.0
    %259 = vmatpush1.msra.mxu0 0.0
    %260 = vmatprep.subr.mxu0 0.0
    %261 = vmatpush1.msra.mxu0 0.0
    %262 = vmatprep.subr.mxu0 0.0
    %263 = vmatpush1.msra.mxu0 0.0
    %264 = vmatprep.subr.mxu0 0.0
    %265 = vmatpush1.msra.mxu0 0.0
    %266 = vmatprep.subr.mxu0 0.0
    %267 = vmatpush1.msra.mxu0 0.0
    %268 = vmatprep.subr.mxu0 0.0
    %269 = vmatpush1.msra.mxu0 0.0
    %270 = vmatprep.subr.mxu0 0.0
    %271 = vmatpush1.msra.mxu0 0.0
    %272 = vmatprep.subr.mxu0 0.0
    %273 = vmatpush1.msra.mxu0 0.0
    %274 = vmatprep.subr.mxu0 0.0
    %275 = vmatpush1.msra.mxu0 0.0
    %276 = vmatprep.subr.mxu0 0.0
    %277 = vmatpush1.msra.mxu0 0.0
    %278 = vmatprep.subr.mxu0 0.0
    %279 = vmatpush1.msra.mxu0 0.0
    %280 = vmatprep.subr.mxu0 0.0
    %281 = vmatpush1.msra.mxu0 0.0
    %282 = vmatprep.subr.mxu0 0.0
    %283 = vmatpush1.msra.mxu0 0.0
    %284 = vmatprep.subr.mxu0 0.0
    %285 = vmatpush1.msra.mxu0 0.0
    %286 = vmatprep.subr.mxu0 0.0
    %287 = vmatpush1.msra.mxu0 0.0
    %288 = vmatprep.subr.mxu0 0.0
    %289 = vmatpush1.msra.mxu0 0.0
    %290 = vmatprep.subr.mxu0 0.0
    %291 = vmatpush1.msra.mxu0 0.0
    %292 = vmatprep.subr.mxu0 0.0
    %293 = vmatpush1.msra.mxu0 0.0
    %294 = vmatprep.subr.mxu0 0.0
    %295 = vmatpush1.msra.mxu0 0.0
    %296 = vmatprep.subr.mxu0 0.0
    %297 = vmatpush1.msra.mxu0 0.0
    %298 = vmatprep.mubr.f32.mxu0 0.0
    %299 = vmatmul.mubr.f32.gmra.mrb[0].mxu0 %v232
    %v300 = vpop.f32.mrb[0].mxu0
    %v301 = vadd.f32 %v229, %v300
    %v302 = vpop.f32.mrb[0].mxu0
    %303 = vdwg.mxu0
    %vm304 = vcmask 519168
    %305 = vst.msk [vmem:[#allocation2 + $0x10] sm:$0xf] %vm304, %v301
    %v306 = vld [vmem:[#allocation2] sm:$0xff]
    %v307 = vld [vmem:[#allocation2 + $0x8] sm:$0xff]
    %v308 = vld [vmem:[#allocation2 + $0x10] sm:$0xff]
    %v309 = vld [vmem:[#allocation3 + $0x30] sm:$0xff]
    %v310 = vld [vmem:[#allocation3 + $0x38] sm:$0xff]
    %v311 = vld [vmem:[#allocation3 + $0x40] sm:$0xff]
    %v312 = vld [vmem:[#allocation3 + $0x48] sm:$0xff]
    %v313 = vld [vmem:[#allocation3 + $0x50] sm:$0xff]
    %v314 = vld [vmem:[#allocation3 + $0x58] sm:$0xff]
    %v315 = vld [vmem:[#allocation3 + $0x60] sm:$0xff]
    %v316 = vld [vmem:[#allocation3 + $0x68] sm:$0xff]
    %v318 = vsel %vm58, %v306, 0
    %v321 = vsel %vm58, %v307, 0
    %v324 = vsel %vm58, %v308, 0
    %326 = vmatprep.subr.mxu0 0.0
    %327 = vmatpush1.msra.mxu0 %v309
    %328 = vmatprep.subr.mxu0 0.0
    %329 = vmatpush1.msra.mxu0 %v310
    %330 = vmatprep.subr.mxu0 0.0
    %331 = vmatpush1.msra.mxu0 %v311
    %332 = vmatprep.subr.mxu0 0.0
    %333 = vmatpush1.msra.mxu0 %v312
    %334 = vmatprep.subr.mxu0 0.0
    %335 = vmatpush1.msra.mxu0 %v313
    %336 = vmatprep.subr.mxu0 0.0
    %337 = vmatpush1.msra.mxu0 %v314
    %338 = vmatprep.subr.mxu0 0.0
    %339 = vmatpush1.msra.mxu0 %v315
    %340 = vmatprep.subr.mxu0 0.0
    %341 = vmatpush1.msra.mxu0 %v316
    %342 = vmatprep.subr.mxu0 0.0
    %343 = vmatpush1.msra.mxu0 0.0
    %344 = vmatprep.subr.mxu0 0.0
    %345 = vmatpush1.msra.mxu0 0.0
    %346 = vmatprep.subr.mxu0 0.0
    %347 = vmatpush1.msra.mxu0 0.0
    %348 = vmatprep.subr.mxu0 0.0
    %349 = vmatpush1.msra.mxu0 0.0
    %350 = vmatprep.subr.mxu0 0.0
    %351 = vmatpush1.msra.mxu0 0.0
    %352 = vmatprep.subr.mxu0 0.0
    %353 = vmatpush1.msra.mxu0 0.0
    %354 = vmatprep.subr.mxu0 0.0
    %355 = vmatpush1.msra.mxu0 0.0
    %356 = vmatprep.subr.mxu0 0.0
    %357 = vmatpush1.msra.mxu0 0.0
    %358 = vmatprep.subr.mxu0 0.0
    %359 = vmatpush1.msra.mxu0 0.0
    %360 = vmatprep.subr.mxu0 0.0
    %361 = vmatpush1.msra.mxu0 0.0
    %362 = vmatprep.subr.mxu0 0.0
    %363 = vmatpush1.msra.mxu0 0.0
    %364 = vmatprep.subr.mxu0 0.0
    %365 = vmatpush1.msra.mxu0 0.0
    %366 = vmatprep.subr.mxu0 0.0
    %367 = vmatpush1.msra.mxu0 0.0
    %368 = vmatprep.subr.mxu0 0.0
    %369 = vmatpush1.msra.mxu0 0.0
    %370 = vmatprep.subr.mxu0 0.0
    %371 = vmatpush1.msra.mxu0 0.0
    %372 = vmatprep.subr.mxu0 0.0
    %373 = vmatpush1.msra.mxu0 0.0
    %374 = vmatprep.subr.mxu0 0.0
    %375 = vmatpush1.msra.mxu0 0.0
    %376 = vmatprep.subr.mxu0 0.0
    %377 = vmatpush1.msra.mxu0 0.0
    %378 = vmatprep.subr.mxu0 0.0
    %379 = vmatpush1.msra.mxu0 0.0
    %380 = vmatprep.subr.mxu0 0.0
    %381 = vmatpush1.msra.mxu0 0.0
    %382 = vmatprep.subr.mxu0 0.0
    %383 = vmatpush1.msra.mxu0 0.0
    %384 = vmatprep.subr.mxu0 0.0
    %385 = vmatpush1.msra.mxu0 0.0
    %386 = vmatprep.subr.mxu0 0.0
    %387 = vmatpush1.msra.mxu0 0.0
    %388 = vmatprep.subr.mxu0 0.0
    %389 = vmatpush1.msra.mxu0 0.0
    %390 = vmatprep.mubr.f32.mxu0 0.0
    %391 = vmatmul.mubr.f32.gmra.mrb[0].mxu0 %v318
    %v392 = vpop.f32.mrb[0].mxu0
    %v393 = vadd.f32 0.0, %v392
    %v394 = vpop.f32.mrb[0].mxu0
    %395 = vmatprep.mubr.f32.mxu0 0.0
    %396 = vmatmul.mubr.f32.gmra.mrb[0].mxu0 %v321
    %v397 = vpop.f32.mrb[0].mxu0
    %v398 = vadd.f32 0.0, %v397
    %v399 = vpop.f32.mrb[0].mxu0
    %400 = vmatprep.mubr.f32.mxu0 0.0
    %401 = vmatmul.mubr.f32.gmra.mrb[0].mxu0 %v324
    %v402 = vpop.f32.mrb[0].mxu0
    %v403 = vadd.f32 0.0, %v402
    %v404 = vpop.f32.mrb[0].mxu0
    %405 = vdwg.mxu0
    %v406 = vld [vmem:[#allocation3 + $0x70] sm:$0x3f]
    %v407 = vld [vmem:[%s1] sm:$0xff]
    %v408 = vld [vmem:[#allocation3 + $0xa0] sm:$0xff]
    %v409 = vld [vmem:[#allocation3 + $0xa8] sm:$0xff]
    %v410 = vld [vmem:[#allocation3 + $0xb0] sm:$0xff]
    %v411 = vld [vmem:[#allocation3 + $0xb8] sm:$0xff]
    %v412 = vld [vmem:[#allocation3 + $0xc0] sm:$0xf]
    %vm413 = vcmask 195584
    %v415 = vsel %vm413, %v408, 0
    %v418 = vsel %vm413, %v409, 0
    %v421 = vsel %vm413, %v410, 0
    %v424 = vsel %vm413, %v411, 0
    %v427 = vsel %vm413, %v412, 0
    %429 = vmatprep.subr.mxu0 0.0
    %430 = vmatpush1.msra.mxu0 %v306
    %431 = vmatprep.subr.mxu0 0.0
    %432 = vmatpush1.msra.mxu0 %v307
    %433 = vmatprep.subr.mxu0 0.0
    %434 = vmatpush1.msra.mxu0 %v308
    %435 = vmatprep.subr.mxu0 0.0
    %436 = vmatpush1.msra.mxu0 0.0
    %437 = vmatprep.subr.mxu0 0.0
    %438 = vmatpush1.msra.mxu0 0.0
    %439 = vmatprep.subr.mxu0 0.0
    %440 = vmatpush1.msra.mxu0 0.0
    %441 = vmatprep.subr.mxu0 0.0
    %442 = vmatpush1.msra.mxu0 0.0
    %443 = vmatprep.subr.mxu0 0.0
    %444 = vmatpush1.msra.mxu0 0.0
    %445 = vmatprep.subr.mxu0 0.0
    %446 = vmatpush1.msra.mxu0 0.0
    %447 = vmatprep.subr.mxu0 0.0
    %448 = vmatpush1.msra.mxu0 0.0
    %449 = vmatprep.subr.mxu0 0.0
    %450 = vmatpush1.msra.mxu0 0.0
    %451 = vmatprep.subr.mxu0 0.0
    %452 = vmatpush1.msra.mxu0 0.0
    %453 = vmatprep.subr.mxu0 0.0
    %454 = vmatpush1.msra.mxu0 0.0
    %455 = vmatprep.subr.mxu0 0.0
    %456 = vmatpush1.msra.mxu0 0.0
    %457 = vmatprep.subr.mxu0 0.0
    %458 = vmatpush1.msra.mxu0 0.0
    %459 = vmatprep.subr.mxu0 0.0
    %460 = vmatpush1.msra.mxu0 0.0
    %461 = vmatprep.subr.mxu0 0.0
    %462 = vmatpush1.msra.mxu0 0.0
    %463 = vmatprep.subr.mxu0 0.0
    %464 = vmatpush1.msra.mxu0 0.0
    %465 = vmatprep.subr.mxu0 0.0
    %466 = vmatpush1.msra.mxu0 0.0
    %467 = vmatprep.subr.mxu0 0.0
    %468 = vmatpush1.msra.mxu0 0.0
    %469 = vmatprep.subr.mxu0 0.0
    %470 = vmatpush1.msra.mxu0 0.0
    %471 = vmatprep.subr.mxu0 0.0
    %472 = vmatpush1.msra.mxu0 0.0
    %473 = vmatprep.subr.mxu0 0.0
    %474 = vmatpush1.msra.mxu0 0.0
    %475 = vmatprep.subr.mxu0 0.0
    %476 = vmatpush1.msra.mxu0 0.0
    %477 = vmatprep.subr.mxu0 0.0
    %478 = vmatpush1.msra.mxu0 0.0
    %479 = vmatprep.subr.mxu0 0.0
    %480 = vmatpush1.msra.mxu0 0.0
    %481 = vmatprep.subr.mxu0 0.0
    %482 = vmatpush1.msra.mxu0 0.0
    %483 = vmatprep.subr.mxu0 0.0
    %484 = vmatpush1.msra.mxu0 0.0
    %485 = vmatprep.subr.mxu0 0.0
    %486 = vmatpush1.msra.mxu0 0.0
    %487 = vmatprep.subr.mxu0 0.0
    %488 = vmatpush1.msra.mxu0 0.0
    %489 = vmatprep.subr.mxu0 0.0
    %490 = vmatpush1.msra.mxu0 0.0
    %491 = vmatprep.subr.mxu0 0.0
    %492 = vmatpush1.msra.mxu0 0.0
    %493 = vmatprep.mubr.f32.mxu0 0.0
    %494 = vmatmul.mubr.f32.gmra.mrb[0].mxu0 %v415
    %v495 = vpop.f32.mrb[0].mxu0
    %v496 = vadd.f32 0.0, %v495
    %v497 = vpop.f32.mrb[0].mxu0
    %498 = vmatprep.mubr.f32.mxu0 0.0
    %499 = vmatmul.mubr.f32.gmra.mrb[0].mxu0 %v418
    %v500 = vpop.f32.mrb[0].mxu0
    %v501 = vadd.f32 0.0, %v500
    %v502 = vpop.f32.mrb[0].mxu0
    %503 = vmatprep.mubr.f32.mxu0 0.0
    %504 = vmatmul.mubr.f32.gmra.mrb[0].mxu0 %v421
    %v505 = vpop.f32.mrb[0].mxu0
    %v506 = vadd.f32 0.0, %v505
    %v507 = vpop.f32.mrb[0].mxu0
    %508 = vmatprep.mubr.f32.mxu0 0.0
    %509 = vmatmul.mubr.f32.gmra.mrb[0].mxu0 %v424
    %v510 = vpop.f32.mrb[0].mxu0
    %v511 = vadd.f32 0.0, %v510
    %v512 = vpop.f32.mrb[0].mxu0
    %513 = vmatprep.mubr.f32.mxu0 0.0
    %514 = vmatmul.mubr.f32.gmra.mrb[0].mxu0 %v427
    %v515 = vpop.f32.mrb[0].mxu0
    %v516 = vadd.f32 0.0, %v515
    %v517 = vpop.f32.mrb[0].mxu0
    %518 = vdwg.mxu0
    %v519 = vld [vmem:[#allocation3 + $0x78] sm:$0xff]
    %v520 = vld [vmem:[#allocation3 + $0x80] sm:$0xff]
    %v521 = vld [vmem:[#allocation3 + $0x88] sm:$0xff]
    %v522 = vld [vmem:[#allocation3 + $0x90] sm:$0xff]
    %v523 = vld [vmem:[#allocation3 + $0x98] sm:$0xf]
    %v524 = vmul.f32 %v496, %v519
    %v525 = vmul.f32 %v501, %v520
    %v526 = vmul.f32 %v506, %v521
    %v527 = vmul.f32 %v511, %v522
    %v528 = vmul.f32 %v516, %v523
    %534 = vrot.lane.b32.xlu0 %v524, 96
    %v535 = vpop.permute.xlu0 %534
    %536 = vrot.lane.b32.xlu0 %v525, 96
    %v537 = vpop.permute.xlu0 %536
    %538 = vrot.lane.b32.xlu0 %v526, 96
    %v539 = vpop.permute.xlu0 %538
    %540 = vrot.lane.b32.xlu0 %v527, 96
    %v541 = vpop.permute.xlu0 %540
    %542 = vrot.lane.b32.xlu0 %v528, 96
    %v543 = vpop.permute.xlu0 %542
    %v549 = vadd.f32 %v524, %v535
    %v550 = vadd.f32 %v525, %v537
    %v551 = vadd.f32 %v526, %v539
    %v552 = vadd.f32 %v527, %v541
    %v553 = vadd.f32 %v528, %v543
    %v554 = vld [vmem:[#allocation3 + $0xc8] sm:$0xff]
    %v555 = vld [vmem:[#allocation3 + $0xd0] sm:$0xf]
    %vm556 = vcmask 293888
    %v558 = vsel %vm556, %v554, 0
    %v561 = vsel %vm556, %v555, 0
    %v564 = vsel %vm150, %v553, 0
    %566 = vmatprep.subr.mxu0 0.0
    %567 = vmatpush1.msra.mxu0 %v549
    %568 = vmatprep.subr.mxu0 0.0
    %569 = vmatpush1.msra.mxu0 %v550
    %570 = vmatprep.subr.mxu0 0.0
    %571 = vmatpush1.msra.mxu0 %v551
    %572 = vmatprep.subr.mxu0 0.0
    %573 = vmatpush1.msra.mxu0 %v552
    %574 = vmatprep.subr.mxu0 0.0
    %575 = vmatpush1.msra.mxu0 %v564
    %576 = vmatprep.subr.mxu0 0.0
    %577 = vmatpush1.msra.mxu0 0.0
    %578 = vmatprep.subr.mxu0 0.0
    %579 = vmatpush1.msra.mxu0 0.0
    %580 = vmatprep.subr.mxu0 0.0
    %581 = vmatpush1.msra.mxu0 0.0
    %582 = vmatprep.subr.mxu0 0.0
    %583 = vmatpush1.msra.mxu0 0.0
    %584 = vmatprep.subr.mxu0 0.0
    %585 = vmatpush1.msra.mxu0 0.0
    %586 = vmatprep.subr.mxu0 0.0
    %587 = vmatpush1.msra.mxu0 0.0
    %588 = vmatprep.subr.mxu0 0.0
    %589 = vmatpush1.msra.mxu0 0.0
    %590 = vmatprep.subr.mxu0 0.0
    %591 = vmatpush1.msra.mxu0 0.0
    %592 = vmatprep.subr.mxu0 0.0
    %593 = vmatpush1.msra.mxu0 0.0
    %594 = vmatprep.subr.mxu0 0.0
    %595 = vmatpush1.msra.mxu0 0.0
    %596 = vmatprep.subr.mxu0 0.0
    %597 = vmatpush1.msra.mxu0 0.0
    %598 = vmatprep.subr.mxu0 0.0
    %599 = vmatpush1.msra.mxu0 0.0
    %600 = vmatprep.subr.mxu0 0.0
    %601 = vmatpush1.msra.mxu0 0.0
    %602 = vmatprep.subr.mxu0 0.0
    %603 = vmatpush1.msra.mxu0 0.0
    %604 = vmatprep.subr.mxu0 0.0
    %605 = vmatpush1.msra.mxu0 0.0
    %606 = vmatprep.subr.mxu0 0.0
    %607 = vmatpush1.msra.mxu0 0.0
    %608 = vmatprep.subr.mxu0 0.0
    %609 = vmatpush1.msra.mxu0 0.0
    %610 = vmatprep.subr.mxu0 0.0
    %611 = vmatpush1.msra.mxu0 0.0
    %612 = vmatprep.subr.mxu0 0.0
    %613 = vmatpush1.msra.mxu0 0.0
    %614 = vmatprep.subr.mxu0 0.0
    %615 = vmatpush1.msra.mxu0 0.0
    %616 = vmatprep.subr.mxu0 0.0
    %617 = vmatpush1.msra.mxu0 0.0
    %618 = vmatprep.subr.mxu0 0.0
    %619 = vmatpush1.msra.mxu0 0.0
    %620 = vmatprep.subr.mxu0 0.0
    %621 = vmatpush1.msra.mxu0 0.0
    %622 = vmatprep.subr.mxu0 0.0
    %623 = vmatpush1.msra.mxu0 0.0
    %624 = vmatprep.subr.mxu0 0.0
    %625 = vmatpush1.msra.mxu0 0.0
    %626 = vmatprep.subr.mxu0 0.0
    %627 = vmatpush1.msra.mxu0 0.0
    %628 = vmatprep.subr.mxu0 0.0
    %629 = vmatpush1.msra.mxu0 0.0
    %630 = vmatprep.mubr.f32.mxu0 0.0
    %631 = vmatmul.mubr.f32.gmra.mrb[0].mxu0 %v558
    %v632 = vpop.f32.mrb[0].mxu0
    %v633 = vadd.f32 0.0, %v632
    %v634 = vpop.f32.mrb[0].mxu0
    %635 = vmatprep.mubr.f32.mxu0 0.0
    %636 = vmatmul.mubr.f32.gmra.mrb[0].mxu0 %v561
    %v637 = vpop.f32.mrb[0].mxu0
    %v638 = vadd.f32 0.0, %v637
    %v639 = vpop.f32.mrb[0].mxu0
    %640 = vdwg.mxu0
    %vm641 = vcmask 261120
    %v643 = vsel %vm641, %v406, 0
    %v646 = vsel %vm641, %v633, 0
    %v649 = vsel %vm641, %v638, 0
    %651 = vmatprep.subr.mxu0 0.0
    %652 = vmatpush1.xpose.msra.mxu0 %v646
    %653 = vmatprep.subr.mxu0 0.0
    %654 = vmatpush1.xpose.msra.mxu0 %v649
    %655 = vmatprep.subr.mxu0 0.0
    %656 = vmatpush1.xpose.msra.mxu0 0.0
    %657 = vmatprep.subr.mxu0 0.0
    %658 = vmatpush1.xpose.msra.mxu0 0.0
    %659 = vmatprep.subr.mxu0 0.0
    %660 = vmatpush1.xpose.msra.mxu0 0.0
    %661 = vmatprep.subr.mxu0 0.0
    %662 = vmatpush1.xpose.msra.mxu0 0.0
    %663 = vmatprep.subr.mxu0 0.0
    %664 = vmatpush1.xpose.msra.mxu0 0.0
    %665 = vmatprep.subr.mxu0 0.0
    %666 = vmatpush1.xpose.msra.mxu0 0.0
    %667 = vmatprep.subr.mxu0 0.0
    %668 = vmatpush1.xpose.msra.mxu0 0.0
    %669 = vmatprep.subr.mxu0 0.0
    %670 = vmatpush1.xpose.msra.mxu0 0.0
    %671 = vmatprep.subr.mxu0 0.0
    %672 = vmatpush1.xpose.msra.mxu0 0.0
    %673 = vmatprep.subr.mxu0 0.0
    %674 = vmatpush1.xpose.msra.mxu0 0.0
    %675 = vmatprep.subr.mxu0 0.0
    %676 = vmatpush1.xpose.msra.mxu0 0.0
    %677 = vmatprep.subr.mxu0 0.0
    %678 = vmatpush1.xpose.msra.mxu0 0.0
    %679 = vmatprep.subr.mxu0 0.0
    %680 = vmatpush1.xpose.msra.mxu0 0.0
    %681 = vmatprep.subr.mxu0 0.0
    %682 = vmatpush1.xpose.msra.mxu0 0.0
    %683 = vmatprep.subr.mxu0 0.0
    %684 = vmatpush1.xpose.msra.mxu0 0.0
    %685 = vmatprep.subr.mxu0 0.0
    %686 = vmatpush1.xpose.msra.mxu0 0.0
    %687 = vmatprep.subr.mxu0 0.0
    %688 = vmatpush1.xpose.msra.mxu0 0.0
    %689 = vmatprep.subr.mxu0 0.0
    %690 = vmatpush1.xpose.msra.mxu0 0.0
    %691 = vmatprep.subr.mxu0 0.0
    %692 = vmatpush1.xpose.msra.mxu0 0.0
    %693 = vmatprep.subr.mxu0 0.0
    %694 = vmatpush1.xpose.msra.mxu0 0.0
    %695 = vmatprep.subr.mxu0 0.0
    %696 = vmatpush1.xpose.msra.mxu0 0.0
    %697 = vmatprep.subr.mxu0 0.0
    %698 = vmatpush1.xpose.msra.mxu0 0.0
    %699 = vmatprep.subr.mxu0 0.0
    %700 = vmatpush1.xpose.msra.mxu0 0.0
    %701 = vmatprep.subr.mxu0 0.0
    %702 = vmatpush1.xpose.msra.mxu0 0.0
    %703 = vmatprep.subr.mxu0 0.0
    %704 = vmatpush1.xpose.msra.mxu0 0.0
    %705 = vmatprep.subr.mxu0 0.0
    %706 = vmatpush1.xpose.msra.mxu0 0.0
    %707 = vmatprep.subr.mxu0 0.0
    %708 = vmatpush1.xpose.msra.mxu0 0.0
    %709 = vmatprep.subr.mxu0 0.0
    %710 = vmatpush1.xpose.msra.mxu0 0.0
    %711 = vmatprep.subr.mxu0 0.0
    %712 = vmatpush1.xpose.msra.mxu0 0.0
    %713 = vmatprep.subr.mxu0 0.0
    %714 = vmatpush1.xpose.msra.mxu0 0.0
    %715 = vmatprep.mubr.f32.mxu0 0.0
    %716 = vmatmul.mubr.f32.gmra.mrb[0].mxu0 %v643
    %v717 = vpop.f32.mrb[0].mxu0
    %v718 = vadd.f32 0.0, %v717
    %v719 = vpop.f32.mrb[0].mxu0
    %720 = vdwg.mxu0
    %v721 = vlaneseq
    %v722 = vshrl.u32 %v721, 7
    %v723 = vadd.s32 %v722, 8
    %v724 = vadd.s32 %v722, 16
    %v725 = vlaneseq
    %v726 = vshrl.u32 %v725, 7
    %v727 = vsub.s32 0, %v726
    %v728 = vrot.slane %v407, %v727
    %vm729 = vcmp.eq.s32.totalorder %v722, %v728
    %vm730 = vcmp.eq.s32.totalorder %v723, %v728
    %vm731 = vcmp.eq.s32.totalorder %v724, %v728
    %v732 = vsel %vm729, 0.0, -1e+30
    %v733 = vsel %vm730, 0.0, -1e+30
    %v734 = vsel %vm731, 0.0, -1e+30
    %736 = vset.pattern.permute.xlu0 0
    %737 = vperm.xlu0 %736, %v393
    %v738 = vpop.permute.xlu0 %737
    %741 = vset.pattern.permute.xlu0 0
    %742 = vperm.xlu0 %741, %v398
    %v743 = vpop.permute.xlu0 %742
    %746 = vset.pattern.permute.xlu0 0
    %747 = vperm.xlu0 %746, %v403
    %v748 = vpop.permute.xlu0 %747
    %v750 = vlaneseq
    %v751 = vshrl.u32 %v750, 7
    %v752 = vsub.s32 0, %v751
    %v753 = vrot.slane %v718, %v752
    %v754 = vadd.f32 %v738, %v753
    %v755 = vadd.f32 %v743, %v753
    %v756 = vadd.f32 %v748, %v753
    %vm757 = vcmp.gt.f32.partialorder %v754, 0.0
    %vm758 = vcmp.gt.f32.partialorder %v755, 0.0
    %vm759 = vcmp.gt.f32.partialorder %v756, 0.0
    %v760 = vmul.f32 %v754, 0.01
    %v761 = vmul.f32 %v755, 0.01
    %v762 = vmul.f32 %v756, 0.01
    %v763 = vsel %vm757, %v754, %v760
    %v764 = vsel %vm758, %v755, %v761
    %v765 = vsel %vm759, %v756, %v762
    %v766 = vadd.f32 %v763, %v732
    %v767 = vadd.f32 %v764, %v733
    %v768 = vadd.f32 %v765, %v734
    %769 = vset.pattern.permute.xlu0 1
    %770 = vperm.xlu0 %769, %v393
    %v771 = vpop.permute.xlu0 %770
    %773 = vset.pattern.permute.xlu0 1
    %774 = vperm.xlu0 %773, %v398
    %v775 = vpop.permute.xlu0 %774
    %777 = vset.pattern.permute.xlu0 1
    %778 = vperm.xlu0 %777, %v403
    %v779 = vpop.permute.xlu0 %778
    %v781 = vlaneseq
    %v782 = vshrl.u32 %v781, 7
    %v783 = vsub.s32 1, %v782
    %v784 = vrot.slane %v718, %v783
    %v785 = vadd.f32 %v771, %v784
    %v786 = vadd.f32 %v775, %v784
    %v787 = vadd.f32 %v779, %v784
    %vm788 = vcmp.gt.f32.partialorder %v785, 0.0
    %vm789 = vcmp.gt.f32.partialorder %v786, 0.0
    %vm790 = vcmp.gt.f32.partialorder %v787, 0.0
    %v791 = vmul.f32 %v785, 0.01
    %v792 = vmul.f32 %v786, 0.01
    %v793 = vmul.f32 %v787, 0.01
    %v794 = vsel %vm788, %v785, %v791
    %v795 = vsel %vm789, %v786, %v792
    %v796 = vsel %vm790, %v787, %v793
    %v797 = vadd.f32 %v794, %v732
    %v798 = vadd.f32 %v795, %v733
    %v799 = vadd.f32 %v796, %v734
    %v800 = vlaneseq
    %v801 = vshrl.u32 %v800, 7
    %v802 = vsub.s32 1, %v801
    %v803 = vrot.slane %v407, %v802
    %vm804 = vcmp.eq.s32.totalorder %v722, %v803
    %vm805 = vcmp.eq.s32.totalorder %v723, %v803
    %vm806 = vcmp.eq.s32.totalorder %v724, %v803
    %v807 = vsel %vm804, 0.0, -1e+30
    %v808 = vsel %vm805, 0.0, -1e+30
    %v809 = vsel %vm806, 0.0, -1e+30
    %810 = vset.pattern.permute.xlu0 2
    %811 = vperm.xlu0 %810, %v393
    %v812 = vpop.permute.xlu0 %811
    %814 = vset.pattern.permute.xlu0 2
    %815 = vperm.xlu0 %814, %v398
    %v816 = vpop.permute.xlu0 %815
    %818 = vset.pattern.permute.xlu0 2
    %819 = vperm.xlu0 %818, %v403
    %v820 = vpop.permute.xlu0 %819
    %v822 = vlaneseq
    %v823 = vshrl.u32 %v822, 7
    %v824 = vsub.s32 2, %v823
    %v825 = vrot.slane %v718, %v824
    %v826 = vadd.f32 %v812, %v825
    %v827 = vadd.f32 %v816, %v825
    %v828 = vadd.f32 %v820, %v825
    %vm829 = vcmp.gt.f32.partialorder %v826, 0.0
    %vm830 = vcmp.gt.f32.partialorder %v827, 0.0
    %vm831 = vcmp.gt.f32.partialorder %v828, 0.0
    %v832 = vmul.f32 %v826, 0.01
    %v833 = vmul.f32 %v827, 0.01
    %v834 = vmul.f32 %v828, 0.01
    %v835 = vsel %vm829, %v826, %v832
    %v836 = vsel %vm830, %v827, %v833
    %v837 = vsel %vm831, %v828, %v834
    %v838 = vadd.f32 %v835, %v807
    %v839 = vadd.f32 %v836, %v808
    %v840 = vadd.f32 %v837, %v809
    %841 = vset.pattern.permute.xlu0 3
    %842 = vperm.xlu0 %841, %v393
    %v843 = vpop.permute.xlu0 %842
    %845 = vset.pattern.permute.xlu0 3
    %846 = vperm.xlu0 %845, %v398
    %v847 = vpop.permute.xlu0 %846
    %849 = vset.pattern.permute.xlu0 3
    %850 = vperm.xlu0 %849, %v403
    %v851 = vpop.permute.xlu0 %850
    %v853 = vlaneseq
    %v854 = vshrl.u32 %v853, 7
    %v855 = vsub.s32 3, %v854
    %v856 = vrot.slane %v718, %v855
    %v857 = vadd.f32 %v843, %v856
    %v858 = vadd.f32 %v847, %v856
    %v859 = vadd.f32 %v851, %v856
    %vm860 = vcmp.gt.f32.partialorder %v857, 0.0
    %vm861 = vcmp.gt.f32.partialorder %v858, 0.0
    %vm862 = vcmp.gt.f32.partialorder %v859, 0.0
    %v863 = vmul.f32 %v857, 0.01
    %v864 = vmul.f32 %v858, 0.01
    %v865 = vmul.f32 %v859, 0.01
    %v866 = vsel %vm860, %v857, %v863
    %v867 = vsel %vm861, %v858, %v864
    %v868 = vsel %vm862, %v859, %v865
    %v869 = vadd.f32 %v866, %v807
    %v870 = vadd.f32 %v867, %v808
    %v871 = vadd.f32 %v868, %v809
    %v872 = vlaneseq
    %v873 = vshrl.u32 %v872, 7
    %v874 = vsub.s32 2, %v873
    %v875 = vrot.slane %v407, %v874
    %vm876 = vcmp.eq.s32.totalorder %v722, %v875
    %vm877 = vcmp.eq.s32.totalorder %v723, %v875
    %vm878 = vcmp.eq.s32.totalorder %v724, %v875
    %v879 = vsel %vm876, 0.0, -1e+30
    %v880 = vsel %vm877, 0.0, -1e+30
    %v881 = vsel %vm878, 0.0, -1e+30
    %882 = vset.pattern.permute.xlu0 4
    %883 = vperm.xlu0 %882, %v393
    %v884 = vpop.permute.xlu0 %883
    %886 = vset.pattern.permute.xlu0 4
    %887 = vperm.xlu0 %886, %v398
    %v888 = vpop.permute.xlu0 %887
    %890 = vset.pattern.permute.xlu0 4
    %891 = vperm.xlu0 %890, %v403
    %v892 = vpop.permute.xlu0 %891
    %v894 = vlaneseq
    %v895 = vshrl.u32 %v894, 7
    %v896 = vsub.s32 4, %v895
    %v897 = vrot.slane %v718, %v896
    %v898 = vadd.f32 %v884, %v897
    %v899 = vadd.f32 %v888, %v897
    %v900 = vadd.f32 %v892, %v897
    %vm901 = vcmp.gt.f32.partialorder %v898, 0.0
    %vm902 = vcmp.gt.f32.partialorder %v899, 0.0
    %vm903 = vcmp.gt.f32.partialorder %v900, 0.0
    %v904 = vmul.f32 %v898, 0.01
    %v905 = vmul.f32 %v899, 0.01
    %v906 = vmul.f32 %v900, 0.01
    %v907 = vsel %vm901, %v898, %v904
    %v908 = vsel %vm902, %v899, %v905
    %v909 = vsel %vm903, %v900, %v906
    %v910 = vadd.f32 %v907, %v879
    %v911 = vadd.f32 %v908, %v880
    %v912 = vadd.f32 %v909, %v881
    %913 = vset.pattern.permute.xlu0 5
    %914 = vperm.xlu0 %913, %v393
    %v915 = vpop.permute.xlu0 %914
    %917 = vset.pattern.permute.xlu0 5
    %918 = vperm.xlu0 %917, %v398
    %v919 = vpop.permute.xlu0 %918
    %921 = vset.pattern.permute.xlu0 5
    %922 = vperm.xlu0 %921, %v403
    %v923 = vpop.permute.xlu0 %922
    %v925 = vlaneseq
    %v926 = vshrl.u32 %v925, 7
    %v927 = vsub.s32 5, %v926
    %v928 = vrot.slane %v718, %v927
    %v929 = vadd.f32 %v915, %v928
    %v930 = vadd.f32 %v919, %v928
    %v931 = vadd.f32 %v923, %v928
    %vm932 = vcmp.gt.f32.partialorder %v929, 0.0
    %vm933 = vcmp.gt.f32.partialorder %v930, 0.0
    %vm934 = vcmp.gt.f32.partialorder %v931, 0.0
    %v935 = vmul.f32 %v929, 0.01
    %v936 = vmul.f32 %v930, 0.01
    %v937 = vmul.f32 %v931, 0.01
    %v938 = vsel %vm932, %v929, %v935
    %v939 = vsel %vm933, %v930, %v936
    %v940 = vsel %vm934, %v931, %v937
    %v941 = vadd.f32 %v938, %v879
    %v942 = vadd.f32 %v939, %v880
    %v943 = vadd.f32 %v940, %v881
    %v944 = vsel %vm146, %v766, -inf
    %945 = vmax.xlane.f32.xlu0 %v944
    %v946 = vpop.xlane.xlu0 %945
    %v947 = vsel %vm146, %v767, -inf
    %948 = vmax.xlane.f32.xlu0 %v947
    %v949 = vpop.xlane.xlu0 %948
    %v950 = vsel %vm146, %v768, -inf
    %951 = vmax.xlane.f32.xlu0 %v950
    %v952 = vpop.xlane.xlu0 %951
    %v953 = vsel %vm146, %v797, -inf
    %954 = vmax.xlane.f32.xlu0 %v953
    %v955 = vpop.xlane.xlu0 %954
    %v956 = vsel %vm146, %v798, -inf
    %957 = vmax.xlane.f32.xlu0 %v956
    %v958 = vpop.xlane.xlu0 %957
    %v959 = vsel %vm146, %v799, -inf
    %960 = vmax.xlane.f32.xlu0 %v959
    %v961 = vpop.xlane.xlu0 %960
    %v962 = vsel %vm146, %v838, -inf
    %963 = vmax.xlane.f32.xlu0 %v962
    %v964 = vpop.xlane.xlu0 %963
    %v965 = vsel %vm146, %v839, -inf
    %966 = vmax.xlane.f32.xlu0 %v965
    %v967 = vpop.xlane.xlu0 %966
    %v968 = vsel %vm146, %v840, -inf
    %969 = vmax.xlane.f32.xlu0 %v968
    %v970 = vpop.xlane.xlu0 %969
    %v971 = vsel %vm146, %v869, -inf
    %972 = vmax.xlane.f32.xlu0 %v971
    %v973 = vpop.xlane.xlu0 %972
    %v974 = vsel %vm146, %v870, -inf
    %975 = vmax.xlane.f32.xlu0 %v974
    %v976 = vpop.xlane.xlu0 %975
    %v977 = vsel %vm146, %v871, -inf
    %978 = vmax.xlane.f32.xlu0 %v977
    %v979 = vpop.xlane.xlu0 %978
    %v980 = vsel %vm146, %v910, -inf
    %981 = vmax.xlane.f32.xlu0 %v980
    %v982 = vpop.xlane.xlu0 %981
    %v983 = vsel %vm146, %v911, -inf
    %984 = vmax.xlane.f32.xlu0 %v983
    %v985 = vpop.xlane.xlu0 %984
    %v986 = vsel %vm146, %v912, -inf
    %987 = vmax.xlane.f32.xlu0 %v986
    %v988 = vpop.xlane.xlu0 %987
    %v989 = vsel %vm146, %v941, -inf
    %990 = vmax.xlane.f32.xlu0 %v989
    %v991 = vpop.xlane.xlu0 %990
    %v992 = vsel %vm146, %v942, -inf
    %993 = vmax.xlane.f32.xlu0 %v992
    %v994 = vpop.xlane.xlu0 %993
    %v995 = vsel %vm146, %v943, -inf
    %996 = vmax.xlane.f32.xlu0 %v995
    %v997 = vpop.xlane.xlu0 %996
    %v998 = vmax.f32 %v946, 0.0
    %v999 = vmax.f32 %v949, 0.0
    %v1000 = vmax.f32 %v952, 0.0
    %v1001 = vmax.f32 %v955, 0.0
    %v1002 = vmax.f32 %v958, 0.0
    %v1003 = vmax.f32 %v961, 0.0
    %v1004 = vmax.f32 %v964, 0.0
    %v1005 = vmax.f32 %v967, 0.0
    %v1006 = vmax.f32 %v970, 0.0
    %v1007 = vmax.f32 %v973, 0.0
    %v1008 = vmax.f32 %v976, 0.0
    %v1009 = vmax.f32 %v979, 0.0
    %v1010 = vmax.f32 %v982, 0.0
    %v1011 = vmax.f32 %v985, 0.0
    %v1012 = vmax.f32 %v988, 0.0
    %v1013 = vmax.f32 %v991, 0.0
    %v1014 = vmax.f32 %v994, 0.0
    %v1015 = vmax.f32 %v997, 0.0
    %v1016 = vsub.f32 %v766, %v998
    %v1017 = vsub.f32 %v767, %v999
    %v1018 = vsub.f32 %v768, %v1000
    %v1019 = vsub.f32 %v797, %v1001
    %v1020 = vsub.f32 %v798, %v1002
    %v1021 = vsub.f32 %v799, %v1003
    %v1022 = vsub.f32 %v838, %v1004
    %v1023 = vsub.f32 %v839, %v1005
    %v1024 = vsub.f32 %v840, %v1006
    %v1025 = vsub.f32 %v869, %v1007
    %v1026 = vsub.f32 %v870, %v1008
    %v1027 = vsub.f32 %v871, %v1009
    %v1028 = vsub.f32 %v910, %v1010
    %v1029 = vsub.f32 %v911, %v1011
    %v1030 = vsub.f32 %v912, %v1012
    %v1031 = vsub.f32 %v941, %v1013
    %v1032 = vsub.f32 %v942, %v1014
    %v1033 = vsub.f32 %v943, %v1015
    %v1034 = vmul.f32 %v1016, 1.442695
    %v1035 = vpow.pop %v1034
    %v1036 = vmul.f32 %v1017, 1.442695
    %v1037 = vpow.pop %v1036
    %v1038 = vmul.f32 %v1018, 1.442695
    %v1039 = vpow.pop %v1038
    %v1040 = vmul.f32 %v1019, 1.442695
    %v1041 = vpow.pop %v1040
    %v1042 = vmul.f32 %v1020, 1.442695
    %v1043 = vpow.pop %v1042
    %v1044 = vmul.f32 %v1021, 1.442695
    %v1045 = vpow.pop %v1044
    %v1046 = vmul.f32 %v1022, 1.442695
    %v1047 = vpow.pop %v1046
    %v1048 = vmul.f32 %v1023, 1.442695
    %v1049 = vpow.pop %v1048
    %v1050 = vmul.f32 %v1024, 1.442695
    %v1051 = vpow.pop %v1050
    %v1052 = vmul.f32 %v1025, 1.442695
    %v1053 = vpow.pop %v1052
    %v1054 = vmul.f32 %v1026, 1.442695
    %v1055 = vpow.pop %v1054
    %v1056 = vmul.f32 %v1027, 1.442695
    %v1057 = vpow.pop %v1056
    %v1058 = vmul.f32 %v1028, 1.442695
    %v1059 = vpow.pop %v1058
    %v1060 = vmul.f32 %v1029, 1.442695
    %v1061 = vpow.pop %v1060
    %v1062 = vmul.f32 %v1030, 1.442695
    %v1063 = vpow.pop %v1062
    %v1064 = vmul.f32 %v1031, 1.442695
    %v1065 = vpow.pop %v1064
    %v1066 = vmul.f32 %v1032, 1.442695
    %v1067 = vpow.pop %v1066
    %v1068 = vmul.f32 %v1033, 1.442695
    %v1069 = vpow.pop %v1068
    %v1070 = vsel %vm146, %v1035, 0.0
    %1071 = vadd.xlane.f32.xlu0 %v1070
    %v1072 = vpop.xlane.xlu0 %1071
    %v1073 = vsel %vm146, %v1037, 0.0
    %1074 = vadd.xlane.f32.xlu0 %v1073
    %v1075 = vpop.xlane.xlu0 %1074
    %v1076 = vsel %vm146, %v1039, 0.0
    %1077 = vadd.xlane.f32.xlu0 %v1076
    %v1078 = vpop.xlane.xlu0 %1077
    %v1079 = vsel %vm146, %v1041, 0.0
    %1080 = vadd.xlane.f32.xlu0 %v1079
    %v1081 = vpop.xlane.xlu0 %1080
    %v1082 = vsel %vm146, %v1043, 0.0
    %1083 = vadd.xlane.f32.xlu0 %v1082
    %v1084 = vpop.xlane.xlu0 %1083
    %v1085 = vsel %vm146, %v1045, 0.0
    %1086 = vadd.xlane.f32.xlu0 %v1085
    %v1087 = vpop.xlane.xlu0 %1086
    %v1088 = vsel %vm146, %v1047, 0.0
    %1089 = vadd.xlane.f32.xlu0 %v1088
    %v1090 = vpop.xlane.xlu0 %1089
    %v1091 = vsel %vm146, %v1049, 0.0
    %1092 = vadd.xlane.f32.xlu0 %v1091
    %v1093 = vpop.xlane.xlu0 %1092
    %v1094 = vsel %vm146, %v1051, 0.0
    %1095 = vadd.xlane.f32.xlu0 %v1094
    %v1096 = vpop.xlane.xlu0 %1095
    %v1097 = vsel %vm146, %v1053, 0.0
    %1098 = vadd.xlane.f32.xlu0 %v1097
    %v1099 = vpop.xlane.xlu0 %1098
    %v1100 = vsel %vm146, %v1055, 0.0
    %1101 = vadd.xlane.f32.xlu0 %v1100
    %v1102 = vpop.xlane.xlu0 %1101
    %v1103 = vsel %vm146, %v1057, 0.0
    %1104 = vadd.xlane.f32.xlu0 %v1103
    %v1105 = vpop.xlane.xlu0 %1104
    %v1106 = vsel %vm146, %v1059, 0.0
    %1107 = vadd.xlane.f32.xlu0 %v1106
    %v1108 = vpop.xlane.xlu0 %1107
    %v1109 = vsel %vm146, %v1061, 0.0
    %1110 = vadd.xlane.f32.xlu0 %v1109
    %v1111 = vpop.xlane.xlu0 %1110
    %v1112 = vsel %vm146, %v1063, 0.0
    %1113 = vadd.xlane.f32.xlu0 %v1112
    %v1114 = vpop.xlane.xlu0 %1113
    %v1115 = vsel %vm146, %v1065, 0.0
    %1116 = vadd.xlane.f32.xlu0 %v1115
    %v1117 = vpop.xlane.xlu0 %1116
    %v1118 = vsel %vm146, %v1067, 0.0
    %1119 = vadd.xlane.f32.xlu0 %v1118
    %v1120 = vpop.xlane.xlu0 %1119
    %v1121 = vsel %vm146, %v1069, 0.0
    %1122 = vadd.xlane.f32.xlu0 %v1121
    %v1123 = vpop.xlane.xlu0 %1122
    %vm1124 = vcmp.gt.f32.partialorder %v1072, 0.0
    %vm1125 = vcmp.gt.f32.partialorder %v1075, 0.0
    %vm1126 = vcmp.gt.f32.partialorder %v1078, 0.0
    %vm1127 = vcmp.gt.f32.partialorder %v1081, 0.0
    %vm1128 = vcmp.gt.f32.partialorder %v1084, 0.0
    %vm1129 = vcmp.gt.f32.partialorder %v1087, 0.0
    %vm1130 = vcmp.gt.f32.partialorder %v1090, 0.0
    %vm1131 = vcmp.gt.f32.partialorder %v1093, 0.0
    %vm1132 = vcmp.gt.f32.partialorder %v1096, 0.0
    %vm1133 = vcmp.gt.f32.partialorder %v1099, 0.0
    %vm1134 = vcmp.gt.f32.partialorder %v1102, 0.0
    %vm1135 = vcmp.gt.f32.partialorder %v1105, 0.0
    %vm1136 = vcmp.gt.f32.partialorder %v1108, 0.0
    %vm1137 = vcmp.gt.f32.partialorder %v1111, 0.0
    %vm1138 = vcmp.gt.f32.partialorder %v1114, 0.0
    %vm1139 = vcmp.gt.f32.partialorder %v1117, 0.0
    %vm1140 = vcmp.gt.f32.partialorder %v1120, 0.0
    %vm1141 = vcmp.gt.f32.partialorder %v1123, 0.0
    %v1142 = vsel %vm1124, %v1072, 1.0
    %v1143 = vsel %vm1125, %v1075, 1.0
    %v1144 = vsel %vm1126, %v1078, 1.0
    %v1145 = vsel %vm1127, %v1081, 1.0
    %v1146 = vsel %vm1128, %v1084, 1.0
    %v1147 = vsel %vm1129, %v1087, 1.0
    %v1148 = vsel %vm1130, %v1090, 1.0
    %v1149 = vsel %vm1131, %v1093, 1.0
    %v1150 = vsel %vm1132, %v1096, 1.0
    %v1151 = vsel %vm1133, %v1099, 1.0
    %v1152 = vsel %vm1134, %v1102, 1.0
    %v1153 = vsel %vm1135, %v1105, 1.0
    %v1154 = vsel %vm1136, %v1108, 1.0
    %v1155 = vsel %vm1137, %v1111, 1.0
    %v1156 = vsel %vm1138, %v1114, 1.0
    %v1157 = vsel %vm1139, %v1117, 1.0
    %v1158 = vsel %vm1140, %v1120, 1.0
    %v1159 = vsel %vm1141, %v1123, 1.0
    %v1160 = vrcp.pop %v1142
    %v1161 = vrcp.pop %v1143
    %v1162 = vrcp.pop %v1144
    %v1163 = vrcp.pop %v1145
    %v1164 = vrcp.pop %v1146
    %v1165 = vrcp.pop %v1147
    %v1166 = vrcp.pop %v1148
    %v1167 = vrcp.pop %v1149
    %v1168 = vrcp.pop %v1150
    %v1169 = vrcp.pop %v1151
    %v1170 = vrcp.pop %v1152
    %v1171 = vrcp.pop %v1153
    %v1172 = vrcp.pop %v1154
    %v1173 = vrcp.pop %v1155
    %v1174 = vrcp.pop %v1156
    %v1175 = vrcp.pop %v1157
    %v1176 = vrcp.pop %v1158
    %v1177 = vrcp.pop %v1159
    %v1178 = vmul.f32 %v1035, %v1160
    %v1179 = vmul.f32 %v1037, %v1161
    %v1180 = vmul.f32 %v1039, %v1162
    %v1181 = vmul.f32 %v1041, %v1163
    %v1182 = vmul.f32 %v1043, %v1164
    %v1183 = vmul.f32 %v1045, %v1165
    %v1184 = vmul.f32 %v1047, %v1166
    %v1185 = vmul.f32 %v1049, %v1167
    %v1186 = vmul.f32 %v1051, %v1168
    %v1187 = vmul.f32 %v1053, %v1169
    %v1188 = vmul.f32 %v1055, %v1170
    %v1189 = vmul.f32 %v1057, %v1171
    %v1190 = vmul.f32 %v1059, %v1172
    %v1191 = vmul.f32 %v1061, %v1173
    %v1192 = vmul.f32 %v1063, %v1174
    %v1193 = vmul.f32 %v1065, %v1175
    %v1194 = vmul.f32 %v1067, %v1176
    %v1195 = vmul.f32 %v1069, %v1177
    %v1197 = vsel %vm146, %v1178, 0
    %v1200 = vsel %vm146, %v1179, 0
    %v1203 = vsel %vm146, %v1180, 0
    %v1206 = vsel %vm146, %v1181, 0
    %v1209 = vsel %vm146, %v1182, 0
    %v1212 = vsel %vm146, %v1183, 0
    %v1215 = vsel %vm146, %v1184, 0
    %v1218 = vsel %vm146, %v1185, 0
    %v1221 = vsel %vm146, %v1186, 0
    %v1224 = vsel %vm146, %v1187, 0
    %v1227 = vsel %vm146, %v1188, 0
    %v1230 = vsel %vm146, %v1189, 0
    %v1233 = vsel %vm146, %v1190, 0
    %v1236 = vsel %vm146, %v1191, 0
    %v1239 = vsel %vm146, %v1192, 0
    %v1242 = vsel %vm146, %v1193, 0
    %v1245 = vsel %vm146, %v1194, 0
    %v1248 = vsel %vm146, %v1195, 0
    %v1250 = vsel %vm150, %v638, 0
    %1252 = vmatprep.subr.mxu0 0.0
    %1253 = vmatpush1.msra.mxu0 %v633
    %1254 = vmatprep.subr.mxu0 0.0
    %1255 = vmatpush1.msra.mxu0 %v1250
    %1256 = vmatprep.subr.mxu0 0.0
    %1257 = vmatpush1.msra.mxu0 0.0
    %1258 = vmatprep.subr.mxu0 0.0
    %1259 = vmatpush1.msra.mxu0 0.0
    %1260 = vmatprep.subr.mxu0 0.0
    %1261 = vmatpush1.msra.mxu0 0.0
    %1262 = vmatprep.subr.mxu0 0.0
    %1263 = vmatpush1.msra.mxu0 0.0
    %1264 = vmatprep.subr.mxu0 0.0
    %1265 = vmatpush1.msra.mxu0 0.0
    %1266 = vmatprep.subr.mxu0 0.0
    %1267 = vmatpush1.msra.mxu0 0.0
    %1268 = vmatprep.subr.mxu0 0.0
    %1269 = vmatpush1.msra.mxu0 0.0
    %1270 = vmatprep.subr.mxu0 0.0
    %1271 = vmatpush1.msra.mxu0 0.0
    %1272 = vmatprep.subr.mxu0 0.0
    %1273 = vmatpush1.msra.mxu0 0.0
    %1274 = vmatprep.subr.mxu0 0.0
    %1275 = vmatpush1.msra.mxu0 0.0
    %1276 = vmatprep.subr.mxu0 0.0
    %1277 = vmatpush1.msra.mxu0 0.0
    %1278 = vmatprep.subr.mxu0 0.0
    %1279 = vmatpush1.msra.mxu0 0.0
    %1280 = vmatprep.subr.mxu0 0.0
    %1281 = vmatpush1.msra.mxu0 0.0
    %1282 = vmatprep.subr.mxu0 0.0
    %1283 = vmatpush1.msra.mxu0 0.0
    %1284 = vmatprep.subr.mxu0 0.0
    %1285 = vmatpush1.msra.mxu0 0.0
    %1286 = vmatprep.subr.mxu0 0.0
    %1287 = vmatpush1.msra.mxu0 0.0
    %1288 = vmatprep.subr.mxu0 0.0
    %1289 = vmatpush1.msra.mxu0 0.0
    %1290 = vmatprep.subr.mxu0 0.0
    %1291 = vmatpush1.msra.mxu0 0.0
    %1292 = vmatprep.subr.mxu0 0.0
    %1293 = vmatpush1.msra.mxu0 0.0
    %1294 = vmatprep.subr.mxu0 0.0
    %1295 = vmatpush1.msra.mxu0 0.0
    %1296 = vmatprep.subr.mxu0 0.0
    %1297 = vmatpush1.msra.mxu0 0.0
    %1298 = vmatprep.subr.mxu0 0.0
    %1299 = vmatpush1.msra.mxu0 0.0
    %1300 = vmatprep.subr.mxu0 0.0
    %1301 = vmatpush1.msra.mxu0 0.0
    %1302 = vmatprep.subr.mxu0 0.0
    %1303 = vmatpush1.msra.mxu0 0.0
    %1304 = vmatprep.subr.mxu0 0.0
    %1305 = vmatpush1.msra.mxu0 0.0
    %1306 = vmatprep.subr.mxu0 0.0
    %1307 = vmatpush1.msra.mxu0 0.0
    %1308 = vmatprep.subr.mxu0 0.0
    %1309 = vmatpush1.msra.mxu0 0.0
    %1310 = vmatprep.subr.mxu0 0.0
    %1311 = vmatpush1.msra.mxu0 0.0
    %1312 = vmatprep.subr.mxu0 0.0
    %1313 = vmatpush1.msra.mxu0 0.0
    %1314 = vmatprep.subr.mxu0 0.0
    %1315 = vmatpush1.msra.mxu0 0.0
    %1316 = vmatprep.mubr.f32.mxu0 0.0
    %1317 = vmatmul.mubr.f32.gmra.mrb[0].mxu0 %v1197
    %v1318 = vpop.f32.mrb[0].mxu0
    %v1319 = vadd.f32 0.0, %v1318
    %v1320 = vpop.f32.mrb[0].mxu0
    %1321 = vmatprep.mubr.f32.mxu0 0.0
    %1322 = vmatmul.mubr.f32.gmra.mrb[0].mxu0 %v1200
    %v1323 = vpop.f32.mrb[0].mxu0
    %v1324 = vadd.f32 0.0, %v1323
    %v1325 = vpop.f32.mrb[0].mxu0
    %1326 = vmatprep.mubr.f32.mxu0 0.0
    %1327 = vmatmul.mubr.f32.gmra.mrb[0].mxu0 %v1203
    %v1328 = vpop.f32.mrb[0].mxu0
    %v1329 = vadd.f32 0.0, %v1328
    %v1330 = vpop.f32.mrb[0].mxu0
    %1331 = vmatprep.mubr.f32.mxu0 0.0
    %1332 = vmatmul.mubr.f32.gmra.mrb[0].mxu0 %v1206
    %v1333 = vpop.f32.mrb[0].mxu0
    %v1334 = vadd.f32 0.0, %v1333
    %v1335 = vpop.f32.mrb[0].mxu0
    %1336 = vmatprep.mubr.f32.mxu0 0.0
    %1337 = vmatmul.mubr.f32.gmra.mrb[0].mxu0 %v1209
    %v1338 = vpop.f32.mrb[0].mxu0
    %v1339 = vadd.f32 0.0, %v1338
    %v1340 = vpop.f32.mrb[0].mxu0
    %1341 = vmatprep.mubr.f32.mxu0 0.0
    %1342 = vmatmul.mubr.f32.gmra.mrb[0].mxu0 %v1212
    %v1343 = vpop.f32.mrb[0].mxu0
    %v1344 = vadd.f32 0.0, %v1343
    %v1345 = vpop.f32.mrb[0].mxu0
    %1346 = vmatprep.mubr.f32.mxu0 0.0
    %1347 = vmatmul.mubr.f32.gmra.mrb[0].mxu0 %v1215
    %v1348 = vpop.f32.mrb[0].mxu0
    %v1349 = vadd.f32 0.0, %v1348
    %v1350 = vpop.f32.mrb[0].mxu0
    %1351 = vmatprep.mubr.f32.mxu0 0.0
    %1352 = vmatmul.mubr.f32.gmra.mrb[0].mxu0 %v1218
    %v1353 = vpop.f32.mrb[0].mxu0
    %v1354 = vadd.f32 0.0, %v1353
    %v1355 = vpop.f32.mrb[0].mxu0
    %1356 = vmatprep.mubr.f32.mxu0 0.0
    %1357 = vmatmul.mubr.f32.gmra.mrb[0].mxu0 %v1221
    %v1358 = vpop.f32.mrb[0].mxu0
    %v1359 = vadd.f32 0.0, %v1358
    %v1360 = vpop.f32.mrb[0].mxu0
    %1361 = vmatprep.mubr.f32.mxu0 0.0
    %1362 = vmatmul.mubr.f32.gmra.mrb[0].mxu0 %v1224
    %v1363 = vpop.f32.mrb[0].mxu0
    %v1364 = vadd.f32 0.0, %v1363
    %v1365 = vpop.f32.mrb[0].mxu0
    %1366 = vmatprep.mubr.f32.mxu0 0.0
    %1367 = vmatmul.mubr.f32.gmra.mrb[0].mxu0 %v1227
    %v1368 = vpop.f32.mrb[0].mxu0
    %v1369 = vadd.f32 0.0, %v1368
    %v1370 = vpop.f32.mrb[0].mxu0
    %1371 = vmatprep.mubr.f32.mxu0 0.0
    %1372 = vmatmul.mubr.f32.gmra.mrb[0].mxu0 %v1230
    %v1373 = vpop.f32.mrb[0].mxu0
    %v1374 = vadd.f32 0.0, %v1373
    %v1375 = vpop.f32.mrb[0].mxu0
    %1376 = vmatprep.mubr.f32.mxu0 0.0
    %1377 = vmatmul.mubr.f32.gmra.mrb[0].mxu0 %v1233
    %v1378 = vpop.f32.mrb[0].mxu0
    %v1379 = vadd.f32 0.0, %v1378
    %v1380 = vpop.f32.mrb[0].mxu0
    %1381 = vmatprep.mubr.f32.mxu0 0.0
    %1382 = vmatmul.mubr.f32.gmra.mrb[0].mxu0 %v1236
    %v1383 = vpop.f32.mrb[0].mxu0
    %v1384 = vadd.f32 0.0, %v1383
    %v1385 = vpop.f32.mrb[0].mxu0
    %1386 = vmatprep.mubr.f32.mxu0 0.0
    %1387 = vmatmul.mubr.f32.gmra.mrb[0].mxu0 %v1239
    %v1388 = vpop.f32.mrb[0].mxu0
    %v1389 = vadd.f32 0.0, %v1388
    %v1390 = vpop.f32.mrb[0].mxu0
    %1391 = vmatprep.mubr.f32.mxu0 0.0
    %1392 = vmatmul.mubr.f32.gmra.mrb[0].mxu0 %v1242
    %v1393 = vpop.f32.mrb[0].mxu0
    %v1394 = vadd.f32 0.0, %v1393
    %v1395 = vpop.f32.mrb[0].mxu0
    %1396 = vmatprep.mubr.f32.mxu0 0.0
    %1397 = vmatmul.mubr.f32.gmra.mrb[0].mxu0 %v1245
    %v1398 = vpop.f32.mrb[0].mxu0
    %v1399 = vadd.f32 0.0, %v1398
    %v1400 = vpop.f32.mrb[0].mxu0
    %1401 = vmatprep.mubr.f32.mxu0 0.0
    %1402 = vmatmul.mubr.f32.gmra.mrb[0].mxu0 %v1248
    %v1403 = vpop.f32.mrb[0].mxu0
    %v1404 = vadd.f32 0.0, %v1403
    %v1405 = vpop.f32.mrb[0].mxu0
    %1406 = vdwg.mxu0
    %v1407 = vadd.f32 %v1319, %v1349
    %v1408 = vadd.f32 %v1324, %v1354
    %v1409 = vadd.f32 %v1329, %v1359
    %v1410 = vadd.f32 %v1407, %v1379
    %v1411 = vadd.f32 %v1408, %v1384
    %v1412 = vadd.f32 %v1409, %v1389
    %vm1413 = vcmp.gt.f32.partialorder %v1410, 0.0
    %vm1414 = vcmp.gt.f32.partialorder %v1411, 0.0
    %vm1415 = vcmp.gt.f32.partialorder %v1412, 0.0
    %v1416 = vmin.f32 %v1410, 0.0
    %v1417 = vmin.f32 %v1411, 0.0
    %v1418 = vmin.f32 %v1412, 0.0
    %v1419 = vmul.f32 %v1416, 1.442695
    %v1420 = vpow.pop %v1419
    %v1421 = vmul.f32 %v1417, 1.442695
    %v1422 = vpow.pop %v1421
    %v1423 = vmul.f32 %v1418, 1.442695
    %v1424 = vpow.pop %v1423
    %v1425 = vsub.f32 %v1420, 1.0
    %v1426 = vsub.f32 %v1422, 1.0
    %v1427 = vsub.f32 %v1424, 1.0
    %v1428 = vsel %vm1413, %v1410, %v1425
    %v1429 = vsel %vm1414, %v1411, %v1426
    %v1430 = vsel %vm1415, %v1412, %v1427
    %v1431 = vadd.f32 %v1334, %v1364
    %v1432 = vadd.f32 %v1339, %v1369
    %v1433 = vadd.f32 %v1344, %v1374
    %v1434 = vadd.f32 %v1431, %v1394
    %v1435 = vadd.f32 %v1432, %v1399
    %v1436 = vadd.f32 %v1433, %v1404
    %vm1437 = vcmp.gt.f32.partialorder %v1434, 0.0
    %vm1438 = vcmp.gt.f32.partialorder %v1435, 0.0
    %vm1439 = vcmp.gt.f32.partialorder %v1436, 0.0
    %v1440 = vmin.f32 %v1434, 0.0
    %v1441 = vmin.f32 %v1435, 0.0
    %v1442 = vmin.f32 %v1436, 0.0
    %v1443 = vmul.f32 %v1440, 1.442695
    %v1444 = vpow.pop %v1443
    %v1445 = vmul.f32 %v1441, 1.442695
    %v1446 = vpow.pop %v1445
    %v1447 = vmul.f32 %v1442, 1.442695
    %v1448 = vpow.pop %v1447
    %v1449 = vsub.f32 %v1444, 1.0
    %v1450 = vsub.f32 %v1446, 1.0
    %v1451 = vsub.f32 %v1448, 1.0
    %v1452 = vsel %vm1437, %v1434, %v1449
    %v1453 = vsel %vm1438, %v1435, %v1450
    %v1454 = vsel %vm1439, %v1436, %v1451
    %1458 = vrot.lane.b32.xlu0 %v1452, 32
    %v1459 = vpop.permute.xlu0 %1458
    %1460 = vrot.lane.b32.xlu0 %v1453, 32
    %v1461 = vpop.permute.xlu0 %1460
    %1462 = vrot.lane.b32.xlu0 %v1454, 32
    %v1463 = vpop.permute.xlu0 %1462
    %v1467 = vsel %vm641, %v1428, %v1459
    %v1468 = vsel %vm641, %v1429, %v1461
    %v1469 = vsel %vm641, %v1430, %v1463
    %v1470 = vld [vmem:[#allocation3 + $0xf8] sm:$0xff]
    %v1471 = vld [vmem:[#allocation3 + $0x100] sm:$0xff]
    %v1472 = vld [vmem:[#allocation3 + $0x108] sm:$0xff]
    %v1473 = vld [vmem:[#allocation3 + $0x110] sm:$0x3f]
    %v1475 = vsel %vm413, %v1470, 0
    %v1478 = vsel %vm413, %v1471, 0
    %v1481 = vsel %vm413, %v1472, 0
    %v1484 = vsel %vm413, %v1473, 0
    %1486 = vmatprep.subr.mxu0 0.0
    %1487 = vmatpush1.msra.mxu0 %v306
    %1488 = vmatprep.subr.mxu0 0.0
    %1489 = vmatpush1.msra.mxu0 %v307
    %1490 = vmatprep.subr.mxu0 0.0
    %1491 = vmatpush1.msra.mxu0 %v308
    %1492 = vmatprep.subr.mxu0 0.0
    %1493 = vmatpush1.msra.mxu0 0.0
    %1494 = vmatprep.subr.mxu0 0.0
    %1495 = vmatpush1.msra.mxu0 0.0
    %1496 = vmatprep.subr.mxu0 0.0
    %1497 = vmatpush1.msra.mxu0 0.0
    %1498 = vmatprep.subr.mxu0 0.0
    %1499 = vmatpush1.msra.mxu0 0.0
    %1500 = vmatprep.subr.mxu0 0.0
    %1501 = vmatpush1.msra.mxu0 0.0
    %1502 = vmatprep.subr.mxu0 0.0
    %1503 = vmatpush1.msra.mxu0 0.0
    %1504 = vmatprep.subr.mxu0 0.0
    %1505 = vmatpush1.msra.mxu0 0.0
    %1506 = vmatprep.subr.mxu0 0.0
    %1507 = vmatpush1.msra.mxu0 0.0
    %1508 = vmatprep.subr.mxu0 0.0
    %1509 = vmatpush1.msra.mxu0 0.0
    %1510 = vmatprep.subr.mxu0 0.0
    %1511 = vmatpush1.msra.mxu0 0.0
    %1512 = vmatprep.subr.mxu0 0.0
    %1513 = vmatpush1.msra.mxu0 0.0
    %1514 = vmatprep.subr.mxu0 0.0
    %1515 = vmatpush1.msra.mxu0 0.0
    %1516 = vmatprep.subr.mxu0 0.0
    %1517 = vmatpush1.msra.mxu0 0.0
    %1518 = vmatprep.subr.mxu0 0.0
    %1519 = vmatpush1.msra.mxu0 0.0
    %1520 = vmatprep.subr.mxu0 0.0
    %1521 = vmatpush1.msra.mxu0 0.0
    %1522 = vmatprep.subr.mxu0 0.0
    %1523 = vmatpush1.msra.mxu0 0.0
    %1524 = vmatprep.subr.mxu0 0.0
    %1525 = vmatpush1.msra.mxu0 0.0
    %1526 = vmatprep.subr.mxu0 0.0
    %1527 = vmatpush1.msra.mxu0 0.0
    %1528 = vmatprep.subr.mxu0 0.0
    %1529 = vmatpush1.msra.mxu0 0.0
    %1530 = vmatprep.subr.mxu0 0.0
    %1531 = vmatpush1.msra.mxu0 0.0
    %1532 = vmatprep.subr.mxu0 0.0
    %1533 = vmatpush1.msra.mxu0 0.0
    %1534 = vmatprep.subr.mxu0 0.0
    %1535 = vmatpush1.msra.mxu0 0.0
    %1536 = vmatprep.subr.mxu0 0.0
    %1537 = vmatpush1.msra.mxu0 0.0
    %1538 = vmatprep.subr.mxu0 0.0
    %1539 = vmatpush1.msra.mxu0 0.0
    %1540 = vmatprep.subr.mxu0 0.0
    %1541 = vmatpush1.msra.mxu0 0.0
    %1542 = vmatprep.subr.mxu0 0.0
    %1543 = vmatpush1.msra.mxu0 0.0
    %1544 = vmatprep.subr.mxu0 0.0
    %1545 = vmatpush1.msra.mxu0 0.0
    %1546 = vmatprep.subr.mxu0 0.0
    %1547 = vmatpush1.msra.mxu0 0.0
    %1548 = vmatprep.subr.mxu0 0.0
    %1549 = vmatpush1.msra.mxu0 0.0
    %1550 = vmatprep.mubr.f32.mxu0 0.0
    %1551 = vmatmul.mubr.f32.gmra.mrb[0].mxu0 %v1475
    %v1552 = vpop.f32.mrb[0].mxu0
    %v1553 = vadd.f32 0.0, %v1552
    %v1554 = vpop.f32.mrb[0].mxu0
    %1555 = vmatprep.mubr.f32.mxu0 0.0
    %1556 = vmatmul.mubr.f32.gmra.mrb[0].mxu0 %v1478
    %v1557 = vpop.f32.mrb[0].mxu0
    %v1558 = vadd.f32 0.0, %v1557
    %v1559 = vpop.f32.mrb[0].mxu0
    %1560 = vmatprep.mubr.f32.mxu0 0.0
    %1561 = vmatmul.mubr.f32.gmra.mrb[0].mxu0 %v1481
    %v1562 = vpop.f32.mrb[0].mxu0
    %v1563 = vadd.f32 0.0, %v1562
    %v1564 = vpop.f32.mrb[0].mxu0
    %1565 = vmatprep.mubr.f32.mxu0 0.0
    %1566 = vmatmul.mubr.f32.gmra.mrb[0].mxu0 %v1484
    %v1567 = vpop.f32.mrb[0].mxu0
    %v1568 = vadd.f32 0.0, %v1567
    %v1569 = vpop.f32.mrb[0].mxu0
    %1570 = vdwg.mxu0
    %v1571 = vld [vmem:[#allocation3 + $0xd8] sm:$0xff]
    %v1572 = vld [vmem:[#allocation3 + $0xe0] sm:$0xff]
    %v1573 = vld [vmem:[#allocation3 + $0xe8] sm:$0xff]
    %v1574 = vld [vmem:[#allocation3 + $0xf0] sm:$0x3f]
    %v1575 = vmul.f32 %v1553, %v1571
    %v1576 = vmul.f32 %v1558, %v1572
    %v1577 = vmul.f32 %v1563, %v1573
    %v1578 = vmul.f32 %v1568, %v1574
    %1583 = vrot.lane.b32.xlu0 %v1575, 96
    %v1584 = vpop.permute.xlu0 %1583
    %1585 = vrot.lane.b32.xlu0 %v1576, 96
    %v1586 = vpop.permute.xlu0 %1585
    %1587 = vrot.lane.b32.xlu0 %v1577, 96
    %v1588 = vpop.permute.xlu0 %1587
    %1589 = vrot.lane.b32.xlu0 %v1578, 96
    %v1590 = vpop.permute.xlu0 %1589
    %v1595 = vadd.f32 %v1575, %v1584
    %v1596 = vadd.f32 %v1576, %v1586
    %v1597 = vadd.f32 %v1577, %v1588
    %v1598 = vadd.f32 %v1578, %v1590
    %v1599 = vld [vmem:[#allocation3 + $0x118] sm:$0xff]
    %v1600 = vld [vmem:[#allocation3 + $0x120] sm:$0x3]
    %vm1601 = vcmask 244736
    %v1603 = vsel %vm1601, %v1599, 0
    %v1606 = vsel %vm1601, %v1600, 0
    %vm1608 = vcmask 1045504
    %v1610 = vsel %vm1608, %v1598, 0
    %1612 = vmatprep.subr.mxu0 0.0
    %1613 = vmatpush1.msra.mxu0 %v1595
    %1614 = vmatprep.subr.mxu0 0.0
    %1615 = vmatpush1.msra.mxu0 %v1596
    %1616 = vmatprep.subr.mxu0 0.0
    %1617 = vmatpush1.msra.mxu0 %v1597
    %1618 = vmatprep.subr.mxu0 0.0
    %1619 = vmatpush1.msra.mxu0 %v1610
    %1620 = vmatprep.subr.mxu0 0.0
    %1621 = vmatpush1.msra.mxu0 0.0
    %1622 = vmatprep.subr.mxu0 0.0
    %1623 = vmatpush1.msra.mxu0 0.0
    %1624 = vmatprep.subr.mxu0 0.0
    %1625 = vmatpush1.msra.mxu0 0.0
    %1626 = vmatprep.subr.mxu0 0.0
    %1627 = vmatpush1.msra.mxu0 0.0
    %1628 = vmatprep.subr.mxu0 0.0
    %1629 = vmatpush1.msra.mxu0 0.0
    %1630 = vmatprep.subr.mxu0 0.0
    %1631 = vmatpush1.msra.mxu0 0.0
    %1632 = vmatprep.subr.mxu0 0.0
    %1633 = vmatpush1.msra.mxu0 0.0
    %1634 = vmatprep.subr.mxu0 0.0
    %1635 = vmatpush1.msra.mxu0 0.0
    %1636 = vmatprep.subr.mxu0 0.0
    %1637 = vmatpush1.msra.mxu0 0.0
    %1638 = vmatprep.subr.mxu0 0.0
    %1639 = vmatpush1.msra.mxu0 0.0
    %1640 = vmatprep.subr.mxu0 0.0
    %1641 = vmatpush1.msra.mxu0 0.0
    %1642 = vmatprep.subr.mxu0 0.0
    %1643 = vmatpush1.msra.mxu0 0.0
    %1644 = vmatprep.subr.mxu0 0.0
    %1645 = vmatpush1.msra.mxu0 0.0
    %1646 = vmatprep.subr.mxu0 0.0
    %1647 = vmatpush1.msra.mxu0 0.0
    %1648 = vmatprep.subr.mxu0 0.0
    %1649 = vmatpush1.msra.mxu0 0.0
    %1650 = vmatprep.subr.mxu0 0.0
    %1651 = vmatpush1.msra.mxu0 0.0
    %1652 = vmatprep.subr.mxu0 0.0
    %1653 = vmatpush1.msra.mxu0 0.0
    %1654 = vmatprep.subr.mxu0 0.0
    %1655 = vmatpush1.msra.mxu0 0.0
    %1656 = vmatprep.subr.mxu0 0.0
    %1657 = vmatpush1.msra.mxu0 0.0
    %1658 = vmatprep.subr.mxu0 0.0
    %1659 = vmatpush1.msra.mxu0 0.0
    %1660 = vmatprep.subr.mxu0 0.0
    %1661 = vmatpush1.msra.mxu0 0.0
    %1662 = vmatprep.subr.mxu0 0.0
    %1663 = vmatpush1.msra.mxu0 0.0
    %1664 = vmatprep.subr.mxu0 0.0
    %1665 = vmatpush1.msra.mxu0 0.0
    %1666 = vmatprep.subr.mxu0 0.0
    %1667 = vmatpush1.msra.mxu0 0.0
    %1668 = vmatprep.subr.mxu0 0.0
    %1669 = vmatpush1.msra.mxu0 0.0
    %1670 = vmatprep.subr.mxu0 0.0
    %1671 = vmatpush1.msra.mxu0 0.0
    %1672 = vmatprep.subr.mxu0 0.0
    %1673 = vmatpush1.msra.mxu0 0.0
    %1674 = vmatprep.subr.mxu0 0.0
    %1675 = vmatpush1.msra.mxu0 0.0
    %1676 = vmatprep.mubr.f32.mxu0 0.0
    %1677 = vmatmul.mubr.f32.gmra.mrb[0].mxu0 %v1603
    %v1678 = vpop.f32.mrb[0].mxu0
    %v1679 = vadd.f32 0.0, %v1678
    %v1680 = vpop.f32.mrb[0].mxu0
    %1681 = vmatprep.mubr.f32.mxu0 0.0
    %1682 = vmatmul.mubr.f32.gmra.mrb[0].mxu0 %v1606
    %v1683 = vpop.f32.mrb[0].mxu0
    %v1684 = vadd.f32 0.0, %v1683
    %v1685 = vpop.f32.mrb[0].mxu0
    %1686 = vdwg.mxu0
    %v1688 = vsel %vm641, %v1679, 0
    %v1691 = vsel %vm641, %v1684, 0
    %1693 = vmatprep.subr.mxu0 0.0
    %1694 = vmatpush1.xpose.msra.mxu0 %v1688
    %1695 = vmatprep.subr.mxu0 0.0
    %1696 = vmatpush1.xpose.msra.mxu0 %v1691
    %1697 = vmatprep.subr.mxu0 0.0
    %1698 = vmatpush1.xpose.msra.mxu0 0.0
    %1699 = vmatprep.subr.mxu0 0.0
    %1700 = vmatpush1.xpose.msra.mxu0 0.0
    %1701 = vmatprep.subr.mxu0 0.0
    %1702 = vmatpush1.xpose.msra.mxu0 0.0
    %1703 = vmatprep.subr.mxu0 0.0
    %1704 = vmatpush1.xpose.msra.mxu0 0.0
    %1705 = vmatprep.subr.mxu0 0.0
    %1706 = vmatpush1.xpose.msra.mxu0 0.0
    %1707 = vmatprep.subr.mxu0 0.0
    %1708 = vmatpush1.xpose.msra.mxu0 0.0
    %1709 = vmatprep.subr.mxu0 0.0
    %1710 = vmatpush1.xpose.msra.mxu0 0.0
    %1711 = vmatprep.subr.mxu0 0.0
    %1712 = vmatpush1.xpose.msra.mxu0 0.0
    %1713 = vmatprep.subr.mxu0 0.0
    %1714 = vmatpush1.xpose.msra.mxu0 0.0
    %1715 = vmatprep.subr.mxu0 0.0
    %1716 = vmatpush1.xpose.msra.mxu0 0.0
    %1717 = vmatprep.subr.mxu0 0.0
    %1718 = vmatpush1.xpose.msra.mxu0 0.0
    %1719 = vmatprep.subr.mxu0 0.0
    %1720 = vmatpush1.xpose.msra.mxu0 0.0
    %1721 = vmatprep.subr.mxu0 0.0
    %1722 = vmatpush1.xpose.msra.mxu0 0.0
    %1723 = vmatprep.subr.mxu0 0.0
    %1724 = vmatpush1.xpose.msra.mxu0 0.0
    %1725 = vmatprep.subr.mxu0 0.0
    %1726 = vmatpush1.xpose.msra.mxu0 0.0
    %1727 = vmatprep.subr.mxu0 0.0
    %1728 = vmatpush1.xpose.msra.mxu0 0.0
    %1729 = vmatprep.subr.mxu0 0.0
    %1730 = vmatpush1.xpose.msra.mxu0 0.0
    %1731 = vmatprep.subr.mxu0 0.0
    %1732 = vmatpush1.xpose.msra.mxu0 0.0
    %1733 = vmatprep.subr.mxu0 0.0
    %1734 = vmatpush1.xpose.msra.mxu0 0.0
    %1735 = vmatprep.subr.mxu0 0.0
    %1736 = vmatpush1.xpose.msra.mxu0 0.0
    %1737 = vmatprep.subr.mxu0 0.0
    %1738 = vmatpush1.xpose.msra.mxu0 0.0
    %1739 = vmatprep.subr.mxu0 0.0
    %1740 = vmatpush1.xpose.msra.mxu0 0.0
    %1741 = vmatprep.subr.mxu0 0.0
    %1742 = vmatpush1.xpose.msra.mxu0 0.0
    %1743 = vmatprep.subr.mxu0 0.0
    %1744 = vmatpush1.xpose.msra.mxu0 0.0
    %1745 = vmatprep.subr.mxu0 0.0
    %1746 = vmatpush1.xpose.msra.mxu0 0.0
    %1747 = vmatprep.subr.mxu0 0.0
    %1748 = vmatpush1.xpose.msra.mxu0 0.0
    %1749 = vmatprep.subr.mxu0 0.0
    %1750 = vmatpush1.xpose.msra.mxu0 0.0
    %1751 = vmatprep.subr.mxu0 0.0
    %1752 = vmatpush1.xpose.msra.mxu0 0.0
    %1753 = vmatprep.subr.mxu0 0.0
    %1754 = vmatpush1.xpose.msra.mxu0 0.0
    %1755 = vmatprep.subr.mxu0 0.0
    %1756 = vmatpush1.xpose.msra.mxu0 0.0
    %1757 = vmatprep.mubr.f32.mxu0 0.0
    %1758 = vmatmul.mubr.f32.gmra.mrb[0].mxu0 %v643
    %v1759 = vpop.f32.mrb[0].mxu0
    %v1760 = vadd.f32 0.0, %v1759
    %v1761 = vpop.f32.mrb[0].mxu0
    %1762 = vdwg.mxu0
    %v1763 = vlaneseq
    %v1764 = vshrl.u32 %v1763, 7
    %v1765 = vsub.s32 6, %v1764
    %v1766 = vrot.slane %v407, %v1765
    %vm1767 = vcmp.eq.s32.totalorder %v722, %v1766
    %vm1768 = vcmp.eq.s32.totalorder %v723, %v1766
    %vm1769 = vcmp.eq.s32.totalorder %v724, %v1766
    %v1770 = vsel %vm1767, 0.0, -1e+30
    %v1771 = vsel %vm1768, 0.0, -1e+30
    %v1772 = vsel %vm1769, 0.0, -1e+30
    %v1773 = vlaneseq
    %v1774 = vshrl.u32 %v1773, 7
    %v1775 = vsub.s32 0, %v1774
    %v1776 = vrot.slane %v1760, %v1775
    %v1777 = vadd.f32 %v738, %v1776
    %v1778 = vadd.f32 %v743, %v1776
    %v1779 = vadd.f32 %v748, %v1776
    %vm1780 = vcmp.gt.f32.partialorder %v1777, 0.0
    %vm1781 = vcmp.gt.f32.partialorder %v1778, 0.0
    %vm1782 = vcmp.gt.f32.partialorder %v1779, 0.0
    %v1783 = vmul.f32 %v1777, 0.01
    %v1784 = vmul.f32 %v1778, 0.01
    %v1785 = vmul.f32 %v1779, 0.01
    %v1786 = vsel %vm1780, %v1777, %v1783
    %v1787 = vsel %vm1781, %v1778, %v1784
    %v1788 = vsel %vm1782, %v1779, %v1785
    %v1789 = vadd.f32 %v1786, %v1770
    %v1790 = vadd.f32 %v1787, %v1771
    %v1791 = vadd.f32 %v1788, %v1772
    %v1792 = vlaneseq
    %v1793 = vshrl.u32 %v1792, 7
    %v1794 = vsub.s32 1, %v1793
    %v1795 = vrot.slane %v1760, %v1794
    %v1796 = vadd.f32 %v771, %v1795
    %v1797 = vadd.f32 %v775, %v1795
    %v1798 = vadd.f32 %v779, %v1795
    %vm1799 = vcmp.gt.f32.partialorder %v1796, 0.0
    %vm1800 = vcmp.gt.f32.partialorder %v1797, 0.0
    %vm1801 = vcmp.gt.f32.partialorder %v1798, 0.0
    %v1802 = vmul.f32 %v1796, 0.01
    %v1803 = vmul.f32 %v1797, 0.01
    %v1804 = vmul.f32 %v1798, 0.01
    %v1805 = vsel %vm1799, %v1796, %v1802
    %v1806 = vsel %vm1800, %v1797, %v1803
    %v1807 = vsel %vm1801, %v1798, %v1804
    %v1808 = vadd.f32 %v1805, %v1770
    %v1809 = vadd.f32 %v1806, %v1771
    %v1810 = vadd.f32 %v1807, %v1772
    %v1811 = vlaneseq
    %v1812 = vshrl.u32 %v1811, 7
    %v1813 = vsub.s32 5, %v1812
    %v1814 = vrot.slane %v407, %v1813
    %vm1815 = vcmp.eq.s32.totalorder %v722, %v1814
    %vm1816 = vcmp.eq.s32.totalorder %v723, %v1814
    %vm1817 = vcmp.eq.s32.totalorder %v724, %v1814
    %v1818 = vsel %vm1815, 0.0, -1e+30
    %v1819 = vsel %vm1816, 0.0, -1e+30
    %v1820 = vsel %vm1817, 0.0, -1e+30
    %v1821 = vlaneseq
    %v1822 = vshrl.u32 %v1821, 7
    %v1823 = vsub.s32 2, %v1822
    %v1824 = vrot.slane %v1760, %v1823
    %v1825 = vadd.f32 %v812, %v1824
    %v1826 = vadd.f32 %v816, %v1824
    %v1827 = vadd.f32 %v820, %v1824
    %vm1828 = vcmp.gt.f32.partialorder %v1825, 0.0
    %vm1829 = vcmp.gt.f32.partialorder %v1826, 0.0
    %vm1830 = vcmp.gt.f32.partialorder %v1827, 0.0
    %v1831 = vmul.f32 %v1825, 0.01
    %v1832 = vmul.f32 %v1826, 0.01
    %v1833 = vmul.f32 %v1827, 0.01
    %v1834 = vsel %vm1828, %v1825, %v1831
    %v1835 = vsel %vm1829, %v1826, %v1832
    %v1836 = vsel %vm1830, %v1827, %v1833
    %v1837 = vadd.f32 %v1834, %v1818
    %v1838 = vadd.f32 %v1835, %v1819
    %v1839 = vadd.f32 %v1836, %v1820
    %v1840 = vlaneseq
    %v1841 = vshrl.u32 %v1840, 7
    %v1842 = vsub.s32 3, %v1841
    %v1843 = vrot.slane %v1760, %v1842
    %v1844 = vadd.f32 %v843, %v1843
    %v1845 = vadd.f32 %v847, %v1843
    %v1846 = vadd.f32 %v851, %v1843
    %vm1847 = vcmp.gt.f32.partialorder %v1844, 0.0
    %vm1848 = vcmp.gt.f32.partialorder %v1845, 0.0
    %vm1849 = vcmp.gt.f32.partialorder %v1846, 0.0
    %v1850 = vmul.f32 %v1844, 0.01
    %v1851 = vmul.f32 %v1845, 0.01
    %v1852 = vmul.f32 %v1846, 0.01
    %v1853 = vsel %vm1847, %v1844, %v1850
    %v1854 = vsel %vm1848, %v1845, %v1851
    %v1855 = vsel %vm1849, %v1846, %v1852
    %v1856 = vadd.f32 %v1853, %v1818
    %v1857 = vadd.f32 %v1854, %v1819
    %v1858 = vadd.f32 %v1855, %v1820
    %v1859 = vlaneseq
    %v1860 = vshrl.u32 %v1859, 7
    %v1861 = vsub.s32 4, %v1860
    %v1862 = vrot.slane %v407, %v1861
    %vm1863 = vcmp.eq.s32.totalorder %v722, %v1862
    %vm1864 = vcmp.eq.s32.totalorder %v723, %v1862
    %vm1865 = vcmp.eq.s32.totalorder %v724, %v1862
    %v1866 = vsel %vm1863, 0.0, -1e+30
    %v1867 = vsel %vm1864, 0.0, -1e+30
    %v1868 = vsel %vm1865, 0.0, -1e+30
    %v1869 = vlaneseq
    %v1870 = vshrl.u32 %v1869, 7
    %v1871 = vsub.s32 4, %v1870
    %v1872 = vrot.slane %v1760, %v1871
    %v1873 = vadd.f32 %v884, %v1872
    %v1874 = vadd.f32 %v888, %v1872
    %v1875 = vadd.f32 %v892, %v1872
    %vm1876 = vcmp.gt.f32.partialorder %v1873, 0.0
    %vm1877 = vcmp.gt.f32.partialorder %v1874, 0.0
    %vm1878 = vcmp.gt.f32.partialorder %v1875, 0.0
    %v1879 = vmul.f32 %v1873, 0.01
    %v1880 = vmul.f32 %v1874, 0.01
    %v1881 = vmul.f32 %v1875, 0.01
    %v1882 = vsel %vm1876, %v1873, %v1879
    %v1883 = vsel %vm1877, %v1874, %v1880
    %v1884 = vsel %vm1878, %v1875, %v1881
    %v1885 = vadd.f32 %v1882, %v1866
    %v1886 = vadd.f32 %v1883, %v1867
    %v1887 = vadd.f32 %v1884, %v1868
    %v1888 = vlaneseq
    %v1889 = vshrl.u32 %v1888, 7
    %v1890 = vsub.s32 5, %v1889
    %v1891 = vrot.slane %v1760, %v1890
    %v1892 = vadd.f32 %v915, %v1891
    %v1893 = vadd.f32 %v919, %v1891
    %v1894 = vadd.f32 %v923, %v1891
    %vm1895 = vcmp.gt.f32.partialorder %v1892, 0.0
    %vm1896 = vcmp.gt.f32.partialorder %v1893, 0.0
    %vm1897 = vcmp.gt.f32.partialorder %v1894, 0.0
    %v1898 = vmul.f32 %v1892, 0.01
    %v1899 = vmul.f32 %v1893, 0.01
    %v1900 = vmul.f32 %v1894, 0.01
    %v1901 = vsel %vm1895, %v1892, %v1898
    %v1902 = vsel %vm1896, %v1893, %v1899
    %v1903 = vsel %vm1897, %v1894, %v1900
    %v1904 = vadd.f32 %v1901, %v1866
    %v1905 = vadd.f32 %v1902, %v1867
    %v1906 = vadd.f32 %v1903, %v1868
    %vm1907 = vcmask 80896
    %v1908 = vsel %vm1907, %v1789, -inf
    %1909 = vmax.xlane.f32.xlu0 %v1908
    %v1910 = vpop.xlane.xlu0 %1909
    %v1911 = vsel %vm1907, %v1790, -inf
    %1912 = vmax.xlane.f32.xlu0 %v1911
    %v1913 = vpop.xlane.xlu0 %1912
    %v1914 = vsel %vm1907, %v1791, -inf
    %1915 = vmax.xlane.f32.xlu0 %v1914
    %v1916 = vpop.xlane.xlu0 %1915
    %v1917 = vsel %vm1907, %v1808, -inf
    %1918 = vmax.xlane.f32.xlu0 %v1917
    %v1919 = vpop.xlane.xlu0 %1918
    %v1920 = vsel %vm1907, %v1809, -inf
    %1921 = vmax.xlane.f32.xlu0 %v1920
    %v1922 = vpop.xlane.xlu0 %1921
    %v1923 = vsel %vm1907, %v1810, -inf
    %1924 = vmax.xlane.f32.xlu0 %v1923
    %v1925 = vpop.xlane.xlu0 %1924
    %v1926 = vsel %vm1907, %v1837, -inf
    %1927 = vmax.xlane.f32.xlu0 %v1926
    %v1928 = vpop.xlane.xlu0 %1927
    %v1929 = vsel %vm1907, %v1838, -inf
    %1930 = vmax.xlane.f32.xlu0 %v1929
    %v1931 = vpop.xlane.xlu0 %1930
    %v1932 = vsel %vm1907, %v1839, -inf
    %1933 = vmax.xlane.f32.xlu0 %v1932
    %v1934 = vpop.xlane.xlu0 %1933
    %v1935 = vsel %vm1907, %v1856, -inf
    %1936 = vmax.xlane.f32.xlu0 %v1935
    %v1937 = vpop.xlane.xlu0 %1936
    %v1938 = vsel %vm1907, %v1857, -inf
    %1939 = vmax.xlane.f32.xlu0 %v1938
    %v1940 = vpop.xlane.xlu0 %1939
    %v1941 = vsel %vm1907, %v1858, -inf
    %1942 = vmax.xlane.f32.xlu0 %v1941
    %v1943 = vpop.xlane.xlu0 %1942
    %v1944 = vsel %vm1907, %v1885, -inf
    %1945 = vmax.xlane.f32.xlu0 %v1944
    %v1946 = vpop.xlane.xlu0 %1945
    %v1947 = vsel %vm1907, %v1886, -inf
    %1948 = vmax.xlane.f32.xlu0 %v1947
    %v1949 = vpop.xlane.xlu0 %1948
    %v1950 = vsel %vm1907, %v1887, -inf
    %1951 = vmax.xlane.f32.xlu0 %v1950
    %v1952 = vpop.xlane.xlu0 %1951
    %v1953 = vsel %vm1907, %v1904, -inf
    %1954 = vmax.xlane.f32.xlu0 %v1953
    %v1955 = vpop.xlane.xlu0 %1954
    %v1956 = vsel %vm1907, %v1905, -inf
    %1957 = vmax.xlane.f32.xlu0 %v1956
    %v1958 = vpop.xlane.xlu0 %1957
    %v1959 = vsel %vm1907, %v1906, -inf
    %1960 = vmax.xlane.f32.xlu0 %v1959
    %v1961 = vpop.xlane.xlu0 %1960
    %v1962 = vmax.f32 %v1910, 0.0
    %v1963 = vmax.f32 %v1913, 0.0
    %v1964 = vmax.f32 %v1916, 0.0
    %v1965 = vmax.f32 %v1919, 0.0
    %v1966 = vmax.f32 %v1922, 0.0
    %v1967 = vmax.f32 %v1925, 0.0
    %v1968 = vmax.f32 %v1928, 0.0
    %v1969 = vmax.f32 %v1931, 0.0
    %v1970 = vmax.f32 %v1934, 0.0
    %v1971 = vmax.f32 %v1937, 0.0
    %v1972 = vmax.f32 %v1940, 0.0
    %v1973 = vmax.f32 %v1943, 0.0
    %v1974 = vmax.f32 %v1946, 0.0
    %v1975 = vmax.f32 %v1949, 0.0
    %v1976 = vmax.f32 %v1952, 0.0
    %v1977 = vmax.f32 %v1955, 0.0
    %v1978 = vmax.f32 %v1958, 0.0
    %v1979 = vmax.f32 %v1961, 0.0
    %v1980 = vsub.f32 %v1789, %v1962
    %v1981 = vsub.f32 %v1790, %v1963
    %v1982 = vsub.f32 %v1791, %v1964
    %v1983 = vsub.f32 %v1808, %v1965
    %v1984 = vsub.f32 %v1809, %v1966
    %v1985 = vsub.f32 %v1810, %v1967
    %v1986 = vsub.f32 %v1837, %v1968
    %v1987 = vsub.f32 %v1838, %v1969
    %v1988 = vsub.f32 %v1839, %v1970
    %v1989 = vsub.f32 %v1856, %v1971
    %v1990 = vsub.f32 %v1857, %v1972
    %v1991 = vsub.f32 %v1858, %v1973
    %v1992 = vsub.f32 %v1885, %v1974
    %v1993 = vsub.f32 %v1886, %v1975
    %v1994 = vsub.f32 %v1887, %v1976
    %v1995 = vsub.f32 %v1904, %v1977
    %v1996 = vsub.f32 %v1905, %v1978
    %v1997 = vsub.f32 %v1906, %v1979
    %v1998 = vmul.f32 %v1980, 1.442695
    %v1999 = vpow.pop %v1998
    %v2000 = vmul.f32 %v1981, 1.442695
    %v2001 = vpow.pop %v2000
    %v2002 = vmul.f32 %v1982, 1.442695
    %v2003 = vpow.pop %v2002
    %v2004 = vmul.f32 %v1983, 1.442695
    %v2005 = vpow.pop %v2004
    %v2006 = vmul.f32 %v1984, 1.442695
    %v2007 = vpow.pop %v2006
    %v2008 = vmul.f32 %v1985, 1.442695
    %v2009 = vpow.pop %v2008
    %v2010 = vmul.f32 %v1986, 1.442695
    %v2011 = vpow.pop %v2010
    %v2012 = vmul.f32 %v1987, 1.442695
    %v2013 = vpow.pop %v2012
    %v2014 = vmul.f32 %v1988, 1.442695
    %v2015 = vpow.pop %v2014
    %v2016 = vmul.f32 %v1989, 1.442695
    %v2017 = vpow.pop %v2016
    %v2018 = vmul.f32 %v1990, 1.442695
    %v2019 = vpow.pop %v2018
    %v2020 = vmul.f32 %v1991, 1.442695
    %v2021 = vpow.pop %v2020
    %v2022 = vmul.f32 %v1992, 1.442695
    %v2023 = vpow.pop %v2022
    %v2024 = vmul.f32 %v1993, 1.442695
    %v2025 = vpow.pop %v2024
    %v2026 = vmul.f32 %v1994, 1.442695
    %v2027 = vpow.pop %v2026
    %v2028 = vmul.f32 %v1995, 1.442695
    %v2029 = vpow.pop %v2028
    %v2030 = vmul.f32 %v1996, 1.442695
    %v2031 = vpow.pop %v2030
    %v2032 = vmul.f32 %v1997, 1.442695
    %v2033 = vpow.pop %v2032
    %v2034 = vsel %vm1907, %v1999, 0.0
    %2035 = vadd.xlane.f32.xlu0 %v2034
    %v2036 = vpop.xlane.xlu0 %2035
    %v2037 = vsel %vm1907, %v2001, 0.0
    %2038 = vadd.xlane.f32.xlu0 %v2037
    %v2039 = vpop.xlane.xlu0 %2038
    %v2040 = vsel %vm1907, %v2003, 0.0
    %2041 = vadd.xlane.f32.xlu0 %v2040
    %v2042 = vpop.xlane.xlu0 %2041
    %v2043 = vsel %vm1907, %v2005, 0.0
    %2044 = vadd.xlane.f32.xlu0 %v2043
    %v2045 = vpop.xlane.xlu0 %2044
    %v2046 = vsel %vm1907, %v2007, 0.0
    %2047 = vadd.xlane.f32.xlu0 %v2046
    %v2048 = vpop.xlane.xlu0 %2047
    %v2049 = vsel %vm1907, %v2009, 0.0
    %2050 = vadd.xlane.f32.xlu0 %v2049
    %v2051 = vpop.xlane.xlu0 %2050
    %v2052 = vsel %vm1907, %v2011, 0.0
    %2053 = vadd.xlane.f32.xlu0 %v2052
    %v2054 = vpop.xlane.xlu0 %2053
    %v2055 = vsel %vm1907, %v2013, 0.0
    %2056 = vadd.xlane.f32.xlu0 %v2055
    %v2057 = vpop.xlane.xlu0 %2056
    %v2058 = vsel %vm1907, %v2015, 0.0
    %2059 = vadd.xlane.f32.xlu0 %v2058
    %v2060 = vpop.xlane.xlu0 %2059
    %v2061 = vsel %vm1907, %v2017, 0.0
    %2062 = vadd.xlane.f32.xlu0 %v2061
    %v2063 = vpop.xlane.xlu0 %2062
    %v2064 = vsel %vm1907, %v2019, 0.0
    %2065 = vadd.xlane.f32.xlu0 %v2064
    %v2066 = vpop.xlane.xlu0 %2065
    %v2067 = vsel %vm1907, %v2021, 0.0
    %2068 = vadd.xlane.f32.xlu0 %v2067
    %v2069 = vpop.xlane.xlu0 %2068
    %v2070 = vsel %vm1907, %v2023, 0.0
    %2071 = vadd.xlane.f32.xlu0 %v2070
    %v2072 = vpop.xlane.xlu0 %2071
    %v2073 = vsel %vm1907, %v2025, 0.0
    %2074 = vadd.xlane.f32.xlu0 %v2073
    %v2075 = vpop.xlane.xlu0 %2074
    %v2076 = vsel %vm1907, %v2027, 0.0
    %2077 = vadd.xlane.f32.xlu0 %v2076
    %v2078 = vpop.xlane.xlu0 %2077
    %v2079 = vsel %vm1907, %v2029, 0.0
    %2080 = vadd.xlane.f32.xlu0 %v2079
    %v2081 = vpop.xlane.xlu0 %2080
    %v2082 = vsel %vm1907, %v2031, 0.0
    %2083 = vadd.xlane.f32.xlu0 %v2082
    %v2084 = vpop.xlane.xlu0 %2083
    %v2085 = vsel %vm1907, %v2033, 0.0
    %2086 = vadd.xlane.f32.xlu0 %v2085
    %v2087 = vpop.xlane.xlu0 %2086
    %vm2088 = vcmp.gt.f32.partialorder %v2036, 0.0
    %vm2089 = vcmp.gt.f32.partialorder %v2039, 0.0
    %vm2090 = vcmp.gt.f32.partialorder %v2042, 0.0
    %vm2091 = vcmp.gt.f32.partialorder %v2045, 0.0
    %vm2092 = vcmp.gt.f32.partialorder %v2048, 0.0
    %vm2093 = vcmp.gt.f32.partialorder %v2051, 0.0
    %vm2094 = vcmp.gt.f32.partialorder %v2054, 0.0
    %vm2095 = vcmp.gt.f32.partialorder %v2057, 0.0
    %vm2096 = vcmp.gt.f32.partialorder %v2060, 0.0
    %vm2097 = vcmp.gt.f32.partialorder %v2063, 0.0
    %vm2098 = vcmp.gt.f32.partialorder %v2066, 0.0
    %vm2099 = vcmp.gt.f32.partialorder %v2069, 0.0
    %vm2100 = vcmp.gt.f32.partialorder %v2072, 0.0
    %vm2101 = vcmp.gt.f32.partialorder %v2075, 0.0
    %vm2102 = vcmp.gt.f32.partialorder %v2078, 0.0
    %vm2103 = vcmp.gt.f32.partialorder %v2081, 0.0
    %vm2104 = vcmp.gt.f32.partialorder %v2084, 0.0
    %vm2105 = vcmp.gt.f32.partialorder %v2087, 0.0
    %v2106 = vsel %vm2088, %v2036, 1.0
    %v2107 = vsel %vm2089, %v2039, 1.0
    %v2108 = vsel %vm2090, %v2042, 1.0
    %v2109 = vsel %vm2091, %v2045, 1.0
    %v2110 = vsel %vm2092, %v2048, 1.0
    %v2111 = vsel %vm2093, %v2051, 1.0
    %v2112 = vsel %vm2094, %v2054, 1.0
    %v2113 = vsel %vm2095, %v2057, 1.0
    %v2114 = vsel %vm2096, %v2060, 1.0
    %v2115 = vsel %vm2097, %v2063, 1.0
    %v2116 = vsel %vm2098, %v2066, 1.0
    %v2117 = vsel %vm2099, %v2069, 1.0
    %v2118 = vsel %vm2100, %v2072, 1.0
    %v2119 = vsel %vm2101, %v2075, 1.0
    %v2120 = vsel %vm2102, %v2078, 1.0
    %v2121 = vsel %vm2103, %v2081, 1.0
    %v2122 = vsel %vm2104, %v2084, 1.0
    %v2123 = vsel %vm2105, %v2087, 1.0
    %v2124 = vrcp.pop %v2106
    %v2125 = vrcp.pop %v2107
    %v2126 = vrcp.pop %v2108
    %v2127 = vrcp.pop %v2109
    %v2128 = vrcp.pop %v2110
    %v2129 = vrcp.pop %v2111
    %v2130 = vrcp.pop %v2112
    %v2131 = vrcp.pop %v2113
    %v2132 = vrcp.pop %v2114
    %v2133 = vrcp.pop %v2115
    %v2134 = vrcp.pop %v2116
    %v2135 = vrcp.pop %v2117
    %v2136 = vrcp.pop %v2118
    %v2137 = vrcp.pop %v2119
    %v2138 = vrcp.pop %v2120
    %v2139 = vrcp.pop %v2121
    %v2140 = vrcp.pop %v2122
    %v2141 = vrcp.pop %v2123
    %v2142 = vmul.f32 %v1999, %v2124
    %v2143 = vmul.f32 %v2001, %v2125
    %v2144 = vmul.f32 %v2003, %v2126
    %v2145 = vmul.f32 %v2005, %v2127
    %v2146 = vmul.f32 %v2007, %v2128
    %v2147 = vmul.f32 %v2009, %v2129
    %v2148 = vmul.f32 %v2011, %v2130
    %v2149 = vmul.f32 %v2013, %v2131
    %v2150 = vmul.f32 %v2015, %v2132
    %v2151 = vmul.f32 %v2017, %v2133
    %v2152 = vmul.f32 %v2019, %v2134
    %v2153 = vmul.f32 %v2021, %v2135
    %v2154 = vmul.f32 %v2023, %v2136
    %v2155 = vmul.f32 %v2025, %v2137
    %v2156 = vmul.f32 %v2027, %v2138
    %v2157 = vmul.f32 %v2029, %v2139
    %v2158 = vmul.f32 %v2031, %v2140
    %v2159 = vmul.f32 %v2033, %v2141
    %v2161 = vsel %vm1907, %v2142, 0
    %v2164 = vsel %vm1907, %v2143, 0
    %v2167 = vsel %vm1907, %v2144, 0
    %v2170 = vsel %vm1907, %v2145, 0
    %v2173 = vsel %vm1907, %v2146, 0
    %v2176 = vsel %vm1907, %v2147, 0
    %v2179 = vsel %vm1907, %v2148, 0
    %v2182 = vsel %vm1907, %v2149, 0
    %v2185 = vsel %vm1907, %v2150, 0
    %v2188 = vsel %vm1907, %v2151, 0
    %v2191 = vsel %vm1907, %v2152, 0
    %v2194 = vsel %vm1907, %v2153, 0
    %v2197 = vsel %vm1907, %v2154, 0
    %v2200 = vsel %vm1907, %v2155, 0
    %v2203 = vsel %vm1907, %v2156, 0
    %v2206 = vsel %vm1907, %v2157, 0
    %v2209 = vsel %vm1907, %v2158, 0
    %v2212 = vsel %vm1907, %v2159, 0
    %vm2214 = vcmask 1041408
    %v2215 = vsel %vm2214, %v1684, 0
    %2217 = vmatprep.subr.mxu0 0.0
    %2218 = vmatpush1.msra.mxu0 %v1679
    %2219 = vmatprep.subr.mxu0 0.0
    %2220 = vmatpush1.msra.mxu0 %v2215
    %2221 = vmatprep.subr.mxu0 0.0
    %2222 = vmatpush1.msra.mxu0 0.0
    %2223 = vmatprep.subr.mxu0 0.0
    %2224 = vmatpush1.msra.mxu0 0.0
    %2225 = vmatprep.subr.mxu0 0.0
    %2226 = vmatpush1.msra.mxu0 0.0
    %2227 = vmatprep.subr.mxu0 0.0
    %2228 = vmatpush1.msra.mxu0 0.0
    %2229 = vmatprep.subr.mxu0 0.0
    %2230 = vmatpush1.msra.mxu0 0.0
    %2231 = vmatprep.subr.mxu0 0.0
    %2232 = vmatpush1.msra.mxu0 0.0
    %2233 = vmatprep.subr.mxu0 0.0
    %2234 = vmatpush1.msra.mxu0 0.0
    %2235 = vmatprep.subr.mxu0 0.0
    %2236 = vmatpush1.msra.mxu0 0.0
    %2237 = vmatprep.subr.mxu0 0.0
    %2238 = vmatpush1.msra.mxu0 0.0
    %2239 = vmatprep.subr.mxu0 0.0
    %2240 = vmatpush1.msra.mxu0 0.0
    %2241 = vmatprep.subr.mxu0 0.0
    %2242 = vmatpush1.msra.mxu0 0.0
    %2243 = vmatprep.subr.mxu0 0.0
    %2244 = vmatpush1.msra.mxu0 0.0
    %2245 = vmatprep.subr.mxu0 0.0
    %2246 = vmatpush1.msra.mxu0 0.0
    %2247 = vmatprep.subr.mxu0 0.0
    %2248 = vmatpush1.msra.mxu0 0.0
    %2249 = vmatprep.subr.mxu0 0.0
    %2250 = vmatpush1.msra.mxu0 0.0
    %2251 = vmatprep.subr.mxu0 0.0
    %2252 = vmatpush1.msra.mxu0 0.0
    %2253 = vmatprep.subr.mxu0 0.0
    %2254 = vmatpush1.msra.mxu0 0.0
    %2255 = vmatprep.subr.mxu0 0.0
    %2256 = vmatpush1.msra.mxu0 0.0
    %2257 = vmatprep.subr.mxu0 0.0
    %2258 = vmatpush1.msra.mxu0 0.0
    %2259 = vmatprep.subr.mxu0 0.0
    %2260 = vmatpush1.msra.mxu0 0.0
    %2261 = vmatprep.subr.mxu0 0.0
    %2262 = vmatpush1.msra.mxu0 0.0
    %2263 = vmatprep.subr.mxu0 0.0
    %2264 = vmatpush1.msra.mxu0 0.0
    %2265 = vmatprep.subr.mxu0 0.0
    %2266 = vmatpush1.msra.mxu0 0.0
    %2267 = vmatprep.subr.mxu0 0.0
    %2268 = vmatpush1.msra.mxu0 0.0
    %2269 = vmatprep.subr.mxu0 0.0
    %2270 = vmatpush1.msra.mxu0 0.0
    %2271 = vmatprep.subr.mxu0 0.0
    %2272 = vmatpush1.msra.mxu0 0.0
    %2273 = vmatprep.subr.mxu0 0.0
    %2274 = vmatpush1.msra.mxu0 0.0
    %2275 = vmatprep.subr.mxu0 0.0
    %2276 = vmatpush1.msra.mxu0 0.0
    %2277 = vmatprep.subr.mxu0 0.0
    %2278 = vmatpush1.msra.mxu0 0.0
    %2279 = vmatprep.subr.mxu0 0.0
    %2280 = vmatpush1.msra.mxu0 0.0
    %2281 = vmatprep.mubr.f32.mxu0 0.0
    %2282 = vmatmul.mubr.f32.gmra.mrb[0].mxu0 %v2161
    %v2283 = vpop.f32.mrb[0].mxu0
    %v2284 = vadd.f32 0.0, %v2283
    %v2285 = vpop.f32.mrb[0].mxu0
    %2286 = vmatprep.mubr.f32.mxu0 0.0
    %2287 = vmatmul.mubr.f32.gmra.mrb[0].mxu0 %v2164
    %v2288 = vpop.f32.mrb[0].mxu0
    %v2289 = vadd.f32 0.0, %v2288
    %v2290 = vpop.f32.mrb[0].mxu0
    %2291 = vmatprep.mubr.f32.mxu0 0.0
    %2292 = vmatmul.mubr.f32.gmra.mrb[0].mxu0 %v2167
    %v2293 = vpop.f32.mrb[0].mxu0
    %v2294 = vadd.f32 0.0, %v2293
    %v2295 = vpop.f32.mrb[0].mxu0
    %2296 = vmatprep.mubr.f32.mxu0 0.0
    %2297 = vmatmul.mubr.f32.gmra.mrb[0].mxu0 %v2170
    %v2298 = vpop.f32.mrb[0].mxu0
    %v2299 = vadd.f32 0.0, %v2298
    %v2300 = vpop.f32.mrb[0].mxu0
    %2301 = vmatprep.mubr.f32.mxu0 0.0
    %2302 = vmatmul.mubr.f32.gmra.mrb[0].mxu0 %v2173
    %v2303 = vpop.f32.mrb[0].mxu0
    %v2304 = vadd.f32 0.0, %v2303
    %v2305 = vpop.f32.mrb[0].mxu0
    %2306 = vmatprep.mubr.f32.mxu0 0.0
    %2307 = vmatmul.mubr.f32.gmra.mrb[0].mxu0 %v2176
    %v2308 = vpop.f32.mrb[0].mxu0
    %v2309 = vadd.f32 0.0, %v2308
    %v2310 = vpop.f32.mrb[0].mxu0
    %2311 = vmatprep.mubr.f32.mxu0 0.0
    %2312 = vmatmul.mubr.f32.gmra.mrb[0].mxu0 %v2179
    %v2313 = vpop.f32.mrb[0].mxu0
    %v2314 = vadd.f32 0.0, %v2313
    %v2315 = vpop.f32.mrb[0].mxu0
    %2316 = vmatprep.mubr.f32.mxu0 0.0
    %2317 = vmatmul.mubr.f32.gmra.mrb[0].mxu0 %v2182
    %v2318 = vpop.f32.mrb[0].mxu0
    %v2319 = vadd.f32 0.0, %v2318
    %v2320 = vpop.f32.mrb[0].mxu0
    %2321 = vmatprep.mubr.f32.mxu0 0.0
    %2322 = vmatmul.mubr.f32.gmra.mrb[0].mxu0 %v2185
    %v2323 = vpop.f32.mrb[0].mxu0
    %v2324 = vadd.f32 0.0, %v2323
    %v2325 = vpop.f32.mrb[0].mxu0
    %2326 = vmatprep.mubr.f32.mxu0 0.0
    %2327 = vmatmul.mubr.f32.gmra.mrb[0].mxu0 %v2188
    %v2328 = vpop.f32.mrb[0].mxu0
    %v2329 = vadd.f32 0.0, %v2328
    %v2330 = vpop.f32.mrb[0].mxu0
    %2331 = vmatprep.mubr.f32.mxu0 0.0
    %2332 = vmatmul.mubr.f32.gmra.mrb[0].mxu0 %v2191
    %v2333 = vpop.f32.mrb[0].mxu0
    %v2334 = vadd.f32 0.0, %v2333
    %v2335 = vpop.f32.mrb[0].mxu0
    %2336 = vmatprep.mubr.f32.mxu0 0.0
    %2337 = vmatmul.mubr.f32.gmra.mrb[0].mxu0 %v2194
    %v2338 = vpop.f32.mrb[0].mxu0
    %v2339 = vadd.f32 0.0, %v2338
    %v2340 = vpop.f32.mrb[0].mxu0
    %2341 = vmatprep.mubr.f32.mxu0 0.0
    %2342 = vmatmul.mubr.f32.gmra.mrb[0].mxu0 %v2197
    %v2343 = vpop.f32.mrb[0].mxu0
    %v2344 = vadd.f32 0.0, %v2343
    %v2345 = vpop.f32.mrb[0].mxu0
    %2346 = vmatprep.mubr.f32.mxu0 0.0
    %2347 = vmatmul.mubr.f32.gmra.mrb[0].mxu0 %v2200
    %v2348 = vpop.f32.mrb[0].mxu0
    %v2349 = vadd.f32 0.0, %v2348
    %v2350 = vpop.f32.mrb[0].mxu0
    %2351 = vmatprep.mubr.f32.mxu0 0.0
    %2352 = vmatmul.mubr.f32.gmra.mrb[0].mxu0 %v2203
    %v2353 = vpop.f32.mrb[0].mxu0
    %v2354 = vadd.f32 0.0, %v2353
    %v2355 = vpop.f32.mrb[0].mxu0
    %2356 = vmatprep.mubr.f32.mxu0 0.0
    %2357 = vmatmul.mubr.f32.gmra.mrb[0].mxu0 %v2206
    %v2358 = vpop.f32.mrb[0].mxu0
    %v2359 = vadd.f32 0.0, %v2358
    %v2360 = vpop.f32.mrb[0].mxu0
    %2361 = vmatprep.mubr.f32.mxu0 0.0
    %2362 = vmatmul.mubr.f32.gmra.mrb[0].mxu0 %v2209
    %v2363 = vpop.f32.mrb[0].mxu0
    %v2364 = vadd.f32 0.0, %v2363
    %v2365 = vpop.f32.mrb[0].mxu0
    %2366 = vmatprep.mubr.f32.mxu0 0.0
    %2367 = vmatmul.mubr.f32.gmra.mrb[0].mxu0 %v2212
    %v2368 = vpop.f32.mrb[0].mxu0
    %v2369 = vadd.f32 0.0, %v2368
    %v2370 = vpop.f32.mrb[0].mxu0
    %2371 = vdwg.mxu0
    %v2372 = vadd.f32 %v2284, %v2314
    %v2373 = vadd.f32 %v2289, %v2319
    %v2374 = vadd.f32 %v2294, %v2324
    %v2375 = vadd.f32 %v2372, %v2344
    %v2376 = vadd.f32 %v2373, %v2349
    %v2377 = vadd.f32 %v2374, %v2354
    %vm2378 = vcmp.gt.f32.partialorder %v2375, 0.0
    %vm2379 = vcmp.gt.f32.partialorder %v2376, 0.0
    %vm2380 = vcmp.gt.f32.partialorder %v2377, 0.0
    %v2381 = vmin.f32 %v2375, 0.0
    %v2382 = vmin.f32 %v2376, 0.0
    %v2383 = vmin.f32 %v2377, 0.0
    %v2384 = vmul.f32 %v2381, 1.442695
    %v2385 = vpow.pop %v2384
    %v2386 = vmul.f32 %v2382, 1.442695
    %v2387 = vpow.pop %v2386
    %v2388 = vmul.f32 %v2383, 1.442695
    %v2389 = vpow.pop %v2388
    %v2390 = vsub.f32 %v2385, 1.0
    %v2391 = vsub.f32 %v2387, 1.0
    %v2392 = vsub.f32 %v2389, 1.0
    %v2393 = vsel %vm2378, %v2375, %v2390
    %v2394 = vsel %vm2379, %v2376, %v2391
    %v2395 = vsel %vm2380, %v2377, %v2392
    %v2396 = vadd.f32 %v2299, %v2329
    %v2397 = vadd.f32 %v2304, %v2334
    %v2398 = vadd.f32 %v2309, %v2339
    %v2399 = vadd.f32 %v2396, %v2359
    %v2400 = vadd.f32 %v2397, %v2364
    %v2401 = vadd.f32 %v2398, %v2369
    %vm2402 = vcmp.gt.f32.partialorder %v2399, 0.0
    %vm2403 = vcmp.gt.f32.partialorder %v2400, 0.0
    %vm2404 = vcmp.gt.f32.partialorder %v2401, 0.0
    %v2405 = vmin.f32 %v2399, 0.0
    %v2406 = vmin.f32 %v2400, 0.0
    %v2407 = vmin.f32 %v2401, 0.0
    %v2408 = vmul.f32 %v2405, 1.442695
    %v2409 = vpow.pop %v2408
    %v2410 = vmul.f32 %v2406, 1.442695
    %v2411 = vpow.pop %v2410
    %v2412 = vmul.f32 %v2407, 1.442695
    %v2413 = vpow.pop %v2412
    %v2414 = vsub.f32 %v2409, 1.0
    %v2415 = vsub.f32 %v2411, 1.0
    %v2416 = vsub.f32 %v2413, 1.0
    %v2417 = vsel %vm2402, %v2399, %v2414
    %v2418 = vsel %vm2403, %v2400, %v2415
    %v2419 = vsel %vm2404, %v2401, %v2416
    %2423 = vrot.lane.b32.xlu0 %v2417, 32
    %v2424 = vpop.permute.xlu0 %2423
    %2425 = vrot.lane.b32.xlu0 %v2418, 32
    %v2426 = vpop.permute.xlu0 %2425
    %2427 = vrot.lane.b32.xlu0 %v2419, 32
    %v2428 = vpop.permute.xlu0 %2427
    %v2432 = vsel %vm641, %v2393, %v2424
    %v2433 = vsel %vm641, %v2394, %v2426
    %v2434 = vsel %vm641, %v2395, %v2428
    %v2435 = vld [vmem:[#allocation3 + $0x140] sm:$0xff]
    %v2436 = vld [vmem:[#allocation3 + $0x148] sm:$0xff]
    %v2437 = vld [vmem:[#allocation3 + $0x150] sm:$0xff]
    %v2438 = vld [vmem:[#allocation3 + $0x158] sm:$0xff]
    %v2439 = vld [vmem:[#allocation3 + $0x160] sm:$0xff]
    %v2440 = vld [vmem:[#allocation3 + $0x168] sm:$0xff]
    %v2441 = vld [vmem:[#allocation3 + $0x170] sm:$0xff]
    %v2442 = vld [vmem:[#allocation3 + $0x178] sm:$0xff]
    %v2443 = vld [vmem:[#allocation3 + $0x180] sm:$0x1]
    %v2444 = vlaneseq
    %v2445 = vshrl.u32 %v2444, 7
    %v2446 = vsub.s32 0, %v2445
    %v2447 = vrot.slane %v2443, %v2446
    %v2449 = vsel %vm58, %v1467, 0
    %v2452 = vsel %vm58, %v1468, 0
    %v2455 = vsel %vm58, %v1469, 0
    %v2458 = vsel %vm58, %v2432, 0
    %v2461 = vsel %vm58, %v2433, 0
    %v2464 = vsel %vm58, %v2434, 0
    %2466 = vmatprep.subr.mxu0 0.0
    %2467 = vmatpush1.msra.mxu0 %v2435
    %2468 = vmatprep.subr.mxu0 0.0
    %2469 = vmatpush1.msra.mxu0 %v2436
    %2470 = vmatprep.subr.mxu0 0.0
    %2471 = vmatpush1.msra.mxu0 %v2437
    %2472 = vmatprep.subr.mxu0 0.0
    %2473 = vmatpush1.msra.mxu0 %v2438
    %2474 = vmatprep.subr.mxu0 0.0
    %2475 = vmatpush1.msra.mxu0 %v2439
    %2476 = vmatprep.subr.mxu0 0.0
    %2477 = vmatpush1.msra.mxu0 %v2440
    %2478 = vmatprep.subr.mxu0 0.0
    %2479 = vmatpush1.msra.mxu0 %v2441
    %2480 = vmatprep.subr.mxu0 0.0
    %2481 = vmatpush1.msra.mxu0 %v2442
    %2482 = vmatprep.subr.mxu0 0.0
    %2483 = vmatpush1.msra.mxu0 0.0
    %2484 = vmatprep.subr.mxu0 0.0
    %2485 = vmatpush1.msra.mxu0 0.0
    %2486 = vmatprep.subr.mxu0 0.0
    %2487 = vmatpush1.msra.mxu0 0.0
    %2488 = vmatprep.subr.mxu0 0.0
    %2489 = vmatpush1.msra.mxu0 0.0
    %2490 = vmatprep.subr.mxu0 0.0
    %2491 = vmatpush1.msra.mxu0 0.0
    %2492 = vmatprep.subr.mxu0 0.0
    %2493 = vmatpush1.msra.mxu0 0.0
    %2494 = vmatprep.subr.mxu0 0.0
    %2495 = vmatpush1.msra.mxu0 0.0
    %2496 = vmatprep.subr.mxu0 0.0
    %2497 = vmatpush1.msra.mxu0 0.0
    %2498 = vmatprep.subr.mxu0 0.0
    %2499 = vmatpush1.msra.mxu0 0.0
    %2500 = vmatprep.subr.mxu0 0.0
    %2501 = vmatpush1.msra.mxu0 0.0
    %2502 = vmatprep.subr.mxu0 0.0
    %2503 = vmatpush1.msra.mxu0 0.0
    %2504 = vmatprep.subr.mxu0 0.0
    %2505 = vmatpush1.msra.mxu0 0.0
    %2506 = vmatprep.subr.mxu0 0.0
    %2507 = vmatpush1.msra.mxu0 0.0
    %2508 = vmatprep.subr.mxu0 0.0
    %2509 = vmatpush1.msra.mxu0 0.0
    %2510 = vmatprep.subr.mxu0 0.0
    %2511 = vmatpush1.msra.mxu0 0.0
    %2512 = vmatprep.subr.mxu0 0.0
    %2513 = vmatpush1.msra.mxu0 0.0
    %2514 = vmatprep.subr.mxu0 0.0
    %2515 = vmatpush1.msra.mxu0 0.0
    %2516 = vmatprep.subr.mxu0 0.0
    %2517 = vmatpush1.msra.mxu0 0.0
    %2518 = vmatprep.subr.mxu0 0.0
    %2519 = vmatpush1.msra.mxu0 0.0
    %2520 = vmatprep.subr.mxu0 0.0
    %2521 = vmatpush1.msra.mxu0 0.0
    %2522 = vmatprep.subr.mxu0 0.0
    %2523 = vmatpush1.msra.mxu0 0.0
    %2524 = vmatprep.subr.mxu0 0.0
    %2525 = vmatpush1.msra.mxu0 0.0
    %2526 = vmatprep.subr.mxu0 0.0
    %2527 = vmatpush1.msra.mxu0 0.0
    %2528 = vmatprep.subr.mxu0 0.0
    %2529 = vmatpush1.msra.mxu0 0.0
    %2530 = vmatprep.mubr.f32.mxu0 0.0
    %2531 = vmatmul.mubr.f32.gmra.mrb[0].mxu0 %v2449
    %v2532 = vpop.f32.mrb[0].mxu0
    %v2533 = vadd.f32 %v2447, %v2532
    %v2534 = vpop.f32.mrb[0].mxu0
    %2535 = vmatprep.mubr.f32.mxu0 0.0
    %2536 = vmatmul.mubr.f32.gmra.mrb[0].mxu0 %v2452
    %v2537 = vpop.f32.mrb[0].mxu0
    %v2538 = vadd.f32 %v2447, %v2537
    %v2539 = vpop.f32.mrb[0].mxu0
    %2540 = vmatprep.mubr.f32.mxu0 0.0
    %2541 = vmatmul.mubr.f32.gmra.mrb[0].mxu0 %v2455
    %v2542 = vpop.f32.mrb[0].mxu0
    %v2543 = vadd.f32 %v2447, %v2542
    %v2544 = vpop.f32.mrb[0].mxu0
    %2545 = vmatprep.mubr.f32.mxu0 0.0
    %2546 = vmatmul.mubr.f32.gmra.mrb[0].mxu0 %v2458
    %v2547 = vpop.f32.mrb[0].mxu0
    %v2548 = vadd.f32 %v2447, %v2547
    %v2549 = vpop.f32.mrb[0].mxu0
    %2550 = vmatprep.mubr.f32.mxu0 0.0
    %2551 = vmatmul.mubr.f32.gmra.mrb[0].mxu0 %v2461
    %v2552 = vpop.f32.mrb[0].mxu0
    %v2553 = vadd.f32 %v2447, %v2552
    %v2554 = vpop.f32.mrb[0].mxu0
    %2555 = vmatprep.mubr.f32.mxu0 0.0
    %2556 = vmatmul.mubr.f32.gmra.mrb[0].mxu0 %v2464
    %v2557 = vpop.f32.mrb[0].mxu0
    %v2558 = vadd.f32 %v2447, %v2557
    %v2559 = vpop.f32.mrb[0].mxu0
    %2560 = vdwg.mxu0
    %v2561 = vtanh.pop %v2533
    %v2562 = vtanh.pop %v2538
    %v2563 = vtanh.pop %v2543
    %v2564 = vtanh.pop %v2548
    %v2565 = vtanh.pop %v2553
    %v2566 = vtanh.pop %v2558
    %v2567 = vld [vmem:[#allocation3 + $0x188] sm:$0x1]
    %v2568 = vlaneseq
    %v2569 = vshrl.u32 %v2568, 7
    %v2570 = vsub.s32 0, %v2569
    %v2571 = vrot.slane %v2567, %v2570
    %v2572 = vmul.f32 %v2561, %v2571
    %v2573 = vmul.f32 %v2562, %v2571
    %v2574 = vmul.f32 %v2563, %v2571
    %v2575 = vmul.f32 %v2564, %v2571
    %v2576 = vmul.f32 %v2565, %v2571
    %v2577 = vmul.f32 %v2566, %v2571
    %2578 = vadd.xlane.f32.xlu0 %v2572
    %v2579 = vpop.xlane.xlu0 %2578
    %2580 = vadd.xlane.f32.xlu0 %v2573
    %v2581 = vpop.xlane.xlu0 %2580
    %2582 = vadd.xlane.f32.xlu0 %v2574
    %v2583 = vpop.xlane.xlu0 %2582
    %2584 = vadd.xlane.f32.xlu0 %v2575
    %v2585 = vpop.xlane.xlu0 %2584
    %2586 = vadd.xlane.f32.xlu0 %v2576
    %v2587 = vpop.xlane.xlu0 %2586
    %2588 = vadd.xlane.f32.xlu0 %v2577
    %v2589 = vpop.xlane.xlu0 %2588
    %v2590 = vld [vmem:[#allocation3 + $0x128] sm:$0xff]
    %v2591 = vld [vmem:[#allocation3 + $0x130] sm:$0xff]
    %v2592 = vld [vmem:[#allocation3 + $0x138] sm:$0xff]
    %v2594 = vsel %vm413, %v2590, 0
    %v2597 = vsel %vm413, %v2591, 0
    %v2600 = vsel %vm413, %v2592, 0
    %2602 = vmatprep.subr.mxu0 0.0
    %2603 = vmatpush1.msra.mxu0 %v2579
    %2604 = vmatprep.subr.mxu0 0.0
    %2605 = vmatpush1.msra.mxu0 %v2581
    %2606 = vmatprep.subr.mxu0 0.0
    %2607 = vmatpush1.msra.mxu0 %v2583
    %2608 = vmatprep.subr.mxu0 0.0
    %2609 = vmatpush1.msra.mxu0 0.0
    %2610 = vmatprep.subr.mxu0 0.0
    %2611 = vmatpush1.msra.mxu0 0.0
    %2612 = vmatprep.subr.mxu0 0.0
    %2613 = vmatpush1.msra.mxu0 0.0
    %2614 = vmatprep.subr.mxu0 0.0
    %2615 = vmatpush1.msra.mxu0 0.0
    %2616 = vmatprep.subr.mxu0 0.0
    %2617 = vmatpush1.msra.mxu0 0.0
    %2618 = vmatprep.subr.mxu0 0.0
    %2619 = vmatpush1.msra.mxu0 0.0
    %2620 = vmatprep.subr.mxu0 0.0
    %2621 = vmatpush1.msra.mxu0 0.0
    %2622 = vmatprep.subr.mxu0 0.0
    %2623 = vmatpush1.msra.mxu0 0.0
    %2624 = vmatprep.subr.mxu0 0.0
    %2625 = vmatpush1.msra.mxu0 0.0
    %2626 = vmatprep.subr.mxu0 0.0
    %2627 = vmatpush1.msra.mxu0 0.0
    %2628 = vmatprep.subr.mxu0 0.0
    %2629 = vmatpush1.msra.mxu0 0.0
    %2630 = vmatprep.subr.mxu0 0.0
    %2631 = vmatpush1.msra.mxu0 0.0
    %2632 = vmatprep.subr.mxu0 0.0
    %2633 = vmatpush1.msra.mxu0 0.0
    %2634 = vmatprep.subr.mxu0 0.0
    %2635 = vmatpush1.msra.mxu0 0.0
    %2636 = vmatprep.subr.mxu0 0.0
    %2637 = vmatpush1.msra.mxu0 0.0
    %2638 = vmatprep.subr.mxu0 0.0
    %2639 = vmatpush1.msra.mxu0 0.0
    %2640 = vmatprep.subr.mxu0 0.0
    %2641 = vmatpush1.msra.mxu0 0.0
    %2642 = vmatprep.subr.mxu0 0.0
    %2643 = vmatpush1.msra.mxu0 0.0
    %2644 = vmatprep.subr.mxu0 0.0
    %2645 = vmatpush1.msra.mxu0 0.0
    %2646 = vmatprep.subr.mxu0 0.0
    %2647 = vmatpush1.msra.mxu0 0.0
    %2648 = vmatprep.subr.mxu0 0.0
    %2649 = vmatpush1.msra.mxu0 0.0
    %2650 = vmatprep.subr.mxu0 0.0
    %2651 = vmatpush1.msra.mxu0 0.0
    %2652 = vmatprep.subr.mxu0 0.0
    %2653 = vmatpush1.msra.mxu0 0.0
    %2654 = vmatprep.subr.mxu0 0.0
    %2655 = vmatpush1.msra.mxu0 0.0
    %2656 = vmatprep.subr.mxu0 0.0
    %2657 = vmatpush1.msra.mxu0 0.0
    %2658 = vmatprep.subr.mxu0 0.0
    %2659 = vmatpush1.msra.mxu0 0.0
    %2660 = vmatprep.subr.mxu0 0.0
    %2661 = vmatpush1.msra.mxu0 0.0
    %2662 = vmatprep.subr.mxu0 0.0
    %2663 = vmatpush1.msra.mxu0 0.0
    %2664 = vmatprep.subr.mxu0 0.0
    %2665 = vmatpush1.msra.mxu0 0.0
    %2666 = vmatprep.mubr.f32.mxu0 0.0
    %2667 = vmatmul.mubr.f32.gmra.mrb[0].mxu0 %v2594
    %v2668 = vpop.f32.mrb[0].mxu0
    %v2669 = vadd.f32 0.0, %v2668
    %v2670 = vpop.f32.mrb[0].mxu0
    %2671 = vmatprep.mubr.f32.mxu0 0.0
    %2672 = vmatmul.mubr.f32.gmra.mrb[0].mxu0 %v2597
    %v2673 = vpop.f32.mrb[0].mxu0
    %v2674 = vadd.f32 0.0, %v2673
    %v2675 = vpop.f32.mrb[0].mxu0
    %2676 = vmatprep.mubr.f32.mxu0 0.0
    %2677 = vmatmul.mubr.f32.gmra.mrb[0].mxu0 %v2600
    %v2678 = vpop.f32.mrb[0].mxu0
    %v2679 = vadd.f32 0.0, %v2678
    %v2680 = vpop.f32.mrb[0].mxu0
    %2681 = vdwg.mxu0
    %2682 = vmatprep.subr.mxu0 0.0
    %2683 = vmatpush1.msra.mxu0 %v2585
    %2684 = vmatprep.subr.mxu0 0.0
    %2685 = vmatpush1.msra.mxu0 %v2587
    %2686 = vmatprep.subr.mxu0 0.0
    %2687 = vmatpush1.msra.mxu0 %v2589
    %2688 = vmatprep.subr.mxu0 0.0
    %2689 = vmatpush1.msra.mxu0 0.0
    %2690 = vmatprep.subr.mxu0 0.0
    %2691 = vmatpush1.msra.mxu0 0.0
    %2692 = vmatprep.subr.mxu0 0.0
    %2693 = vmatpush1.msra.mxu0 0.0
    %2694 = vmatprep.subr.mxu0 0.0
    %2695 = vmatpush1.msra.mxu0 0.0
    %2696 = vmatprep.subr.mxu0 0.0
    %2697 = vmatpush1.msra.mxu0 0.0
    %2698 = vmatprep.subr.mxu0 0.0
    %2699 = vmatpush1.msra.mxu0 0.0
    %2700 = vmatprep.subr.mxu0 0.0
    %2701 = vmatpush1.msra.mxu0 0.0
    %2702 = vmatprep.subr.mxu0 0.0
    %2703 = vmatpush1.msra.mxu0 0.0
    %2704 = vmatprep.subr.mxu0 0.0
    %2705 = vmatpush1.msra.mxu0 0.0
    %2706 = vmatprep.subr.mxu0 0.0
    %2707 = vmatpush1.msra.mxu0 0.0
    %2708 = vmatprep.subr.mxu0 0.0
    %2709 = vmatpush1.msra.mxu0 0.0
    %2710 = vmatprep.subr.mxu0 0.0
    %2711 = vmatpush1.msra.mxu0 0.0
    %2712 = vmatprep.subr.mxu0 0.0
    %2713 = vmatpush1.msra.mxu0 0.0
    %2714 = vmatprep.subr.mxu0 0.0
    %2715 = vmatpush1.msra.mxu0 0.0
    %2716 = vmatprep.subr.mxu0 0.0
    %2717 = vmatpush1.msra.mxu0 0.0
    %2718 = vmatprep.subr.mxu0 0.0
    %2719 = vmatpush1.msra.mxu0 0.0
    %2720 = vmatprep.subr.mxu0 0.0
    %2721 = vmatpush1.msra.mxu0 0.0
    %2722 = vmatprep.subr.mxu0 0.0
    %2723 = vmatpush1.msra.mxu0 0.0
    %2724 = vmatprep.subr.mxu0 0.0
    %2725 = vmatpush1.msra.mxu0 0.0
    %2726 = vmatprep.subr.mxu0 0.0
    %2727 = vmatpush1.msra.mxu0 0.0
    %2728 = vmatprep.subr.mxu0 0.0
    %2729 = vmatpush1.msra.mxu0 0.0
    %2730 = vmatprep.subr.mxu0 0.0
    %2731 = vmatpush1.msra.mxu0 0.0
    %2732 = vmatprep.subr.mxu0 0.0
    %2733 = vmatpush1.msra.mxu0 0.0
    %2734 = vmatprep.subr.mxu0 0.0
    %2735 = vmatpush1.msra.mxu0 0.0
    %2736 = vmatprep.subr.mxu0 0.0
    %2737 = vmatpush1.msra.mxu0 0.0
    %2738 = vmatprep.subr.mxu0 0.0
    %2739 = vmatpush1.msra.mxu0 0.0
    %2740 = vmatprep.subr.mxu0 0.0
    %2741 = vmatpush1.msra.mxu0 0.0
    %2742 = vmatprep.subr.mxu0 0.0
    %2743 = vmatpush1.msra.mxu0 0.0
    %2744 = vmatprep.subr.mxu0 0.0
    %2745 = vmatpush1.msra.mxu0 0.0
    %2746 = vmatprep.mubr.f32.mxu0 0.0
    %2747 = vmatmul.mubr.f32.gmra.mrb[0].mxu0 %v2594
    %v2748 = vpop.f32.mrb[0].mxu0
    %v2749 = vadd.f32 0.0, %v2748
    %v2750 = vpop.f32.mrb[0].mxu0
    %2751 = vmatprep.mubr.f32.mxu0 0.0
    %2752 = vmatmul.mubr.f32.gmra.mrb[0].mxu0 %v2597
    %v2753 = vpop.f32.mrb[0].mxu0
    %v2754 = vadd.f32 0.0, %v2753
    %v2755 = vpop.f32.mrb[0].mxu0
    %2756 = vmatprep.mubr.f32.mxu0 0.0
    %2757 = vmatmul.mubr.f32.gmra.mrb[0].mxu0 %v2600
    %v2758 = vpop.f32.mrb[0].mxu0
    %v2759 = vadd.f32 0.0, %v2758
    %v2760 = vpop.f32.mrb[0].mxu0
    %2761 = vdwg.mxu0
    %v2762 = vmax.f32 %v2669, %v2749
    %v2763 = vmax.f32 %v2674, %v2754
    %v2764 = vmax.f32 %v2679, %v2759
    %v2765 = vsub.f32 %v2669, %v2762
    %v2766 = vsub.f32 %v2674, %v2763
    %v2767 = vsub.f32 %v2679, %v2764
    %v2768 = vmul.f32 %v2765, 1.442695
    %v2769 = vpow.pop %v2768
    %v2770 = vmul.f32 %v2766, 1.442695
    %v2771 = vpow.pop %v2770
    %v2772 = vmul.f32 %v2767, 1.442695
    %v2773 = vpow.pop %v2772
    %v2774 = vsub.f32 %v2749, %v2762
    %v2775 = vsub.f32 %v2754, %v2763
    %v2776 = vsub.f32 %v2759, %v2764
    %v2777 = vmul.f32 %v2774, 1.442695
    %v2778 = vpow.pop %v2777
    %v2779 = vmul.f32 %v2775, 1.442695
    %v2780 = vpow.pop %v2779
    %v2781 = vmul.f32 %v2776, 1.442695
    %v2782 = vpow.pop %v2781
    %v2783 = vadd.f32 %v2769, %v2778
    %v2784 = vadd.f32 %v2771, %v2780
    %v2785 = vadd.f32 %v2773, %v2782
    %v2786 = vrcp.pop %v2783
    %v2787 = vrcp.pop %v2784
    %v2788 = vrcp.pop %v2785
    %v2789 = vmul.f32 %v2769, %v2786
    %v2790 = vmul.f32 %v2771, %v2787
    %v2791 = vmul.f32 %v2773, %v2788
    %2793 = vset.pattern.permute.xlu0 0
    %2794 = vperm.xlu0 %2793, %v2789
    %v2795 = vpop.permute.xlu0 %2794
    %2798 = vset.pattern.permute.xlu0 0
    %2799 = vperm.xlu0 %2798, %v2790
    %v2800 = vpop.permute.xlu0 %2799
    %2803 = vset.pattern.permute.xlu0 0
    %2804 = vperm.xlu0 %2803, %v2791
    %v2805 = vpop.permute.xlu0 %2804
    %v2807 = vmul.f32 %v2795, %v1467
    %v2808 = vmul.f32 %v2800, %v1468
    %v2809 = vmul.f32 %v2805, %v1469
    %v2810 = vmul.f32 %v2778, %v2786
    %v2811 = vmul.f32 %v2780, %v2787
    %v2812 = vmul.f32 %v2782, %v2788
    %2814 = vset.pattern.permute.xlu0 0
    %2815 = vperm.xlu0 %2814, %v2810
    %v2816 = vpop.permute.xlu0 %2815
    %2819 = vset.pattern.permute.xlu0 0
    %2820 = vperm.xlu0 %2819, %v2811
    %v2821 = vpop.permute.xlu0 %2820
    %2824 = vset.pattern.permute.xlu0 0
    %2825 = vperm.xlu0 %2824, %v2812
    %v2826 = vpop.permute.xlu0 %2825
    %v2828 = vmul.f32 %v2816, %v2432
    %v2829 = vmul.f32 %v2821, %v2433
    %v2830 = vmul.f32 %v2826, %v2434
    %v2831 = vadd.f32 %v2807, %v2828
    %v2832 = vadd.f32 %v2808, %v2829
    %v2833 = vadd.f32 %v2809, %v2830
    %v2834 = vld [vmem:[#allocation3 + $0x190] sm:$0xff]
    %v2835 = vld [vmem:[#allocation3 + $0x198] sm:$0xff]
    %v2836 = vld [vmem:[#allocation3 + $0x1a0] sm:$0xff]
    %v2837 = vld [vmem:[#allocation3 + $0x1a8] sm:$0xff]
    %v2838 = vld [vmem:[#allocation3 + $0x1b0] sm:$0xff]
    %v2839 = vld [vmem:[#allocation3 + $0x1b8] sm:$0xff]
    %v2840 = vld [vmem:[#allocation3 + $0x1c0] sm:$0xff]
    %v2841 = vld [vmem:[#allocation3 + $0x1c8] sm:$0xff]
    %v2843 = vsel %vm58, %v2831, 0
    %v2846 = vsel %vm58, %v2832, 0
    %v2849 = vsel %vm58, %v2833, 0
    %2851 = vmatprep.subr.mxu0 0.0
    %2852 = vmatpush1.msra.mxu0 %v2834
    %2853 = vmatprep.subr.mxu0 0.0
    %2854 = vmatpush1.msra.mxu0 %v2835
    %2855 = vmatprep.subr.mxu0 0.0
    %2856 = vmatpush1.msra.mxu0 %v2836
    %2857 = vmatprep.subr.mxu0 0.0
    %2858 = vmatpush1.msra.mxu0 %v2837
    %2859 = vmatprep.subr.mxu0 0.0
    %2860 = vmatpush1.msra.mxu0 %v2838
    %2861 = vmatprep.subr.mxu0 0.0
    %2862 = vmatpush1.msra.mxu0 %v2839
    %2863 = vmatprep.subr.mxu0 0.0
    %2864 = vmatpush1.msra.mxu0 %v2840
    %2865 = vmatprep.subr.mxu0 0.0
    %2866 = vmatpush1.msra.mxu0 %v2841
    %2867 = vmatprep.subr.mxu0 0.0
    %2868 = vmatpush1.msra.mxu0 0.0
    %2869 = vmatprep.subr.mxu0 0.0
    %2870 = vmatpush1.msra.mxu0 0.0
    %2871 = vmatprep.subr.mxu0 0.0
    %2872 = vmatpush1.msra.mxu0 0.0
    %2873 = vmatprep.subr.mxu0 0.0
    %2874 = vmatpush1.msra.mxu0 0.0
    %2875 = vmatprep.subr.mxu0 0.0
    %2876 = vmatpush1.msra.mxu0 0.0
    %2877 = vmatprep.subr.mxu0 0.0
    %2878 = vmatpush1.msra.mxu0 0.0
    %2879 = vmatprep.subr.mxu0 0.0
    %2880 = vmatpush1.msra.mxu0 0.0
    %2881 = vmatprep.subr.mxu0 0.0
    %2882 = vmatpush1.msra.mxu0 0.0
    %2883 = vmatprep.subr.mxu0 0.0
    %2884 = vmatpush1.msra.mxu0 0.0
    %2885 = vmatprep.subr.mxu0 0.0
    %2886 = vmatpush1.msra.mxu0 0.0
    %2887 = vmatprep.subr.mxu0 0.0
    %2888 = vmatpush1.msra.mxu0 0.0
    %2889 = vmatprep.subr.mxu0 0.0
    %2890 = vmatpush1.msra.mxu0 0.0
    %2891 = vmatprep.subr.mxu0 0.0
    %2892 = vmatpush1.msra.mxu0 0.0
    %2893 = vmatprep.subr.mxu0 0.0
    %2894 = vmatpush1.msra.mxu0 0.0
    %2895 = vmatprep.subr.mxu0 0.0
    %2896 = vmatpush1.msra.mxu0 0.0
    %2897 = vmatprep.subr.mxu0 0.0
    %2898 = vmatpush1.msra.mxu0 0.0
    %2899 = vmatprep.subr.mxu0 0.0
    %2900 = vmatpush1.msra.mxu0 0.0
    %2901 = vmatprep.subr.mxu0 0.0
    %2902 = vmatpush1.msra.mxu0 0.0
    %2903 = vmatprep.subr.mxu0 0.0
    %2904 = vmatpush1.msra.mxu0 0.0
    %2905 = vmatprep.subr.mxu0 0.0
    %2906 = vmatpush1.msra.mxu0 0.0
    %2907 = vmatprep.subr.mxu0 0.0
    %2908 = vmatpush1.msra.mxu0 0.0
    %2909 = vmatprep.subr.mxu0 0.0
    %2910 = vmatpush1.msra.mxu0 0.0
    %2911 = vmatprep.subr.mxu0 0.0
    %2912 = vmatpush1.msra.mxu0 0.0
    %2913 = vmatprep.subr.mxu0 0.0
    %2914 = vmatpush1.msra.mxu0 0.0
    %2915 = vmatprep.mubr.f32.mxu0 0.0
    %2916 = vmatmul.mubr.f32.gmra.mrb[0].mxu0 %v2843
    %v2917 = vpop.f32.mrb[0].mxu0
    %v2918 = vadd.f32 0.0, %v2917
    %v2919 = vpop.f32.mrb[0].mxu0
    %2920 = vmatprep.mubr.f32.mxu0 0.0
    %2921 = vmatmul.mubr.f32.gmra.mrb[0].mxu0 %v2846
    %v2922 = vpop.f32.mrb[0].mxu0
    %v2923 = vadd.f32 0.0, %v2922
    %v2924 = vpop.f32.mrb[0].mxu0
    %2925 = vmatprep.mubr.f32.mxu0 0.0
    %2926 = vmatmul.mubr.f32.gmra.mrb[0].mxu0 %v2849
    %v2927 = vpop.f32.mrb[0].mxu0
    %v2928 = vadd.f32 0.0, %v2927
    %v2929 = vpop.f32.mrb[0].mxu0
    %2930 = vdwg.mxu0
    %v2931 = vld [vmem:[#allocation3 + $0x1d0] sm:$0xff]
    %v2932 = vld [vmem:[#allocation3 + $0x1d8] sm:$0xff]
    %v2933 = vld [vmem:[#allocation3 + $0x1e0] sm:$0xff]
    %v2934 = vld [vmem:[#allocation3 + $0x1e8] sm:$0xff]
    %v2935 = vld [vmem:[#allocation3 + $0x1f0] sm:$0xff]
    %v2936 = vld [vmem:[#allocation3 + $0x1f8] sm:$0xff]
    %v2937 = vld [vmem:[#allocation3 + $0x200] sm:$0xff]
    %v2938 = vld [vmem:[#allocation3 + $0x208] sm:$0xff]
    %2939 = vmatprep.subr.mxu0 0.0
    %2940 = vmatpush1.msra.mxu0 %v2931
    %2941 = vmatprep.subr.mxu0 0.0
    %2942 = vmatpush1.msra.mxu0 %v2932
    %2943 = vmatprep.subr.mxu0 0.0
    %2944 = vmatpush1.msra.mxu0 %v2933
    %2945 = vmatprep.subr.mxu0 0.0
    %2946 = vmatpush1.msra.mxu0 %v2934
    %2947 = vmatprep.subr.mxu0 0.0
    %2948 = vmatpush1.msra.mxu0 %v2935
    %2949 = vmatprep.subr.mxu0 0.0
    %2950 = vmatpush1.msra.mxu0 %v2936
    %2951 = vmatprep.subr.mxu0 0.0
    %2952 = vmatpush1.msra.mxu0 %v2937
    %2953 = vmatprep.subr.mxu0 0.0
    %2954 = vmatpush1.msra.mxu0 %v2938
    %2955 = vmatprep.subr.mxu0 0.0
    %2956 = vmatpush1.msra.mxu0 0.0
    %2957 = vmatprep.subr.mxu0 0.0
    %2958 = vmatpush1.msra.mxu0 0.0
    %2959 = vmatprep.subr.mxu0 0.0
    %2960 = vmatpush1.msra.mxu0 0.0
    %2961 = vmatprep.subr.mxu0 0.0
    %2962 = vmatpush1.msra.mxu0 0.0
    %2963 = vmatprep.subr.mxu0 0.0
    %2964 = vmatpush1.msra.mxu0 0.0
    %2965 = vmatprep.subr.mxu0 0.0
    %2966 = vmatpush1.msra.mxu0 0.0
    %2967 = vmatprep.subr.mxu0 0.0
    %2968 = vmatpush1.msra.mxu0 0.0
    %2969 = vmatprep.subr.mxu0 0.0
    %2970 = vmatpush1.msra.mxu0 0.0
    %2971 = vmatprep.subr.mxu0 0.0
    %2972 = vmatpush1.msra.mxu0 0.0
    %2973 = vmatprep.subr.mxu0 0.0
    %2974 = vmatpush1.msra.mxu0 0.0
    %2975 = vmatprep.subr.mxu0 0.0
    %2976 = vmatpush1.msra.mxu0 0.0
    %2977 = vmatprep.subr.mxu0 0.0
    %2978 = vmatpush1.msra.mxu0 0.0
    %2979 = vmatprep.subr.mxu0 0.0
    %2980 = vmatpush1.msra.mxu0 0.0
    %2981 = vmatprep.subr.mxu0 0.0
    %2982 = vmatpush1.msra.mxu0 0.0
    %2983 = vmatprep.subr.mxu0 0.0
    %2984 = vmatpush1.msra.mxu0 0.0
    %2985 = vmatprep.subr.mxu0 0.0
    %2986 = vmatpush1.msra.mxu0 0.0
    %2987 = vmatprep.subr.mxu0 0.0
    %2988 = vmatpush1.msra.mxu0 0.0
    %2989 = vmatprep.subr.mxu0 0.0
    %2990 = vmatpush1.msra.mxu0 0.0
    %2991 = vmatprep.subr.mxu0 0.0
    %2992 = vmatpush1.msra.mxu0 0.0
    %2993 = vmatprep.subr.mxu0 0.0
    %2994 = vmatpush1.msra.mxu0 0.0
    %2995 = vmatprep.subr.mxu0 0.0
    %2996 = vmatpush1.msra.mxu0 0.0
    %2997 = vmatprep.subr.mxu0 0.0
    %2998 = vmatpush1.msra.mxu0 0.0
    %2999 = vmatprep.subr.mxu0 0.0
    %3000 = vmatpush1.msra.mxu0 0.0
    %3001 = vmatprep.subr.mxu0 0.0
    %3002 = vmatpush1.msra.mxu0 0.0
    %3003 = vmatprep.mubr.f32.mxu0 0.0
    %3004 = vmatmul.mubr.f32.gmra.mrb[0].mxu0 %v2843
    %v3005 = vpop.f32.mrb[0].mxu0
    %v3006 = vadd.f32 0.0, %v3005
    %v3007 = vpop.f32.mrb[0].mxu0
    %3008 = vmatprep.mubr.f32.mxu0 0.0
    %3009 = vmatmul.mubr.f32.gmra.mrb[0].mxu0 %v2846
    %v3010 = vpop.f32.mrb[0].mxu0
    %v3011 = vadd.f32 0.0, %v3010
    %v3012 = vpop.f32.mrb[0].mxu0
    %3013 = vmatprep.mubr.f32.mxu0 0.0
    %3014 = vmatmul.mubr.f32.gmra.mrb[0].mxu0 %v2849
    %v3015 = vpop.f32.mrb[0].mxu0
    %v3016 = vadd.f32 0.0, %v3015
    %v3017 = vpop.f32.mrb[0].mxu0
    %3018 = vdwg.mxu0
    %v3019 = vld [vmem:[#allocation3 + $0x210] sm:$0xff]
    %v3020 = vld [vmem:[#allocation3 + $0x218] sm:$0xff]
    %v3021 = vld [vmem:[#allocation3 + $0x220] sm:$0xff]
    %v3022 = vld [vmem:[#allocation3 + $0x228] sm:$0xff]
    %v3023 = vld [vmem:[#allocation3 + $0x230] sm:$0xff]
    %v3024 = vld [vmem:[#allocation3 + $0x238] sm:$0xff]
    %v3025 = vld [vmem:[#allocation3 + $0x240] sm:$0xff]
    %v3026 = vld [vmem:[#allocation3 + $0x248] sm:$0xff]
    %3027 = vmatprep.subr.mxu0 0.0
    %3028 = vmatpush1.msra.mxu0 %v3019
    %3029 = vmatprep.subr.mxu0 0.0
    %3030 = vmatpush1.msra.mxu0 %v3020
    %3031 = vmatprep.subr.mxu0 0.0
    %3032 = vmatpush1.msra.mxu0 %v3021
    %3033 = vmatprep.subr.mxu0 0.0
    %3034 = vmatpush1.msra.mxu0 %v3022
    %3035 = vmatprep.subr.mxu0 0.0
    %3036 = vmatpush1.msra.mxu0 %v3023
    %3037 = vmatprep.subr.mxu0 0.0
    %3038 = vmatpush1.msra.mxu0 %v3024
    %3039 = vmatprep.subr.mxu0 0.0
    %3040 = vmatpush1.msra.mxu0 %v3025
    %3041 = vmatprep.subr.mxu0 0.0
    %3042 = vmatpush1.msra.mxu0 %v3026
    %3043 = vmatprep.subr.mxu0 0.0
    %3044 = vmatpush1.msra.mxu0 0.0
    %3045 = vmatprep.subr.mxu0 0.0
    %3046 = vmatpush1.msra.mxu0 0.0
    %3047 = vmatprep.subr.mxu0 0.0
    %3048 = vmatpush1.msra.mxu0 0.0
    %3049 = vmatprep.subr.mxu0 0.0
    %3050 = vmatpush1.msra.mxu0 0.0
    %3051 = vmatprep.subr.mxu0 0.0
    %3052 = vmatpush1.msra.mxu0 0.0
    %3053 = vmatprep.subr.mxu0 0.0
    %3054 = vmatpush1.msra.mxu0 0.0
    %3055 = vmatprep.subr.mxu0 0.0
    %3056 = vmatpush1.msra.mxu0 0.0
    %3057 = vmatprep.subr.mxu0 0.0
    %3058 = vmatpush1.msra.mxu0 0.0
    %3059 = vmatprep.subr.mxu0 0.0
    %3060 = vmatpush1.msra.mxu0 0.0
    %3061 = vmatprep.subr.mxu0 0.0
    %3062 = vmatpush1.msra.mxu0 0.0
    %3063 = vmatprep.subr.mxu0 0.0
    %3064 = vmatpush1.msra.mxu0 0.0
    %3065 = vmatprep.subr.mxu0 0.0
    %3066 = vmatpush1.msra.mxu0 0.0
    %3067 = vmatprep.subr.mxu0 0.0
    %3068 = vmatpush1.msra.mxu0 0.0
    %3069 = vmatprep.subr.mxu0 0.0
    %3070 = vmatpush1.msra.mxu0 0.0
    %3071 = vmatprep.subr.mxu0 0.0
    %3072 = vmatpush1.msra.mxu0 0.0
    %3073 = vmatprep.subr.mxu0 0.0
    %3074 = vmatpush1.msra.mxu0 0.0
    %3075 = vmatprep.subr.mxu0 0.0
    %3076 = vmatpush1.msra.mxu0 0.0
    %3077 = vmatprep.subr.mxu0 0.0
    %3078 = vmatpush1.msra.mxu0 0.0
    %3079 = vmatprep.subr.mxu0 0.0
    %3080 = vmatpush1.msra.mxu0 0.0
    %3081 = vmatprep.subr.mxu0 0.0
    %3082 = vmatpush1.msra.mxu0 0.0
    %3083 = vmatprep.subr.mxu0 0.0
    %3084 = vmatpush1.msra.mxu0 0.0
    %3085 = vmatprep.subr.mxu0 0.0
    %3086 = vmatpush1.msra.mxu0 0.0
    %3087 = vmatprep.subr.mxu0 0.0
    %3088 = vmatpush1.msra.mxu0 0.0
    %3089 = vmatprep.subr.mxu0 0.0
    %3090 = vmatpush1.msra.mxu0 0.0
    %3091 = vmatprep.mubr.f32.mxu0 0.0
    %3092 = vmatmul.mubr.f32.gmra.mrb[0].mxu0 %v2843
    %v3093 = vpop.f32.mrb[0].mxu0
    %v3094 = vadd.f32 0.0, %v3093
    %v3095 = vpop.f32.mrb[0].mxu0
    %3096 = vmatprep.mubr.f32.mxu0 0.0
    %3097 = vmatmul.mubr.f32.gmra.mrb[0].mxu0 %v2846
    %v3098 = vpop.f32.mrb[0].mxu0
    %v3099 = vadd.f32 0.0, %v3098
    %v3100 = vpop.f32.mrb[0].mxu0
    %3101 = vmatprep.mubr.f32.mxu0 0.0
    %3102 = vmatmul.mubr.f32.gmra.mrb[0].mxu0 %v2849
    %v3103 = vpop.f32.mrb[0].mxu0
    %v3104 = vadd.f32 0.0, %v3103
    %v3105 = vpop.f32.mrb[0].mxu0
    %3106 = vdwg.mxu0
    %v3107 = vld [vmem:[%s5] sm:$0xff]
    %v3108 = vlaneseq
    %v3109 = vand.u32 %v3108, 127
    %3110 = vset.pattern.permute.xlu0 0
    %3111 = vperm.xlu0 %3110, %v3107
    %v3112 = vpop.permute.xlu0 %3111
    %vm3113 = vcmp.eq.s32.totalorder %v3109, %v3112
    %v3114 = vsel %vm3113, 1, 0
    %v3115 = vcvt.s32.f32 %v3114
    %v3116 = vadd.f32 %v3115, 0.0
    %v3117 = vadd.s32 %v3107, 32
    %3118 = vset.pattern.permute.xlu0 1
    %3119 = vperm.xlu0 %3118, %v3117
    %v3120 = vpop.permute.xlu0 %3119
    %vm3121 = vcmp.eq.s32.totalorder %v3109, %v3120
    %v3122 = vsel %vm3121, 1, 0
    %v3123 = vcvt.s32.f32 %v3122
    %v3124 = vadd.f32 %v3116, %v3123
    %v3125 = vadd.s32 %v3107, 64
    %3126 = vset.pattern.permute.xlu0 2
    %3127 = vperm.xlu0 %3126, %v3125
    %v3128 = vpop.permute.xlu0 %3127
    %vm3129 = vcmp.eq.s32.totalorder %v3109, %v3128
    %v3130 = vsel %vm3129, 1, 0
    %v3131 = vcvt.s32.f32 %v3130
    %v3132 = vadd.f32 %v3124, %v3131
    %v3133 = vld [vmem:[#allocation3 + $0x250] sm:$0x1]
    %v3134 = vlaneseq
    %v3135 = vshrl.u32 %v3134, 7
    %v3136 = vsub.s32 0, %v3135
    %v3137 = vrot.slane %v3133, %v3136
    %vm3138 = vcmask 588800
    %v3140 = vsel %vm3138, %v3132, 0
    %3142 = vmatprep.subr.mxu0 0.0
    %3143 = vmatpush1.msra.mxu0 %v2918
    %3144 = vmatprep.subr.mxu0 0.0
    %3145 = vmatpush1.msra.mxu0 %v2923
    %3146 = vmatprep.subr.mxu0 0.0
    %3147 = vmatpush1.msra.mxu0 %v2928
    %3148 = vmatprep.subr.mxu0 0.0
    %3149 = vmatpush1.msra.mxu0 %v3006
    %3150 = vmatprep.subr.mxu0 0.0
    %3151 = vmatpush1.msra.mxu0 %v3011
    %3152 = vmatprep.subr.mxu0 0.0
    %3153 = vmatpush1.msra.mxu0 %v3016
    %3154 = vmatprep.subr.mxu0 0.0
    %3155 = vmatpush1.msra.mxu0 %v3094
    %3156 = vmatprep.subr.mxu0 0.0
    %3157 = vmatpush1.msra.mxu0 %v3099
    %3158 = vmatprep.subr.mxu0 0.0
    %3159 = vmatpush1.msra.mxu0 %v3104
    %3160 = vmatprep.subr.mxu0 0.0
    %3161 = vmatpush1.msra.mxu0 0.0
    %3162 = vmatprep.subr.mxu0 0.0
    %3163 = vmatpush1.msra.mxu0 0.0
    %3164 = vmatprep.subr.mxu0 0.0
    %3165 = vmatpush1.msra.mxu0 0.0
    %3166 = vmatprep.subr.mxu0 0.0
    %3167 = vmatpush1.msra.mxu0 0.0
    %3168 = vmatprep.subr.mxu0 0.0
    %3169 = vmatpush1.msra.mxu0 0.0
    %3170 = vmatprep.subr.mxu0 0.0
    %3171 = vmatpush1.msra.mxu0 0.0
    %3172 = vmatprep.subr.mxu0 0.0
    %3173 = vmatpush1.msra.mxu0 0.0
    %3174 = vmatprep.subr.mxu0 0.0
    %3175 = vmatpush1.msra.mxu0 0.0
    %3176 = vmatprep.subr.mxu0 0.0
    %3177 = vmatpush1.msra.mxu0 0.0
    %3178 = vmatprep.subr.mxu0 0.0
    %3179 = vmatpush1.msra.mxu0 0.0
    %3180 = vmatprep.subr.mxu0 0.0
    %3181 = vmatpush1.msra.mxu0 0.0
    %3182 = vmatprep.subr.mxu0 0.0
    %3183 = vmatpush1.msra.mxu0 0.0
    %3184 = vmatprep.subr.mxu0 0.0
    %3185 = vmatpush1.msra.mxu0 0.0
    %3186 = vmatprep.subr.mxu0 0.0
    %3187 = vmatpush1.msra.mxu0 0.0
    %3188 = vmatprep.subr.mxu0 0.0
    %3189 = vmatpush1.msra.mxu0 0.0
    %3190 = vmatprep.subr.mxu0 0.0
    %3191 = vmatpush1.msra.mxu0 0.0
    %3192 = vmatprep.subr.mxu0 0.0
    %3193 = vmatpush1.msra.mxu0 0.0
    %3194 = vmatprep.subr.mxu0 0.0
    %3195 = vmatpush1.msra.mxu0 0.0
    %3196 = vmatprep.subr.mxu0 0.0
    %3197 = vmatpush1.msra.mxu0 0.0
    %3198 = vmatprep.subr.mxu0 0.0
    %3199 = vmatpush1.msra.mxu0 0.0
    %3200 = vmatprep.subr.mxu0 0.0
    %3201 = vmatpush1.msra.mxu0 0.0
    %3202 = vmatprep.subr.mxu0 0.0
    %3203 = vmatpush1.msra.mxu0 0.0
    %3204 = vmatprep.subr.mxu0 0.0
    %3205 = vmatpush1.msra.mxu0 0.0
    %3206 = vmatprep.mubr.f32.mxu0 0.0
    %3207 = vmatmul.mubr.f32.gmra.mrb[0].mxu0 %v3140
    %v3208 = vpop.f32.mrb[0].mxu0
    %v3209 = vadd.f32 %v3137, %v3208
    %v3210 = vpop.f32.mrb[0].mxu0
    %3211 = vdwg.mxu0
    %v3212 = vmax.f32 %v3209, 0.0
    %v3213 = vld [vmem:[#allocation3 + $0x258] sm:$0xff]
    %v3214 = vld [vmem:[#allocation3 + $0x260] sm:$0xff]
    %v3215 = vld [vmem:[#allocation3 + $0x268] sm:$0xff]
    %v3216 = vld [vmem:[#allocation3 + $0x270] sm:$0xff]
    %v3217 = vld [vmem:[#allocation3 + $0x278] sm:$0xff]
    %v3218 = vld [vmem:[#allocation3 + $0x280] sm:$0xff]
    %v3219 = vld [vmem:[#allocation3 + $0x288] sm:$0xff]
    %v3220 = vld [vmem:[#allocation3 + $0x290] sm:$0xff]
    %v3221 = vld [vmem:[#allocation3 + $0x298] sm:$0x1]
    %v3222 = vlaneseq
    %v3223 = vshrl.u32 %v3222, 7
    %v3224 = vsub.s32 0, %v3223
    %v3225 = vrot.slane %v3221, %v3224
    %v3227 = vsel %vm58, %v3212, 0
    %3229 = vmatprep.subr.mxu0 0.0
    %3230 = vmatpush1.msra.mxu0 %v3213
    %3231 = vmatprep.subr.mxu0 0.0
    %3232 = vmatpush1.msra.mxu0 %v3214
    %3233 = vmatprep.subr.mxu0 0.0
    %3234 = vmatpush1.msra.mxu0 %v3215
    %3235 = vmatprep.subr.mxu0 0.0
    %3236 = vmatpush1.msra.mxu0 %v3216
    %3237 = vmatprep.subr.mxu0 0.0
    %3238 = vmatpush1.msra.mxu0 %v3217
    %3239 = vmatprep.subr.mxu0 0.0
    %3240 = vmatpush1.msra.mxu0 %v3218
    %3241 = vmatprep.subr.mxu0 0.0
    %3242 = vmatpush1.msra.mxu0 %v3219
    %3243 = vmatprep.subr.mxu0 0.0
    %3244 = vmatpush1.msra.mxu0 %v3220
    %3245 = vmatprep.subr.mxu0 0.0
    %3246 = vmatpush1.msra.mxu0 0.0
    %3247 = vmatprep.subr.mxu0 0.0
    %3248 = vmatpush1.msra.mxu0 0.0
    %3249 = vmatprep.subr.mxu0 0.0
    %3250 = vmatpush1.msra.mxu0 0.0
    %3251 = vmatprep.subr.mxu0 0.0
    %3252 = vmatpush1.msra.mxu0 0.0
    %3253 = vmatprep.subr.mxu0 0.0
    %3254 = vmatpush1.msra.mxu0 0.0
    %3255 = vmatprep.subr.mxu0 0.0
    %3256 = vmatpush1.msra.mxu0 0.0
    %3257 = vmatprep.subr.mxu0 0.0
    %3258 = vmatpush1.msra.mxu0 0.0
    %3259 = vmatprep.subr.mxu0 0.0
    %3260 = vmatpush1.msra.mxu0 0.0
    %3261 = vmatprep.subr.mxu0 0.0
    %3262 = vmatpush1.msra.mxu0 0.0
    %3263 = vmatprep.subr.mxu0 0.0
    %3264 = vmatpush1.msra.mxu0 0.0
    %3265 = vmatprep.subr.mxu0 0.0
    %3266 = vmatpush1.msra.mxu0 0.0
    %3267 = vmatprep.subr.mxu0 0.0
    %3268 = vmatpush1.msra.mxu0 0.0
    %3269 = vmatprep.subr.mxu0 0.0
    %3270 = vmatpush1.msra.mxu0 0.0
    %3271 = vmatprep.subr.mxu0 0.0
    %3272 = vmatpush1.msra.mxu0 0.0
    %3273 = vmatprep.subr.mxu0 0.0
    %3274 = vmatpush1.msra.mxu0 0.0
    %3275 = vmatprep.subr.mxu0 0.0
    %3276 = vmatpush1.msra.mxu0 0.0
    %3277 = vmatprep.subr.mxu0 0.0
    %3278 = vmatpush1.msra.mxu0 0.0
    %3279 = vmatprep.subr.mxu0 0.0
    %3280 = vmatpush1.msra.mxu0 0.0
    %3281 = vmatprep.subr.mxu0 0.0
    %3282 = vmatpush1.msra.mxu0 0.0
    %3283 = vmatprep.subr.mxu0 0.0
    %3284 = vmatpush1.msra.mxu0 0.0
    %3285 = vmatprep.subr.mxu0 0.0
    %3286 = vmatpush1.msra.mxu0 0.0
    %3287 = vmatprep.subr.mxu0 0.0
    %3288 = vmatpush1.msra.mxu0 0.0
    %3289 = vmatprep.subr.mxu0 0.0
    %3290 = vmatpush1.msra.mxu0 0.0
    %3291 = vmatprep.subr.mxu0 0.0
    %3292 = vmatpush1.msra.mxu0 0.0
    %3293 = vmatprep.mubr.f32.mxu0 0.0
    %3294 = vmatmul.mubr.f32.gmra.mrb[0].mxu0 %v3227
    %v3295 = vpop.f32.mrb[0].mxu0
    %v3296 = vadd.f32 %v3225, %v3295
    %v3297 = vpop.f32.mrb[0].mxu0
    %3298 = vdwg.mxu0
    %v3299 = vmax.f32 %v3296, 0.0
    %v3300 = vld [vmem:[#allocation3 + $0x2a0] sm:$0xff]
    %v3301 = vld [vmem:[#allocation3 + $0x2a8] sm:$0xff]
    %v3302 = vld [vmem:[#allocation3 + $0x2b0] sm:$0x1]
    %v3303 = vlaneseq
    %v3304 = vshrl.u32 %v3303, 7
    %v3305 = vsub.s32 0, %v3304
    %v3306 = vrot.slane %v3302, %v3305
    %v3308 = vsel %vm66, %v3299, 0
    %3310 = vmatprep.subr.mxu0 0.0
    %3311 = vmatpush1.msra.mxu0 %v3300
    %3312 = vmatprep.subr.mxu0 0.0
    %3313 = vmatpush1.msra.mxu0 %v3301
    %3314 = vmatprep.subr.mxu0 0.0
    %3315 = vmatpush1.msra.mxu0 0.0
    %3316 = vmatprep.subr.mxu0 0.0
    %3317 = vmatpush1.msra.mxu0 0.0
    %3318 = vmatprep.subr.mxu0 0.0
    %3319 = vmatpush1.msra.mxu0 0.0
    %3320 = vmatprep.subr.mxu0 0.0
    %3321 = vmatpush1.msra.mxu0 0.0
    %3322 = vmatprep.subr.mxu0 0.0
    %3323 = vmatpush1.msra.mxu0 0.0
    %3324 = vmatprep.subr.mxu0 0.0
    %3325 = vmatpush1.msra.mxu0 0.0
    %3326 = vmatprep.subr.mxu0 0.0
    %3327 = vmatpush1.msra.mxu0 0.0
    %3328 = vmatprep.subr.mxu0 0.0
    %3329 = vmatpush1.msra.mxu0 0.0
    %3330 = vmatprep.subr.mxu0 0.0
    %3331 = vmatpush1.msra.mxu0 0.0
    %3332 = vmatprep.subr.mxu0 0.0
    %3333 = vmatpush1.msra.mxu0 0.0
    %3334 = vmatprep.subr.mxu0 0.0
    %3335 = vmatpush1.msra.mxu0 0.0
    %3336 = vmatprep.subr.mxu0 0.0
    %3337 = vmatpush1.msra.mxu0 0.0
    %3338 = vmatprep.subr.mxu0 0.0
    %3339 = vmatpush1.msra.mxu0 0.0
    %3340 = vmatprep.subr.mxu0 0.0
    %3341 = vmatpush1.msra.mxu0 0.0
    %3342 = vmatprep.subr.mxu0 0.0
    %3343 = vmatpush1.msra.mxu0 0.0
    %3344 = vmatprep.subr.mxu0 0.0
    %3345 = vmatpush1.msra.mxu0 0.0
    %3346 = vmatprep.subr.mxu0 0.0
    %3347 = vmatpush1.msra.mxu0 0.0
    %3348 = vmatprep.subr.mxu0 0.0
    %3349 = vmatpush1.msra.mxu0 0.0
    %3350 = vmatprep.subr.mxu0 0.0
    %3351 = vmatpush1.msra.mxu0 0.0
    %3352 = vmatprep.subr.mxu0 0.0
    %3353 = vmatpush1.msra.mxu0 0.0
    %3354 = vmatprep.subr.mxu0 0.0
    %3355 = vmatpush1.msra.mxu0 0.0
    %3356 = vmatprep.subr.mxu0 0.0
    %3357 = vmatpush1.msra.mxu0 0.0
    %3358 = vmatprep.subr.mxu0 0.0
    %3359 = vmatpush1.msra.mxu0 0.0
    %3360 = vmatprep.subr.mxu0 0.0
    %3361 = vmatpush1.msra.mxu0 0.0
    %3362 = vmatprep.subr.mxu0 0.0
    %3363 = vmatpush1.msra.mxu0 0.0
    %3364 = vmatprep.subr.mxu0 0.0
    %3365 = vmatpush1.msra.mxu0 0.0
    %3366 = vmatprep.subr.mxu0 0.0
    %3367 = vmatpush1.msra.mxu0 0.0
    %3368 = vmatprep.subr.mxu0 0.0
    %3369 = vmatpush1.msra.mxu0 0.0
    %3370 = vmatprep.subr.mxu0 0.0
    %3371 = vmatpush1.msra.mxu0 0.0
    %3372 = vmatprep.subr.mxu0 0.0
    %3373 = vmatpush1.msra.mxu0 0.0
    %3374 = vmatprep.mubr.f32.mxu0 0.0
    %3375 = vmatmul.mubr.f32.gmra.mrb[0].mxu0 %v3308
    %v3376 = vpop.f32.mrb[0].mxu0
    %v3377 = vadd.f32 %v3306, %v3376
    %v3378 = vpop.f32.mrb[0].mxu0
    %3379 = vdwg.mxu0
    %v3380 = vmax.f32 %v3377, 0.0
    %v3381 = vld [vmem:[#allocation3 + $0x2b8] sm:$0x1]
    %v3382 = vlaneseq
    %v3383 = vshrl.u32 %v3382, 7
    %v3384 = vsub.s32 0, %v3383
    %v3385 = vrot.slane %v3381, %v3384
    %v3386 = vmul.f32 %v3380, %v3385
    %v3387 = vsel %vm641, %v3386, 0.0
    %3388 = vadd.xlane.f32.xlu0 %v3387
    %v3389 = vpop.xlane.xlu0 %3388
    %v3390 = vld [vmem:[#allocation3 + $0x2c0] sm:$0x1]
    %v3391 = vlaneseq
    %v3392 = vshrl.u32 %v3391, 7
    %v3393 = vsub.s32 0, %v3392
    %v3394 = vrot.slane %v3390, %v3393
    %v3395 = vadd.f32 %v3389, %v3394
    %v3396 = vand.u32 2147483647, %v3395
    %v3397 = vsub.f32 0.0, %v3396
    %v3398 = vmul.f32 %v3397, 1.442695
    %v3399 = vpow.pop %v3398
    %vm3400 = vcmp.ge.f32.partialorder %v3395, 0.0
    %v3401 = vadd.f32 %v3399, 1.0
    %v3402 = vrcp.pop %v3401
    %v3403 = vmul.f32 1.0, %v3402
    %v3404 = vmul.f32 %v3399, %v3402
    %v3405 = vsel %vm3400, %v3403, %v3404
    %3407 = vset.pattern.permute.xlu0 0
    %3408 = vperm.xlu0 %3407, %v3405
    %v3409 = vpop.permute.xlu0 %3408
    %3411 = vst [vmem:[%s6] sm:$0xff] %v3409
    // Predicated region
    $region34: #{hcmgnn_forward.1} parent=1 // pred_check
      _
    $region35: #{hcmgnn_forward.1} parent=1 // pred_check_branch
      %3413 = sbr.rel (0) target = $region37
    $region36: #{hcmgnn_forward.1} parent=1 // pred_region
      _
    $region37: #{hcmgnn_forward.1} parent=1 // pred_fallthru
      _
    // Predicated region
    $region38: #{hcmgnn_forward.1} parent=1 // pred_check
      _
    $region39: #{hcmgnn_forward.1} parent=1 // pred_check_branch
      %3415 = sbr.rel (0) target = $region41
    $region40: #{hcmgnn_forward.1} parent=1 // pred_region
      _
    $region41: #{hcmgnn_forward.1} parent=1 // pred_fallthru
      _
    %3416 = vsyncpa [#allocation4], 1
    %3417 = vsyncpa [#allocation6], 1

</llo_original>
